<compile_context>
chip_gen: v5e
topology: v5e:2x2
jax: 0.10.0
libtpu: 0.0.40
codegen_flags: <defaults>
</compile_context>

<pallas_src>
import functools

import numpy as np
import jax
import jax.numpy as jnp
from jax import lax
from jax.experimental import pallas as pl
from jax.experimental.pallas import tpu as pltpu


# --------------------------------------------------------------------------
# Pallas kernel: (concat) -> 3x3 dilated conv -> folded-BN bias -> ReLU
#                (-> + residual), batch folded into the matmul M dimension.
# --------------------------------------------------------------------------
def _conv_kernel(*refs, n_in, n_parts, has_res, dirate, rows, n_batch):
    """Ref layout (single grid step, whole batch):

      x_0 .. x_{n_in-1}    : (N*H, W*Cin_i)   bf16, lane-flattened NHWC
      [res]                : (N*H, W*Cout)    bf16 residual (added after ReLU)
      B_0 .. B_{n_parts-1} : (3, K_i, W*Cout) bf16 banded weights (BN folded)
      bias                 : (1, W*Cout)      f32 (conv bias + BN folded)
      out                  : (N*H, W*Cout)    bf16
    """
    x_refs = refs[:n_in]
    idx = n_in
    res_ref = None
    if has_res:
        res_ref = refs[idx]
        idx += 1
    b_refs = refs[idx:idx + n_parts]
    idx += n_parts
    bias_ref = refs[idx]
    out_ref = refs[idx + 1]

    d = dirate
    H = rows

    if n_parts == 1 and n_in == 2:
        # K-concat path (both parts 128-lane aligned): one deep matmul per
        # row tap instead of two half-K matmuls plus an f32 add.
        x_list = [jnp.concatenate([x_refs[0][...], x_refs[1][...]], axis=-1)]
    else:
        x_list = [r[...] for r in x_refs]

    # One matmul per vertical tap over the full (N*H) rows.  The LHS is read
    # unshifted (sublane aligned); the row shift is applied to the results.
    y = [None, None, None]
    for x, b_ref in zip(x_list, b_refs):
        for kh in range(3):
            c = jnp.dot(x, b_ref[kh], preferred_element_type=jnp.float32)
            y[kh] = c if y[kh] is None else y[kh] + c

    wco = y[1].shape[1]
    zrow = jnp.zeros((d, wco), jnp.float32)
    accs = []
    for b in range(n_batch):                     # N is tiny; fully unrolled
        y0b = y[0][b * H:(b + 1) * H]
        y1b = y[1][b * H:(b + 1) * H]
        y2b = y[2][b * H:(b + 1) * H]
        # out[i] = y1[i] + y0[i - d] + y2[i + d]   (zero outside [0, H))
        accb = y1b
        accb = accb + jnp.concatenate([zrow, y0b[:H - d]], axis=0)
        accb = accb + jnp.concatenate([y2b[d:], zrow], axis=0)
        accs.append(accb)
    acc = accs[0] if n_batch == 1 else jnp.concatenate(accs, axis=0)

    out = jnp.maximum(acc + bias_ref[...], 0.0)  # folded-BN bias + ReLU (f32)
    if has_res:
        out = out + res_ref[...].astype(jnp.float32)   # fused hx1d + hxin
    out_ref[...] = out.astype(out_ref.dtype)


def conv_block(inputs, stage, residual=None):
    """inputs: list of bf16 NHWC arrays with identical (N, H, W).

    ReLU(BN(Conv(cat(inputs)))) [+ residual] for one RSU7 stage, using the
    precomputed banded weights in `stage`.  Returns bf16 NHWC.
    """
    n_in = len(inputs)
    assert n_in == stage["n_in"]
    N, H, W, _ = inputs[0].shape
    assert (H, W) == stage["hw"], ((H, W), stage["hw"])
    cout = stage["cout"]
    d = stage["dirate"]
    assert d < H
    M = N * H

    x2d = [a.reshape(M, W * a.shape[-1]).astype(jnp.bfloat16) for a in inputs]
    bmats = stage["bmats"]
    n_parts = len(bmats)

    args = list(x2d)
    in_specs = [pl.BlockSpec(x.shape, lambda i: (0, 0)) for x in x2d]
    if residual is not None:
        args.append(residual.reshape(M, W * cout).astype(jnp.bfloat16))
        in_specs.append(pl.BlockSpec((M, W * cout), lambda i: (0, 0)))
    for b in bmats:
        args.append(b)
        in_specs.append(pl.BlockSpec(b.shape, lambda i: (0, 0, 0)))
    args.append(stage["bias"])
    in_specs.append(pl.BlockSpec(stage["bias"].shape, lambda i: (0, 0)))

    kernel = functools.partial(
        _conv_kernel, n_in=n_in, n_parts=n_parts,
        has_res=residual is not None, dirate=d, rows=H, n_batch=N)

    out2d = pl.pallas_call(
        kernel,
        out_shape=jax.ShapeDtypeStruct((M, W * cout), jnp.bfloat16),
        grid=(1,),
        in_specs=in_specs,
        out_specs=pl.BlockSpec((M, W * cout), lambda i: (0, 0)),
        compiler_params=pltpu.CompilerParams(
            dimension_semantics=("arbitrary",)),
    )(*args)
    return out2d.reshape(N, H, W, cout)


# --------------------------------------------------------------------------
# Fused deep stages 5 -> 6 -> 7 -> 6d -> 5d (all at 1x1 spatial resolution)
# --------------------------------------------------------------------------
def _deep_kernel(x_ref, w5, b5, w6, b6, w7, b7,
                 w6da, w6db, b6d, w5da, w5db, b5d, out_ref):
    """At 1x1 spatial every 3x3 (dilated) conv reduces to its center tap,
    pool5 is the identity and the 6d->5 upsample is the identity, so the
    whole chain is 5 tiny matmuls with folded-BN bias + ReLU."""
    bf = jnp.bfloat16

    def cbr(parts, b_ref):
        s = None
        for h, w_ref in parts:
            c = jnp.dot(h.astype(bf), w_ref[...],
                        preferred_element_type=jnp.float32)
            s = c if s is None else s + c
        return jnp.maximum(s + b_ref[...], 0.0)

    x = x_ref[...]
    h5 = cbr([(x, w5)], b5)
    h6 = cbr([(h5, w6)], b6)
    h7 = cbr([(h6, w7)], b7)
    h6d = cbr([(h7, w6da), (h6, w6db)], b6d)     # cat(hx7, hx6) split along K
    h5d = cbr([(h6d, w5da), (h5, w5db)], b5d)    # cat(hx6dup, hx5) split along K
    out_ref[...] = h5d.astype(out_ref.dtype)


def deep_block(x_pooled, deep):
    """x_pooled: (N, 1, 1, mid) bf16 (= pool4(hx4)); returns hx5d (N,1,1,mid)."""
    N = x_pooled.shape[0]
    mid = deep["mid"]
    assert x_pooled.shape == (N, 1, 1, mid), x_pooled.shape
    x2d = x_pooled.reshape(N, mid).astype(jnp.bfloat16)

    args = [x2d] + list(deep["mats"])
    in_specs = [pl.BlockSpec((N, mid), lambda i: (0, 0))]
    in_specs += [pl.BlockSpec(m.shape, lambda i: (0, 0)) for m in deep["mats"]]

    out2d = pl.pallas_call(
        _deep_kernel,
        out_shape=jax.ShapeDtypeStruct((N, mid), jnp.bfloat16),
        grid=(1,),
        in_specs=in_specs,
        out_specs=pl.BlockSpec((N, mid), lambda i: (0, 0)),
        compiler_params=pltpu.CompilerParams(
            dimension_semantics=("arbitrary",)),
    )(*args)
    return out2d.reshape(N, 1, 1, mid)


# --------------------------------------------------------------------------
# XLA glue: maxpool (ceil_mode) and bilinear upsample (PyTorch semantics)
# --------------------------------------------------------------------------
def maxpool2x2_ceil(x):
    """MaxPool2d(2, stride=2, ceil_mode=True) on NHWC."""
    N, H, W, C = x.shape
    Hp = -(-H // 2) * 2
    Wp = -(-W // 2) * 2
    xp = jnp.pad(x, ((0, 0), (0, Hp - H), (0, Wp - W), (0, 0)),
                 constant_values=-jnp.inf)
    xr = xp.reshape(N, Hp // 2, 2, Wp // 2, 2, C)
    return xr.max(axis=(2, 4))


def _up2x_h(x):
    """Exact 2x bilinear (align_corners=False) along H, static weights."""
    prev = jnp.concatenate([x[:, :1], x[:, :-1]], axis=1)
    nxt = jnp.concatenate([x[:, 1:], x[:, -1:]], axis=1)
    even = 0.75 * x + 0.25 * prev
    odd = 0.75 * x + 0.25 * nxt
    N, H, W, C = x.shape
    return jnp.stack([even, odd], axis=2).reshape(N, 2 * H, W, C)


def _up2x_w(x):
    """Exact 2x bilinear (align_corners=False) along W, static weights."""
    prev = jnp.concatenate([x[:, :, :1], x[:, :, :-1]], axis=2)
    nxt = jnp.concatenate([x[:, :, 1:], x[:, :, -1:]], axis=2)
    even = 0.75 * x + 0.25 * prev
    odd = 0.75 * x + 0.25 * nxt
    N, H, W, C = x.shape
    return jnp.stack([even, odd], axis=3).reshape(N, H, 2 * W, C)


def _resize_coords(out_size, in_size):
    # PyTorch F.interpolate(mode='bilinear', align_corners=False)
    scale = in_size / out_size
    src = (jnp.arange(out_size, dtype=jnp.float32) + 0.5) * scale - 0.5
    src = jnp.maximum(src, 0.0)
    i0 = jnp.floor(src).astype(jnp.int32)
    i0 = jnp.minimum(i0, in_size - 1)
    i1 = jnp.minimum(i0 + 1, in_size - 1)
    w1 = jnp.clip(src - i0.astype(jnp.float32), 0.0, 1.0)
    return i0, i1, w1


def _upsample_general(src, out_h, out_w):
    """General bilinear resize (gather-based) -- only used for non-2x shapes."""
    N, H, W, C = src.shape
    i0, i1, wh = _resize_coords(out_h, H)
    j0, j1, ww = _resize_coords(out_w, W)
    top = (src[:, i0, :, :] * (1.0 - wh)[None, :, None, None] +
           src[:, i1, :, :] * wh[None, :, None, None])
    out = (top[:, :, j0, :] * (1.0 - ww)[None, None, :, None] +
           top[:, :, j1, :] * ww[None, None, :, None])
    return out


def upsample_like(src, tar):
    """Bilinear resize src (NHWC) to tar's spatial size, align_corners=False."""
    H, W = src.shape[1], src.shape[2]
    th, tw = tar.shape[1], tar.shape[2]
    if (H, W) == (th, tw):
        return src
    if th == 2 * H and tw == 2 * W:        # the only case RSU7 produces
        return _up2x_w(_up2x_h(src))
    return _upsample_general(src, th, tw)


# --------------------------------------------------------------------------
# Parameters (deterministic, synthetic) and host-side weight preparation
# --------------------------------------------------------------------------
def make_cbr_params(key, cin, cout):
    kw, kb, kg, kbt, km, kv = jax.random.split(key, 6)
    w = 0.1 * jax.random.normal(kw, (3, 3, cin, cout), jnp.float32)
    b = 0.1 * jax.random.normal(kb, (cout,), jnp.float32)
    gamma = 1.0 + 0.1 * jax.random.normal(kg, (cout,), jnp.float32)
    beta = 0.1 * jax.random.normal(kbt, (cout,), jnp.float32)
    mean = 0.1 * jax.random.normal(km, (cout,), jnp.float32)
    var = jnp.abs(jax.random.normal(kv, (cout,), jnp.float32)) + 0.5
    eps = 1e-5
    scale = gamma / jnp.sqrt(var + eps)          # eval-mode BN scale
    bias = (b - mean) * scale + beta             # conv bias + BN folded
    return dict(w=w, scale=scale, bias=bias)


def make_rsu7_params(key, in_ch, mid_ch, out_ch):
    names_shapes = [
        ("in", in_ch, out_ch), ("1", out_ch, mid_ch), ("2", mid_ch, mid_ch),
        ("3", mid_ch, mid_ch), ("4", mid_ch, mid_ch), ("5", mid_ch, mid_ch),
        ("6", mid_ch, mid_ch), ("7", mid_ch, mid_ch),
        ("6d", 2 * mid_ch, mid_ch), ("5d", 2 * mid_ch, mid_ch),
        ("4d", 2 * mid_ch, mid_ch), ("3d", 2 * mid_ch, mid_ch),
        ("2d", 2 * mid_ch, mid_ch), ("1d", 2 * mid_ch, out_ch),
    ]
    keys = jax.random.split(key, len(names_shapes))
    return {name: make_cbr_params(k, ci, co)
            for k, (name, ci, co) in zip(keys, names_shapes)}


def _prepare_stage(p, hw, dirate, n_in):
    """Fold BN scale into the weights and build banded bf16 matmul operands."""
    h, w = hw
    d = dirate
    wconv = np.asarray(p["w"], np.float32)            # (3, 3, cin_total, cout)
    scale = np.asarray(p["scale"], np.float32)
    bias = np.asarray(p["bias"], np.float32)
    cin_total, cout = wconv.shape[2], wconv.shape[3]
    wfold = wconv * scale[None, None, None, :]        # BN scale folded into W

    if n_in == 1:
        parts = [wfold]
    else:                                             # torch.cat((a, b), dim=C)
        split = cin_total // 2
        parts = [wfold[:, :, :split, :], wfold[:, :, split:, :]]

    bmats = []
    for wpart in parts:
        cin = wpart.shape[2]
        # B[kh, src_w, ci, out_w, co]: horizontal (kw) taps only; the vertical
        # (kh) tap is applied in-kernel by shifting the matmul result rows.
        B = np.zeros((3, w, cin, w, cout), np.float32)
        for kw in range(3):
            for wi in range(w):
                src_w = wi + kw * d - d
                if 0 <= src_w < w:
                    B[:, src_w, :, wi, :] += wpart[:, kw]
        bmats.append(B.reshape(3, w * cin, w * cout))

    # K-concat the two decoder parts when both are 128-lane aligned: one deep
    # matmul per row tap on v6e/v7x-sized MXUs, neutral on v5e.
    if n_in == 2 and all(b.shape[1] % 128 == 0 for b in bmats):
        bmats = [np.concatenate(bmats, axis=1)]

    bmats = [jnp.asarray(b, jnp.bfloat16) for b in bmats]
    bias_row = jnp.asarray(np.tile(bias, w)[None, :], dtype=jnp.float32)
    return dict(bmats=bmats, bias=bias_row, cout=cout, dirate=d,
                n_in=n_in, hw=hw)


def _prepare_deep(params):
    """Center-tap (1x1-spatial) folded weights for fused stages 5..5d."""
    def ct(name):
        p = params[name]
        w = np.asarray(p["w"], np.float32)[1, 1]          # (cin, cout)
        s = np.asarray(p["scale"], np.float32)
        b = np.asarray(p["bias"], np.float32)
        return w * s[None, :], b

    w5, b5 = ct("5")
    w6, b6 = ct("6")
    w7, b7 = ct("7")
    w6d, b6d = ct("6d")
    w5d, b5d = ct("5d")
    mid = w5.shape[1]

    def bf(a):
        return jnp.asarray(a, jnp.bfloat16)

    def br(a):
        return jnp.asarray(a[None, :], jnp.float32)

    mats = [bf(w5), br(b5), bf(w6), br(b6), bf(w7), br(b7),
            bf(w6d[:mid]), bf(w6d[mid:]), br(b6d),
            bf(w5d[:mid]), bf(w5d[mid:]), br(b5d)]
    return dict(mats=mats, mid=mid)


def prepare_rsu7(params, H, W):
    """Precompute per-stage banded weights for a given input spatial size."""
    sizes = [(H, W)]
    for _ in range(5):
        h, w = sizes[-1]
        sizes.append((-(-h // 2), -(-w // 2)))        # ceil_mode halving
    L0, L1, L2, L3, L4, L5 = sizes
    # TODO(synk): fall back to per-stage conv kernels for levels 4/5 when the
    #             input is large enough that they are not 1x1.
    assert L4 == (1, 1) and L5 == (1, 1), (L4, L5)
    plan = [
        ("in", L0, 1, 1), ("1", L0, 1, 1), ("2", L1, 1, 1), ("3", L2, 1, 1),
        ("4", L3, 1, 1),
        ("4d", L3, 1, 2), ("3d", L2, 1, 2), ("2d", L1, 1, 2), ("1d", L0, 1, 2),
    ]
    stages = {name: _prepare_stage(params[name], hw, dirate, n_in)
              for name, hw, dirate, n_in in plan}
    return dict(stages=stages, deep=_prepare_deep(params))


# --------------------------------------------------------------------------
# RSU7 forward (Pallas path)
# --------------------------------------------------------------------------
def rsu7_forward(x_nchw, prep):
    stages, deep = prep["stages"], prep["deep"]
    x = jnp.transpose(x_nchw, (0, 2, 3, 1)).astype(jnp.bfloat16)   # NCHW->NHWC

    hxin = conv_block([x], stages["in"])
    hx1 = conv_block([hxin], stages["1"])
    hx2 = conv_block([maxpool2x2_ceil(hx1)], stages["2"])
    hx3 = conv_block([maxpool2x2_ceil(hx2)], stages["3"])
    hx4 = conv_block([maxpool2x2_ceil(hx3)], stages["4"])

    # Fused stages 5, 6, 7, 6d, 5d (+ pool5 and the identity 6d->5 upsample).
    hx5d = deep_block(maxpool2x2_ceil(hx4), deep)

    hx4d = conv_block([upsample_like(hx5d, hx4), hx4], stages["4d"])   # cat fused
    hx3d = conv_block([upsample_like(hx4d, hx3), hx3], stages["3d"])
    hx2d = conv_block([upsample_like(hx3d, hx2), hx2], stages["2d"])
    hx1d = conv_block([upsample_like(hx2d, hx1), hx1], stages["1d"],
                      residual=hxin)                                   # +hxin fused

    return jnp.transpose(hx1d, (0, 3, 1, 2)).astype(jnp.float32)   # NHWC->NCHW


# --------------------------------------------------------------------------
# Plain-JAX reference (f32 conv, gather-based upsample) for a self-check
# --------------------------------------------------------------------------
def _ref_conv_bn_relu(x, p, dirate=1):
    y = lax.conv_general_dilated(
        x, p["w"], window_strides=(1, 1),
        padding=[(dirate, dirate), (dirate, dirate)],
        rhs_dilation=(dirate, dirate),
        dimension_numbers=("NHWC", "HWIO", "NHWC"))
    return jnp.maximum(y * p["scale"] + p["bias"], 0.0)


def rsu7_reference(x_nchw, params):
    x = jnp.transpose(x_nchw, (0, 2, 3, 1))

    def up(src, tar):
        return _upsample_general(src, tar.shape[1], tar.shape[2])

    hxin = _ref_conv_bn_relu(x, params["in"])
    hx1 = _ref_conv_bn_relu(hxin, params["1"])
    hx2 = _ref_conv_bn_relu(maxpool2x2_ceil(hx1), params["2"])
    hx3 = _ref_conv_bn_relu(maxpool2x2_ceil(hx2), params["3"])
    hx4 = _ref_conv_bn_relu(maxpool2x2_ceil(hx3), params["4"])
    hx5 = _ref_conv_bn_relu(maxpool2x2_ceil(hx4), params["5"])
    hx6 = _ref_conv_bn_relu(maxpool2x2_ceil(hx5), params["6"])
    hx7 = _ref_conv_bn_relu(hx6, params["7"], dirate=2)
    hx6d = _ref_conv_bn_relu(jnp.concatenate([hx7, hx6], -1), params["6d"])
    hx5d = _ref_conv_bn_relu(jnp.concatenate([up(hx6d, hx5), hx5], -1), params["5d"])
    hx4d = _ref_conv_bn_relu(jnp.concatenate([up(hx5d, hx4), hx4], -1), params["4d"])
    hx3d = _ref_conv_bn_relu(jnp.concatenate([up(hx4d, hx3), hx3], -1), params["3d"])
    hx2d = _ref_conv_bn_relu(jnp.concatenate([up(hx3d, hx2), hx2], -1), params["2d"])
    hx1d = _ref_conv_bn_relu(jnp.concatenate([up(hx2d, hx1), hx1], -1), params["1d"])
    return jnp.transpose(hx1d + hxin, (0, 3, 1, 2))


# --------------------------------------------------------------------------
if __name__ == "__main__":
    key = jax.random.PRNGKey(0)
    k_x, k_p = jax.random.split(key)

    N, in_ch, H, W = 2, 4, 16, 16
    mid_ch, out_ch = 8, 4

    x = jax.random.normal(k_x, (N, in_ch, H, W), jnp.float32)
    params = make_rsu7_params(k_p, in_ch, mid_ch, out_ch)
    prep = prepare_rsu7(params, H, W)

    fwd = jax.jit(lambda inp: rsu7_forward(inp, prep))
    out = jax.block_until_ready(fwd(x))
    assert out.shape == (N, out_ch, H, W), out.shape
    assert bool(jnp.all(jnp.isfinite(out)))

    # Numerical cross-check vs. plain-XLA f32 reference (bf16 activations /
    # bf16 MXU operands -> loose tolerance).
    ref = jax.block_until_ready(rsu7_reference(x, params))
    err = float(jnp.max(jnp.abs(out - ref)))
    assert err < 2e-1, err

    print("KERNEL_OK")
</pallas_src>

<mosaic_0001>
module attributes {stable_mosaic.version = 11 : i64} {
  func.func @_conv_kernel(%arg0: i32, %arg1: memref<32x64xbf16, #tpu.memory_space<vmem>>, %arg2: memref<3x64x64xbf16, #tpu.memory_space<vmem>>, %arg3: memref<1x64xf32, #tpu.memory_space<vmem>>, %arg4: memref<32x64xbf16, #tpu.memory_space<vmem>>) attributes {dimension_semantics = [#tpu.dimension_semantics<arbitrary>], iteration_bounds = array<i64: 1>, scalar_prefetch = 0 : i64, scratch_operands = 0 : i64, tpu.core_type = #tpu.core_type<tc>, window_params = [{pipeline_mode = #tpu.pipeline_mode<synchronous>, transform_indices = @transform_0, window_bounds = array<i64: 32, 64>}, {pipeline_mode = #tpu.pipeline_mode<synchronous>, transform_indices = @transform_1, window_bounds = array<i64: 3, 64, 64>}, {pipeline_mode = #tpu.pipeline_mode<synchronous>, transform_indices = @transform_2, window_bounds = array<i64: 1, 64>}, {pipeline_mode = #tpu.pipeline_mode<synchronous>, transform_indices = @transform_3, window_bounds = array<i64: 32, 64>}]} {
    %c0 = arith.constant 0 : index
    %c0_0 = arith.constant 0 : index
    %0 = vector.load %arg1[%c0, %c0_0] : memref<32x64xbf16, #tpu.memory_space<vmem>>, vector<32x64xbf16>
    %c0_1 = arith.constant 0 : index
    %c0_2 = arith.constant 0 : index
    %c0_3 = arith.constant 0 : index
    %1 = vector.load %arg2[%c0_1, %c0_2, %c0_3] : memref<3x64x64xbf16, #tpu.memory_space<vmem>>, vector<1x64x64xbf16>
    %2 = vector.shape_cast %1 : vector<1x64x64xbf16> to vector<64x64xbf16>
    %cst = arith.constant dense<0.000000e+00> : vector<32x64xf32>
    %3 = tpu.matmul %0, %2, %cst {dimension_numbers = #tpu.dot_dimension_numbers<[1], [0], [0], [1], [0, 0, 1, 1], [], []>} : vector<32x64xbf16>, vector<64x64xbf16>, vector<32x64xf32> -> vector<32x64xf32>
    %c1 = arith.constant 1 : index
    %c0_4 = arith.constant 0 : index
    %c0_5 = arith.constant 0 : index
    %4 = vector.load %arg2[%c1, %c0_4, %c0_5] : memref<3x64x64xbf16, #tpu.memory_space<vmem>>, vector<1x64x64xbf16>
    %5 = vector.shape_cast %4 : vector<1x64x64xbf16> to vector<64x64xbf16>
    %cst_6 = arith.constant dense<0.000000e+00> : vector<32x64xf32>
    %6 = tpu.matmul %0, %5, %cst_6 {dimension_numbers = #tpu.dot_dimension_numbers<[1], [0], [0], [1], [0, 0, 1, 1], [], []>} : vector<32x64xbf16>, vector<64x64xbf16>, vector<32x64xf32> -> vector<32x64xf32>
    %c2 = arith.constant 2 : index
    %c0_7 = arith.constant 0 : index
    %c0_8 = arith.constant 0 : index
    %7 = vector.load %arg2[%c2, %c0_7, %c0_8] : memref<3x64x64xbf16, #tpu.memory_space<vmem>>, vector<1x64x64xbf16>
    %8 = vector.shape_cast %7 : vector<1x64x64xbf16> to vector<64x64xbf16>
    %cst_9 = arith.constant dense<0.000000e+00> : vector<32x64xf32>
    %9 = tpu.matmul %0, %8, %cst_9 {dimension_numbers = #tpu.dot_dimension_numbers<[1], [0], [0], [1], [0, 0, 1, 1], [], []>} : vector<32x64xbf16>, vector<64x64xbf16>, vector<32x64xf32> -> vector<32x64xf32>
    %cst_10 = arith.constant 0.000000e+00 : f32
    %10 = vector.broadcast %cst_10 : f32 to vector<1x64xf32>
    %11 = vector.extract_strided_slice %3 {offsets = [0, 0], sizes = [16, 64], strides = [1, 1]} : vector<32x64xf32> to vector<16x64xf32>
    %12 = vector.extract_strided_slice %6 {offsets = [0, 0], sizes = [16, 64], strides = [1, 1]} : vector<32x64xf32> to vector<16x64xf32>
    %13 = vector.extract_strided_slice %9 {offsets = [0, 0], sizes = [16, 64], strides = [1, 1]} : vector<32x64xf32> to vector<16x64xf32>
    %14 = vector.extract_strided_slice %11 {offsets = [0, 0], sizes = [15, 64], strides = [1, 1]} : vector<16x64xf32> to vector<15x64xf32>
    %15 = tpu.concatenate %10, %14 in 0 : vector<1x64xf32>, vector<15x64xf32> -> vector<16x64xf32>
    %16 = arith.addf %12, %15 : vector<16x64xf32>
    %17 = vector.extract_strided_slice %13 {offsets = [1, 0], sizes = [15, 64], strides = [1, 1]} : vector<16x64xf32> to vector<15x64xf32>
    %18 = tpu.concatenate %17, %10 in 0 : vector<15x64xf32>, vector<1x64xf32> -> vector<16x64xf32>
    %19 = arith.addf %16, %18 : vector<16x64xf32>
    %20 = vector.extract_strided_slice %3 {offsets = [16, 0], sizes = [16, 64], strides = [1, 1]} : vector<32x64xf32> to vector<16x64xf32>
    %21 = vector.extract_strided_slice %6 {offsets = [16, 0], sizes = [16, 64], strides = [1, 1]} : vector<32x64xf32> to vector<16x64xf32>
    %22 = vector.extract_strided_slice %9 {offsets = [16, 0], sizes = [16, 64], strides = [1, 1]} : vector<32x64xf32> to vector<16x64xf32>
    %23 = vector.extract_strided_slice %20 {offsets = [0, 0], sizes = [15, 64], strides = [1, 1]} : vector<16x64xf32> to vector<15x64xf32>
    %24 = tpu.concatenate %10, %23 in 0 : vector<1x64xf32>, vector<15x64xf32> -> vector<16x64xf32>
    %25 = arith.addf %21, %24 : vector<16x64xf32>
    %26 = vector.extract_strided_slice %22 {offsets = [1, 0], sizes = [15, 64], strides = [1, 1]} : vector<16x64xf32> to vector<15x64xf32>
    %27 = tpu.concatenate %26, %10 in 0 : vector<15x64xf32>, vector<1x64xf32> -> vector<16x64xf32>
    %28 = arith.addf %25, %27 : vector<16x64xf32>
    %29 = tpu.concatenate %19, %28 in 0 : vector<16x64xf32>, vector<16x64xf32> -> vector<32x64xf32>
    %c0_11 = arith.constant 0 : index
    %c0_12 = arith.constant 0 : index
    %30 = vector.load %arg3[%c0_11, %c0_12] : memref<1x64xf32, #tpu.memory_space<vmem>>, vector<1x64xf32>
    %31 = vector.broadcast %30 : vector<1x64xf32> to vector<32x64xf32>
    %32 = arith.addf %29, %31 : vector<32x64xf32>
    %cst_13 = arith.constant 0.000000e+00 : f32
    %33 = vector.broadcast %cst_13 : f32 to vector<32x64xf32>
    %34 = arith.maximumf %32, %33 : vector<32x64xf32>
    %35 = arith.truncf %34 : vector<32x64xf32> to vector<32x64xbf16>
    %c0_14 = arith.constant 0 : index
    %c0_15 = arith.constant 0 : index
    %36 = vector.load %arg4[%c0_14, %c0_15] : memref<32x64xbf16, #tpu.memory_space<vmem>>, vector<32x64xbf16>
    tpu.vector_store %arg4[%c0_14, %c0_15], %35 {strides = array<i32>} : memref<32x64xbf16, #tpu.memory_space<vmem>>, vector<32x64xbf16>,
    return
  }
  func.func @transform_0(%arg0: i32) -> (i32, i32) {
    %c0_i32 = arith.constant 0 : i32
    %c0_i32_0 = arith.constant 0 : i32
    %c0_i32_1 = arith.constant 0 : i32
    return %c0_i32, %c0_i32_0 : i32, i32
  }
  func.func @transform_1(%arg0: i32) -> (i32, i32, i32) {
    %c0_i32 = arith.constant 0 : i32
    %c0_i32_0 = arith.constant 0 : i32
    %c0_i32_1 = arith.constant 0 : i32
    %c0_i32_2 = arith.constant 0 : i32
    return %c0_i32, %c0_i32_0, %c0_i32_1 : i32, i32, i32
  }
  func.func @transform_2(%arg0: i32) -> (i32, i32) {
    %c0_i32 = arith.constant 0 : i32
    %c0_i32_0 = arith.constant 0 : i32
    %c0_i32_1 = arith.constant 0 : i32
    return %c0_i32, %c0_i32_0 : i32, i32
  }
  func.func @transform_3(%arg0: i32) -> (i32, i32) {
    %c0_i32 = arith.constant 0 : i32
    %c0_i32_0 = arith.constant 0 : i32
    %c0_i32_1 = arith.constant 0 : i32
    return %c0_i32, %c0_i32_0 : i32, i32
  }
}

module attributes {stable_mosaic.version = 11 : i64} {
  func.func @_conv_kernel(%arg0: i32, %arg1: memref<32x64xbf16, #tpu.memory_space<vmem>>, %arg2: memref<3x64x128xbf16, #tpu.memory_space<vmem>>, %arg3: memref<1x128xf32, #tpu.memory_space<vmem>>, %arg4: memref<32x128xbf16, #tpu.memory_space<vmem>>) attributes {dimension_semantics = [#tpu.dimension_semantics<arbitrary>], iteration_bounds = array<i64: 1>, scalar_prefetch = 0 : i64, scratch_operands = 0 : i64, tpu.core_type = #tpu.core_type<tc>, window_params = [{pipeline_mode = #tpu.pipeline_mode<synchronous>, transform_indices = @transform_0, window_bounds = array<i64: 32, 64>}, {pipeline_mode = #tpu.pipeline_mode<synchronous>, transform_indices = @transform_1, window_bounds = array<i64: 3, 64, 128>}, {pipeline_mode = #tpu.pipeline_mode<synchronous>, transform_indices = @transform_2, window_bounds = array<i64: 1, 128>}, {pipeline_mode = #tpu.pipeline_mode<synchronous>, transform_indices = @transform_3, window_bounds = array<i64: 32, 128>}]} {
    %c0 = arith.constant 0 : index
    %c0_0 = arith.constant 0 : index
    %0 = vector.load %arg1[%c0, %c0_0] : memref<32x64xbf16, #tpu.memory_space<vmem>>, vector<32x64xbf16>
    %c0_1 = arith.constant 0 : index
    %c0_2 = arith.constant 0 : index
    %c0_3 = arith.constant 0 : index
    %1 = vector.load %arg2[%c0_1, %c0_2, %c0_3] : memref<3x64x128xbf16, #tpu.memory_space<vmem>>, vector<1x64x128xbf16>
    %2 = vector.shape_cast %1 : vector<1x64x128xbf16> to vector<64x128xbf16>
    %cst = arith.constant dense<0.000000e+00> : vector<32x128xf32>
    %3 = tpu.matmul %0, %2, %cst {dimension_numbers = #tpu.dot_dimension_numbers<[1], [0], [0], [1], [0, 0, 1, 1], [], []>} : vector<32x64xbf16>, vector<64x128xbf16>, vector<32x128xf32> -> vector<32x128xf32>
    %c1 = arith.constant 1 : index
    %c0_4 = arith.constant 0 : index
    %c0_5 = arith.constant 0 : index
    %4 = vector.load %arg2[%c1, %c0_4, %c0_5] : memref<3x64x128xbf16, #tpu.memory_space<vmem>>, vector<1x64x128xbf16>
    %5 = vector.shape_cast %4 : vector<1x64x128xbf16> to vector<64x128xbf16>
    %cst_6 = arith.constant dense<0.000000e+00> : vector<32x128xf32>
    %6 = tpu.matmul %0, %5, %cst_6 {dimension_numbers = #tpu.dot_dimension_numbers<[1], [0], [0], [1], [0, 0, 1, 1], [], []>} : vector<32x64xbf16>, vector<64x128xbf16>, vector<32x128xf32> -> vector<32x128xf32>
    %c2 = arith.constant 2 : index
    %c0_7 = arith.constant 0 : index
    %c0_8 = arith.constant 0 : index
    %7 = vector.load %arg2[%c2, %c0_7, %c0_8] : memref<3x64x128xbf16, #tpu.memory_space<vmem>>, vector<1x64x128xbf16>
    %8 = vector.shape_cast %7 : vector<1x64x128xbf16> to vector<64x128xbf16>
    %cst_9 = arith.constant dense<0.000000e+00> : vector<32x128xf32>
    %9 = tpu.matmul %0, %8, %cst_9 {dimension_numbers = #tpu.dot_dimension_numbers<[1], [0], [0], [1], [0, 0, 1, 1], [], []>} : vector<32x64xbf16>, vector<64x128xbf16>, vector<32x128xf32> -> vector<32x128xf32>
    %cst_10 = arith.constant 0.000000e+00 : f32
    %10 = vector.broadcast %cst_10 : f32 to vector<1x128xf32>
    %11 = vector.extract_strided_slice %3 {offsets = [0, 0], sizes = [16, 128], strides = [1, 1]} : vector<32x128xf32> to vector<16x128xf32>
    %12 = vector.extract_strided_slice %6 {offsets = [0, 0], sizes = [16, 128], strides = [1, 1]} : vector<32x128xf32> to vector<16x128xf32>
    %13 = vector.extract_strided_slice %9 {offsets = [0, 0], sizes = [16, 128], strides = [1, 1]} : vector<32x128xf32> to vector<16x128xf32>
    %14 = vector.extract_strided_slice %11 {offsets = [0, 0], sizes = [15, 128], strides = [1, 1]} : vector<16x128xf32> to vector<15x128xf32>
    %15 = tpu.concatenate %10, %14 in 0 : vector<1x128xf32>, vector<15x128xf32> -> vector<16x128xf32>
    %16 = arith.addf %12, %15 : vector<16x128xf32>
    %17 = vector.extract_strided_slice %13 {offsets = [1, 0], sizes = [15, 128], strides = [1, 1]} : vector<16x128xf32> to vector<15x128xf32>
    %18 = tpu.concatenate %17, %10 in 0 : vector<15x128xf32>, vector<1x128xf32> -> vector<16x128xf32>
    %19 = arith.addf %16, %18 : vector<16x128xf32>
    %20 = vector.extract_strided_slice %3 {offsets = [16, 0], sizes = [16, 128], strides = [1, 1]} : vector<32x128xf32> to vector<16x128xf32>
    %21 = vector.extract_strided_slice %6 {offsets = [16, 0], sizes = [16, 128], strides = [1, 1]} : vector<32x128xf32> to vector<16x128xf32>
    %22 = vector.extract_strided_slice %9 {offsets = [16, 0], sizes = [16, 128], strides = [1, 1]} : vector<32x128xf32> to vector<16x128xf32>
    %23 = vector.extract_strided_slice %20 {offsets = [0, 0], sizes = [15, 128], strides = [1, 1]} : vector<16x128xf32> to vector<15x128xf32>
    %24 = tpu.concatenate %10, %23 in 0 : vector<1x128xf32>, vector<15x128xf32> -> vector<16x128xf32>
    %25 = arith.addf %21, %24 : vector<16x128xf32>
    %26 = vector.extract_strided_slice %22 {offsets = [1, 0], sizes = [15, 128], strides = [1, 1]} : vector<16x128xf32> to vector<15x128xf32>
    %27 = tpu.concatenate %26, %10 in 0 : vector<15x128xf32>, vector<1x128xf32> -> vector<16x128xf32>
    %28 = arith.addf %25, %27 : vector<16x128xf32>
    %29 = tpu.concatenate %19, %28 in 0 : vector<16x128xf32>, vector<16x128xf32> -> vector<32x128xf32>
    %c0_11 = arith.constant 0 : index
    %c0_12 = arith.constant 0 : index
    %30 = vector.load %arg3[%c0_11, %c0_12] : memref<1x128xf32, #tpu.memory_space<vmem>>, vector<1x128xf32>
    %31 = vector.broadcast %30 : vector<1x128xf32> to vector<32x128xf32>
    %32 = arith.addf %29, %31 : vector<32x128xf32>
    %cst_13 = arith.constant 0.000000e+00 : f32
    %33 = vector.broadcast %cst_13 : f32 to vector<32x128xf32>
    %34 = arith.maximumf %32, %33 : vector<32x128xf32>
    %35 = arith.truncf %34 : vector<32x128xf32> to vector<32x128xbf16>
    %c0_14 = arith.constant 0 : index
    %c0_15 = arith.constant 0 : index
    %36 = vector.load %arg4[%c0_14, %c0_15] : memref<32x128xbf16, #tpu.memory_space<vmem>>, vector<32x128xbf16>
    tpu.vector_store %arg4[%c0_14, %c0_15], %35 {strides = array<i32>} : memref<32x128xbf16, #tpu.memory_space<vmem>>, vector<32x128xbf16>,
    return
  }
  func.func @transform_0(%arg0: i32) -> (i32, i32) {
    %c0_i32 = arith.constant 0 : i32
    %c0_i32_0 = arith.constant 0 : i32
    %c0_i32_1 = arith.constant 0 : i32
    return %c0_i32, %c0_i32_0 : i32, i32
  }
  func.func @transform_1(%arg0: i32) -> (i32, i32, i32) {
    %c0_i32 = arith.constant 0 : i32
    %c0_i32_0 = arith.constant 0 : i32
    %c0_i32_1 = arith.constant 0 : i32
    %c0_i32_2 = arith.constant 0 : i32
    return %c0_i32, %c0_i32_0, %c0_i32_1 : i32, i32, i32
  }
  func.func @transform_2(%arg0: i32) -> (i32, i32) {
    %c0_i32 = arith.constant 0 : i32
    %c0_i32_0 = arith.constant 0 : i32
    %c0_i32_1 = arith.constant 0 : i32
    return %c0_i32, %c0_i32_0 : i32, i32
  }
  func.func @transform_3(%arg0: i32) -> (i32, i32) {
    %c0_i32 = arith.constant 0 : i32
    %c0_i32_0 = arith.constant 0 : i32
    %c0_i32_1 = arith.constant 0 : i32
    return %c0_i32, %c0_i32_0 : i32, i32
  }
}

module attributes {stable_mosaic.version = 11 : i64} {
  func.func @_conv_kernel(%arg0: i32, %arg1: memref<16x64xbf16, #tpu.memory_space<vmem>>, %arg2: memref<3x64x64xbf16, #tpu.memory_space<vmem>>, %arg3: memref<1x64xf32, #tpu.memory_space<vmem>>, %arg4: memref<16x64xbf16, #tpu.memory_space<vmem>>) attributes {dimension_semantics = [#tpu.dimension_semantics<arbitrary>], iteration_bounds = array<i64: 1>, scalar_prefetch = 0 : i64, scratch_operands = 0 : i64, tpu.core_type = #tpu.core_type<tc>, window_params = [{pipeline_mode = #tpu.pipeline_mode<synchronous>, transform_indices = @transform_0, window_bounds = array<i64: 16, 64>}, {pipeline_mode = #tpu.pipeline_mode<synchronous>, transform_indices = @transform_1, window_bounds = array<i64: 3, 64, 64>}, {pipeline_mode = #tpu.pipeline_mode<synchronous>, transform_indices = @transform_2, window_bounds = array<i64: 1, 64>}, {pipeline_mode = #tpu.pipeline_mode<synchronous>, transform_indices = @transform_3, window_bounds = array<i64: 16, 64>}]} {
    %c0 = arith.constant 0 : index
    %c0_0 = arith.constant 0 : index
    %0 = vector.load %arg1[%c0, %c0_0] : memref<16x64xbf16, #tpu.memory_space<vmem>>, vector<16x64xbf16>
    %c0_1 = arith.constant 0 : index
    %c0_2 = arith.constant 0 : index
    %c0_3 = arith.constant 0 : index
    %1 = vector.load %arg2[%c0_1, %c0_2, %c0_3] : memref<3x64x64xbf16, #tpu.memory_space<vmem>>, vector<1x64x64xbf16>
    %2 = vector.shape_cast %1 : vector<1x64x64xbf16> to vector<64x64xbf16>
    %cst = arith.constant dense<0.000000e+00> : vector<16x64xf32>
    %3 = tpu.matmul %0, %2, %cst {dimension_numbers = #tpu.dot_dimension_numbers<[1], [0], [0], [1], [0, 0, 1, 1], [], []>} : vector<16x64xbf16>, vector<64x64xbf16>, vector<16x64xf32> -> vector<16x64xf32>
    %c1 = arith.constant 1 : index
    %c0_4 = arith.constant 0 : index
    %c0_5 = arith.constant 0 : index
    %4 = vector.load %arg2[%c1, %c0_4, %c0_5] : memref<3x64x64xbf16, #tpu.memory_space<vmem>>, vector<1x64x64xbf16>
    %5 = vector.shape_cast %4 : vector<1x64x64xbf16> to vector<64x64xbf16>
    %cst_6 = arith.constant dense<0.000000e+00> : vector<16x64xf32>
    %6 = tpu.matmul %0, %5, %cst_6 {dimension_numbers = #tpu.dot_dimension_numbers<[1], [0], [0], [1], [0, 0, 1, 1], [], []>} : vector<16x64xbf16>, vector<64x64xbf16>, vector<16x64xf32> -> vector<16x64xf32>
    %c2 = arith.constant 2 : index
    %c0_7 = arith.constant 0 : index
    %c0_8 = arith.constant 0 : index
    %7 = vector.load %arg2[%c2, %c0_7, %c0_8] : memref<3x64x64xbf16, #tpu.memory_space<vmem>>, vector<1x64x64xbf16>
    %8 = vector.shape_cast %7 : vector<1x64x64xbf16> to vector<64x64xbf16>
    %cst_9 = arith.constant dense<0.000000e+00> : vector<16x64xf32>
    %9 = tpu.matmul %0, %8, %cst_9 {dimension_numbers = #tpu.dot_dimension_numbers<[1], [0], [0], [1], [0, 0, 1, 1], [], []>} : vector<16x64xbf16>, vector<64x64xbf16>, vector<16x64xf32> -> vector<16x64xf32>
    %cst_10 = arith.constant 0.000000e+00 : f32
    %10 = vector.broadcast %cst_10 : f32 to vector<1x64xf32>
    %11 = vector.extract_strided_slice %3 {offsets = [0, 0], sizes = [8, 64], strides = [1, 1]} : vector<16x64xf32> to vector<8x64xf32>
    %12 = vector.extract_strided_slice %6 {offsets = [0, 0], sizes = [8, 64], strides = [1, 1]} : vector<16x64xf32> to vector<8x64xf32>
    %13 = vector.extract_strided_slice %9 {offsets = [0, 0], sizes = [8, 64], strides = [1, 1]} : vector<16x64xf32> to vector<8x64xf32>
    %14 = vector.extract_strided_slice %11 {offsets = [0, 0], sizes = [7, 64], strides = [1, 1]} : vector<8x64xf32> to vector<7x64xf32>
    %15 = tpu.concatenate %10, %14 in 0 : vector<1x64xf32>, vector<7x64xf32> -> vector<8x64xf32>
    %16 = arith.addf %12, %15 : vector<8x64xf32>
    %17 = vector.extract_strided_slice %13 {offsets = [1, 0], sizes = [7, 64], strides = [1, 1]} : vector<8x64xf32> to vector<7x64xf32>
    %18 = tpu.concatenate %17, %10 in 0 : vector<7x64xf32>, vector<1x64xf32> -> vector<8x64xf32>
    %19 = arith.addf %16, %18 : vector<8x64xf32>
    %20 = vector.extract_strided_slice %3 {offsets = [8, 0], sizes = [8, 64], strides = [1, 1]} : vector<16x64xf32> to vector<8x64xf32>
    %21 = vector.extract_strided_slice %6 {offsets = [8, 0], sizes = [8, 64], strides = [1, 1]} : vector<16x64xf32> to vector<8x64xf32>
    %22 = vector.extract_strided_slice %9 {offsets = [8, 0], sizes = [8, 64], strides = [1, 1]} : vector<16x64xf32> to vector<8x64xf32>
    %23 = vector.extract_strided_slice %20 {offsets = [0, 0], sizes = [7, 64], strides = [1, 1]} : vector<8x64xf32> to vector<7x64xf32>
    %24 = tpu.concatenate %10, %23 in 0 : vector<1x64xf32>, vector<7x64xf32> -> vector<8x64xf32>
    %25 = arith.addf %21, %24 : vector<8x64xf32>
    %26 = vector.extract_strided_slice %22 {offsets = [1, 0], sizes = [7, 64], strides = [1, 1]} : vector<8x64xf32> to vector<7x64xf32>
    %27 = tpu.concatenate %26, %10 in 0 : vector<7x64xf32>, vector<1x64xf32> -> vector<8x64xf32>
    %28 = arith.addf %25, %27 : vector<8x64xf32>
    %29 = tpu.concatenate %19, %28 in 0 : vector<8x64xf32>, vector<8x64xf32> -> vector<16x64xf32>
    %c0_11 = arith.constant 0 : index
    %c0_12 = arith.constant 0 : index
    %30 = vector.load %arg3[%c0_11, %c0_12] : memref<1x64xf32, #tpu.memory_space<vmem>>, vector<1x64xf32>
    %31 = vector.broadcast %30 : vector<1x64xf32> to vector<16x64xf32>
    %32 = arith.addf %29, %31 : vector<16x64xf32>
    %cst_13 = arith.constant 0.000000e+00 : f32
    %33 = vector.broadcast %cst_13 : f32 to vector<16x64xf32>
    %34 = arith.maximumf %32, %33 : vector<16x64xf32>
    %35 = arith.truncf %34 : vector<16x64xf32> to vector<16x64xbf16>
    %c0_14 = arith.constant 0 : index
    %c0_15 = arith.constant 0 : index
    %36 = vector.load %arg4[%c0_14, %c0_15] : memref<16x64xbf16, #tpu.memory_space<vmem>>, vector<16x64xbf16>
    tpu.vector_store %arg4[%c0_14, %c0_15], %35 {strides = array<i32>} : memref<16x64xbf16, #tpu.memory_space<vmem>>, vector<16x64xbf16>,
    return
  }
  func.func @transform_0(%arg0: i32) -> (i32, i32) {
    %c0_i32 = arith.constant 0 : i32
    %c0_i32_0 = arith.constant 0 : i32
    %c0_i32_1 = arith.constant 0 : i32
    return %c0_i32, %c0_i32_0 : i32, i32
  }
  func.func @transform_1(%arg0: i32) -> (i32, i32, i32) {
    %c0_i32 = arith.constant 0 : i32
    %c0_i32_0 = arith.constant 0 : i32
    %c0_i32_1 = arith.constant 0 : i32
    %c0_i32_2 = arith.constant 0 : i32
    return %c0_i32, %c0_i32_0, %c0_i32_1 : i32, i32, i32
  }
  func.func @transform_2(%arg0: i32) -> (i32, i32) {
    %c0_i32 = arith.constant 0 : i32
    %c0_i32_0 = arith.constant 0 : i32
    %c0_i32_1 = arith.constant 0 : i32
    return %c0_i32, %c0_i32_0 : i32, i32
  }
  func.func @transform_3(%arg0: i32) -> (i32, i32) {
    %c0_i32 = arith.constant 0 : i32
    %c0_i32_0 = arith.constant 0 : i32
    %c0_i32_1 = arith.constant 0 : i32
    return %c0_i32, %c0_i32_0 : i32, i32
  }
}

module attributes {stable_mosaic.version = 11 : i64} {
  func.func @_conv_kernel(%arg0: i32, %arg1: memref<8x32xbf16, #tpu.memory_space<vmem>>, %arg2: memref<3x32x32xbf16, #tpu.memory_space<vmem>>, %arg3: memref<1x32xf32, #tpu.memory_space<vmem>>, %arg4: memref<8x32xbf16, #tpu.memory_space<vmem>>) attributes {dimension_semantics = [#tpu.dimension_semantics<arbitrary>], iteration_bounds = array<i64: 1>, scalar_prefetch = 0 : i64, scratch_operands = 0 : i64, tpu.core_type = #tpu.core_type<tc>, window_params = [{pipeline_mode = #tpu.pipeline_mode<synchronous>, transform_indices = @transform_0, window_bounds = array<i64: 8, 32>}, {pipeline_mode = #tpu.pipeline_mode<synchronous>, transform_indices = @transform_1, window_bounds = array<i64: 3, 32, 32>}, {pipeline_mode = #tpu.pipeline_mode<synchronous>, transform_indices = @transform_2, window_bounds = array<i64: 1, 32>}, {pipeline_mode = #tpu.pipeline_mode<synchronous>, transform_indices = @transform_3, window_bounds = array<i64: 8, 32>}]} {
    %c0 = arith.constant 0 : index
    %c0_0 = arith.constant 0 : index
    %0 = vector.load %arg1[%c0, %c0_0] : memref<8x32xbf16, #tpu.memory_space<vmem>>, vector<8x32xbf16>
    %c0_1 = arith.constant 0 : index
    %c0_2 = arith.constant 0 : index
    %c0_3 = arith.constant 0 : index
    %1 = vector.load %arg2[%c0_1, %c0_2, %c0_3] : memref<3x32x32xbf16, #tpu.memory_space<vmem>>, vector<1x32x32xbf16>
    %2 = vector.shape_cast %1 : vector<1x32x32xbf16> to vector<32x32xbf16>
    %cst = arith.constant dense<0.000000e+00> : vector<8x32xf32>
    %3 = tpu.matmul %0, %2, %cst {dimension_numbers = #tpu.dot_dimension_numbers<[1], [0], [0], [1], [0, 0, 1, 1], [], []>} : vector<8x32xbf16>, vector<32x32xbf16>, vector<8x32xf32> -> vector<8x32xf32>
    %c1 = arith.constant 1 : index
    %c0_4 = arith.constant 0 : index
    %c0_5 = arith.constant 0 : index
    %4 = vector.load %arg2[%c1, %c0_4, %c0_5] : memref<3x32x32xbf16, #tpu.memory_space<vmem>>, vector<1x32x32xbf16>
    %5 = vector.shape_cast %4 : vector<1x32x32xbf16> to vector<32x32xbf16>
    %cst_6 = arith.constant dense<0.000000e+00> : vector<8x32xf32>
    %6 = tpu.matmul %0, %5, %cst_6 {dimension_numbers = #tpu.dot_dimension_numbers<[1], [0], [0], [1], [0, 0, 1, 1], [], []>} : vector<8x32xbf16>, vector<32x32xbf16>, vector<8x32xf32> -> vector<8x32xf32>
    %c2 = arith.constant 2 : index
    %c0_7 = arith.constant 0 : index
    %c0_8 = arith.constant 0 : index
    %7 = vector.load %arg2[%c2, %c0_7, %c0_8] : memref<3x32x32xbf16, #tpu.memory_space<vmem>>, vector<1x32x32xbf16>
    %8 = vector.shape_cast %7 : vector<1x32x32xbf16> to vector<32x32xbf16>
    %cst_9 = arith.constant dense<0.000000e+00> : vector<8x32xf32>
    %9 = tpu.matmul %0, %8, %cst_9 {dimension_numbers = #tpu.dot_dimension_numbers<[1], [0], [0], [1], [0, 0, 1, 1], [], []>} : vector<8x32xbf16>, vector<32x32xbf16>, vector<8x32xf32> -> vector<8x32xf32>
    %cst_10 = arith.constant 0.000000e+00 : f32
    %10 = vector.broadcast %cst_10 : f32 to vector<1x32xf32>
    %11 = vector.extract_strided_slice %3 {offsets = [0, 0], sizes = [4, 32], strides = [1, 1]} : vector<8x32xf32> to vector<4x32xf32>
    %12 = vector.extract_strided_slice %6 {offsets = [0, 0], sizes = [4, 32], strides = [1, 1]} : vector<8x32xf32> to vector<4x32xf32>
    %13 = vector.extract_strided_slice %9 {offsets = [0, 0], sizes = [4, 32], strides = [1, 1]} : vector<8x32xf32> to vector<4x32xf32>
    %14 = vector.extract_strided_slice %11 {offsets = [0, 0], sizes = [3, 32], strides = [1, 1]} : vector<4x32xf32> to vector<3x32xf32>
    %15 = tpu.concatenate %10, %14 in 0 : vector<1x32xf32>, vector<3x32xf32> -> vector<4x32xf32>
    %16 = arith.addf %12, %15 : vector<4x32xf32>
    %17 = vector.extract_strided_slice %13 {offsets = [1, 0], sizes = [3, 32], strides = [1, 1]} : vector<4x32xf32> to vector<3x32xf32>
    %18 = tpu.concatenate %17, %10 in 0 : vector<3x32xf32>, vector<1x32xf32> -> vector<4x32xf32>
    %19 = arith.addf %16, %18 : vector<4x32xf32>
    %20 = vector.extract_strided_slice %3 {offsets = [4, 0], sizes = [4, 32], strides = [1, 1]} : vector<8x32xf32> to vector<4x32xf32>
    %21 = vector.extract_strided_slice %6 {offsets = [4, 0], sizes = [4, 32], strides = [1, 1]} : vector<8x32xf32> to vector<4x32xf32>
    %22 = vector.extract_strided_slice %9 {offsets = [4, 0], sizes = [4, 32], strides = [1, 1]} : vector<8x32xf32> to vector<4x32xf32>
    %23 = vector.extract_strided_slice %20 {offsets = [0, 0], sizes = [3, 32], strides = [1, 1]} : vector<4x32xf32> to vector<3x32xf32>
    %24 = tpu.concatenate %10, %23 in 0 : vector<1x32xf32>, vector<3x32xf32> -> vector<4x32xf32>
    %25 = arith.addf %21, %24 : vector<4x32xf32>
    %26 = vector.extract_strided_slice %22 {offsets = [1, 0], sizes = [3, 32], strides = [1, 1]} : vector<4x32xf32> to vector<3x32xf32>
    %27 = tpu.concatenate %26, %10 in 0 : vector<3x32xf32>, vector<1x32xf32> -> vector<4x32xf32>
    %28 = arith.addf %25, %27 : vector<4x32xf32>
    %29 = tpu.concatenate %19, %28 in 0 : vector<4x32xf32>, vector<4x32xf32> -> vector<8x32xf32>
    %c0_11 = arith.constant 0 : index
    %c0_12 = arith.constant 0 : index
    %30 = vector.load %arg3[%c0_11, %c0_12] : memref<1x32xf32, #tpu.memory_space<vmem>>, vector<1x32xf32>
    %31 = vector.broadcast %30 : vector<1x32xf32> to vector<8x32xf32>
    %32 = arith.addf %29, %31 : vector<8x32xf32>
    %cst_13 = arith.constant 0.000000e+00 : f32
    %33 = vector.broadcast %cst_13 : f32 to vector<8x32xf32>
    %34 = arith.maximumf %32, %33 : vector<8x32xf32>
    %35 = arith.truncf %34 : vector<8x32xf32> to vector<8x32xbf16>
    %c0_14 = arith.constant 0 : index
    %c0_15 = arith.constant 0 : index
    %36 = vector.load %arg4[%c0_14, %c0_15] : memref<8x32xbf16, #tpu.memory_space<vmem>>, vector<8x32xbf16>
    tpu.vector_store %arg4[%c0_14, %c0_15], %35 {strides = array<i32>} : memref<8x32xbf16, #tpu.memory_space<vmem>>, vector<8x32xbf16>,
    return
  }
  func.func @transform_0(%arg0: i32) -> (i32, i32) {
    %c0_i32 = arith.constant 0 : i32
    %c0_i32_0 = arith.constant 0 : i32
    %c0_i32_1 = arith.constant 0 : i32
    return %c0_i32, %c0_i32_0 : i32, i32
  }
  func.func @transform_1(%arg0: i32) -> (i32, i32, i32) {
    %c0_i32 = arith.constant 0 : i32
    %c0_i32_0 = arith.constant 0 : i32
    %c0_i32_1 = arith.constant 0 : i32
    %c0_i32_2 = arith.constant 0 : i32
    return %c0_i32, %c0_i32_0, %c0_i32_1 : i32, i32, i32
  }
  func.func @transform_2(%arg0: i32) -> (i32, i32) {
    %c0_i32 = arith.constant 0 : i32
    %c0_i32_0 = arith.constant 0 : i32
    %c0_i32_1 = arith.constant 0 : i32
    return %c0_i32, %c0_i32_0 : i32, i32
  }
  func.func @transform_3(%arg0: i32) -> (i32, i32) {
    %c0_i32 = arith.constant 0 : i32
    %c0_i32_0 = arith.constant 0 : i32
    %c0_i32_1 = arith.constant 0 : i32
    return %c0_i32, %c0_i32_0 : i32, i32
  }
}

module attributes {stable_mosaic.version = 11 : i64} {
  func.func @_conv_kernel(%arg0: i32, %arg1: memref<4x16xbf16, #tpu.memory_space<vmem>>, %arg2: memref<3x16x16xbf16, #tpu.memory_space<vmem>>, %arg3: memref<1x16xf32, #tpu.memory_space<vmem>>, %arg4: memref<4x16xbf16, #tpu.memory_space<vmem>>) attributes {dimension_semantics = [#tpu.dimension_semantics<arbitrary>], iteration_bounds = array<i64: 1>, scalar_prefetch = 0 : i64, scratch_operands = 0 : i64, tpu.core_type = #tpu.core_type<tc>, window_params = [{pipeline_mode = #tpu.pipeline_mode<synchronous>, transform_indices = @transform_0, window_bounds = array<i64: 4, 16>}, {pipeline_mode = #tpu.pipeline_mode<synchronous>, transform_indices = @transform_1, window_bounds = array<i64: 3, 16, 16>}, {pipeline_mode = #tpu.pipeline_mode<synchronous>, transform_indices = @transform_2, window_bounds = array<i64: 1, 16>}, {pipeline_mode = #tpu.pipeline_mode<synchronous>, transform_indices = @transform_3, window_bounds = array<i64: 4, 16>}]} {
    %c0 = arith.constant 0 : index
    %c0_0 = arith.constant 0 : index
    %0 = vector.load %arg1[%c0, %c0_0] : memref<4x16xbf16, #tpu.memory_space<vmem>>, vector<4x16xbf16>
    %c0_1 = arith.constant 0 : index
    %c0_2 = arith.constant 0 : index
    %c0_3 = arith.constant 0 : index
    %1 = vector.load %arg2[%c0_1, %c0_2, %c0_3] : memref<3x16x16xbf16, #tpu.memory_space<vmem>>, vector<1x16x16xbf16>
    %2 = vector.shape_cast %1 : vector<1x16x16xbf16> to vector<16x16xbf16>
    %cst = arith.constant dense<0.000000e+00> : vector<4x16xf32>
    %3 = tpu.matmul %0, %2, %cst {dimension_numbers = #tpu.dot_dimension_numbers<[1], [0], [0], [1], [0, 0, 1, 1], [], []>} : vector<4x16xbf16>, vector<16x16xbf16>, vector<4x16xf32> -> vector<4x16xf32>
    %c1 = arith.constant 1 : index
    %c0_4 = arith.constant 0 : index
    %c0_5 = arith.constant 0 : index
    %4 = vector.load %arg2[%c1, %c0_4, %c0_5] : memref<3x16x16xbf16, #tpu.memory_space<vmem>>, vector<1x16x16xbf16>
    %5 = vector.shape_cast %4 : vector<1x16x16xbf16> to vector<16x16xbf16>
    %cst_6 = arith.constant dense<0.000000e+00> : vector<4x16xf32>
    %6 = tpu.matmul %0, %5, %cst_6 {dimension_numbers = #tpu.dot_dimension_numbers<[1], [0], [0], [1], [0, 0, 1, 1], [], []>} : vector<4x16xbf16>, vector<16x16xbf16>, vector<4x16xf32> -> vector<4x16xf32>
    %c2 = arith.constant 2 : index
    %c0_7 = arith.constant 0 : index
    %c0_8 = arith.constant 0 : index
    %7 = vector.load %arg2[%c2, %c0_7, %c0_8] : memref<3x16x16xbf16, #tpu.memory_space<vmem>>, vector<1x16x16xbf16>
    %8 = vector.shape_cast %7 : vector<1x16x16xbf16> to vector<16x16xbf16>
    %cst_9 = arith.constant dense<0.000000e+00> : vector<4x16xf32>
    %9 = tpu.matmul %0, %8, %cst_9 {dimension_numbers = #tpu.dot_dimension_numbers<[1], [0], [0], [1], [0, 0, 1, 1], [], []>} : vector<4x16xbf16>, vector<16x16xbf16>, vector<4x16xf32> -> vector<4x16xf32>
    %cst_10 = arith.constant 0.000000e+00 : f32
    %10 = vector.broadcast %cst_10 : f32 to vector<1x16xf32>
    %11 = vector.extract_strided_slice %3 {offsets = [0, 0], sizes = [2, 16], strides = [1, 1]} : vector<4x16xf32> to vector<2x16xf32>
    %12 = vector.extract_strided_slice %6 {offsets = [0, 0], sizes = [2, 16], strides = [1, 1]} : vector<4x16xf32> to vector<2x16xf32>
    %13 = vector.extract_strided_slice %9 {offsets = [0, 0], sizes = [2, 16], strides = [1, 1]} : vector<4x16xf32> to vector<2x16xf32>
    %14 = vector.extract_strided_slice %11 {offsets = [0, 0], sizes = [1, 16], strides = [1, 1]} : vector<2x16xf32> to vector<1x16xf32>
    %15 = tpu.concatenate %10, %14 in 0 : vector<1x16xf32>, vector<1x16xf32> -> vector<2x16xf32>
    %16 = arith.addf %12, %15 : vector<2x16xf32>
    %17 = vector.extract_strided_slice %13 {offsets = [1, 0], sizes = [1, 16], strides = [1, 1]} : vector<2x16xf32> to vector<1x16xf32>
    %18 = tpu.concatenate %17, %10 in 0 : vector<1x16xf32>, vector<1x16xf32> -> vector<2x16xf32>
    %19 = arith.addf %16, %18 : vector<2x16xf32>
    %20 = vector.extract_strided_slice %3 {offsets = [2, 0], sizes = [2, 16], strides = [1, 1]} : vector<4x16xf32> to vector<2x16xf32>
    %21 = vector.extract_strided_slice %6 {offsets = [2, 0], sizes = [2, 16], strides = [1, 1]} : vector<4x16xf32> to vector<2x16xf32>
    %22 = vector.extract_strided_slice %9 {offsets = [2, 0], sizes = [2, 16], strides = [1, 1]} : vector<4x16xf32> to vector<2x16xf32>
    %23 = vector.extract_strided_slice %20 {offsets = [0, 0], sizes = [1, 16], strides = [1, 1]} : vector<2x16xf32> to vector<1x16xf32>
    %24 = tpu.concatenate %10, %23 in 0 : vector<1x16xf32>, vector<1x16xf32> -> vector<2x16xf32>
    %25 = arith.addf %21, %24 : vector<2x16xf32>
    %26 = vector.extract_strided_slice %22 {offsets = [1, 0], sizes = [1, 16], strides = [1, 1]} : vector<2x16xf32> to vector<1x16xf32>
    %27 = tpu.concatenate %26, %10 in 0 : vector<1x16xf32>, vector<1x16xf32> -> vector<2x16xf32>
    %28 = arith.addf %25, %27 : vector<2x16xf32>
    %29 = tpu.concatenate %19, %28 in 0 : vector<2x16xf32>, vector<2x16xf32> -> vector<4x16xf32>
    %c0_11 = arith.constant 0 : index
    %c0_12 = arith.constant 0 : index
    %30 = vector.load %arg3[%c0_11, %c0_12] : memref<1x16xf32, #tpu.memory_space<vmem>>, vector<1x16xf32>
    %31 = vector.broadcast %30 : vector<1x16xf32> to vector<4x16xf32>
    %32 = arith.addf %29, %31 : vector<4x16xf32>
    %cst_13 = arith.constant 0.000000e+00 : f32
    %33 = vector.broadcast %cst_13 : f32 to vector<4x16xf32>
    %34 = arith.maximumf %32, %33 : vector<4x16xf32>
    %35 = arith.truncf %34 : vector<4x16xf32> to vector<4x16xbf16>
    %c0_14 = arith.constant 0 : index
    %c0_15 = arith.constant 0 : index
    %36 = vector.load %arg4[%c0_14, %c0_15] : memref<4x16xbf16, #tpu.memory_space<vmem>>, vector<4x16xbf16>
    tpu.vector_store %arg4[%c0_14, %c0_15], %35 {strides = array<i32>} : memref<4x16xbf16, #tpu.memory_space<vmem>>, vector<4x16xbf16>,
    return
  }
  func.func @transform_0(%arg0: i32) -> (i32, i32) {
    %c0_i32 = arith.constant 0 : i32
    %c0_i32_0 = arith.constant 0 : i32
    %c0_i32_1 = arith.constant 0 : i32
    return %c0_i32, %c0_i32_0 : i32, i32
  }
  func.func @transform_1(%arg0: i32) -> (i32, i32, i32) {
    %c0_i32 = arith.constant 0 : i32
    %c0_i32_0 = arith.constant 0 : i32
    %c0_i32_1 = arith.constant 0 : i32
    %c0_i32_2 = arith.constant 0 : i32
    return %c0_i32, %c0_i32_0, %c0_i32_1 : i32, i32, i32
  }
  func.func @transform_2(%arg0: i32) -> (i32, i32) {
    %c0_i32 = arith.constant 0 : i32
    %c0_i32_0 = arith.constant 0 : i32
    %c0_i32_1 = arith.constant 0 : i32
    return %c0_i32, %c0_i32_0 : i32, i32
  }
  func.func @transform_3(%arg0: i32) -> (i32, i32) {
    %c0_i32 = arith.constant 0 : i32
    %c0_i32_0 = arith.constant 0 : i32
    %c0_i32_1 = arith.constant 0 : i32
    return %c0_i32, %c0_i32_0 : i32, i32
  }
}

module attributes {stable_mosaic.version = 11 : i64} {
  func.func @_deep_kernel(%arg0: i32, %arg1: memref<2x8xbf16, #tpu.memory_space<vmem>>, %arg2: memref<8x8xbf16, #tpu.memory_space<vmem>>, %arg3: memref<1x8xf32, #tpu.memory_space<vmem>>, %arg4: memref<8x8xbf16, #tpu.memory_space<vmem>>, %arg5: memref<1x8xf32, #tpu.memory_space<vmem>>, %arg6: memref<8x8xbf16, #tpu.memory_space<vmem>>, %arg7: memref<1x8xf32, #tpu.memory_space<vmem>>, %arg8: memref<8x8xbf16, #tpu.memory_space<vmem>>, %arg9: memref<8x8xbf16, #tpu.memory_space<vmem>>, %arg10: memref<1x8xf32, #tpu.memory_space<vmem>>, %arg11: memref<8x8xbf16, #tpu.memory_space<vmem>>, %arg12: memref<8x8xbf16, #tpu.memory_space<vmem>>, %arg13: memref<1x8xf32, #tpu.memory_space<vmem>>, %arg14: memref<2x8xbf16, #tpu.memory_space<vmem>>) attributes {dimension_semantics = [#tpu.dimension_semantics<arbitrary>], iteration_bounds = array<i64: 1>, scalar_prefetch = 0 : i64, scratch_operands = 0 : i64, tpu.core_type = #tpu.core_type<tc>, window_params = [{pipeline_mode = #tpu.pipeline_mode<synchronous>, transform_indices = @transform_0, window_bounds = array<i64: 2, 8>}, {pipeline_mode = #tpu.pipeline_mode<synchronous>, transform_indices = @transform_1, window_bounds = array<i64: 8, 8>}, {pipeline_mode = #tpu.pipeline_mode<synchronous>, transform_indices = @transform_2, window_bounds = array<i64: 1, 8>}, {pipeline_mode = #tpu.pipeline_mode<synchronous>, transform_indices = @transform_3, window_bounds = array<i64: 8, 8>}, {pipeline_mode = #tpu.pipeline_mode<synchronous>, transform_indices = @transform_4, window_bounds = array<i64: 1, 8>}, {pipeline_mode = #tpu.pipeline_mode<synchronous>, transform_indices = @transform_5, window_bounds = array<i64: 8, 8>}, {pipeline_mode = #tpu.pipeline_mode<synchronous>, transform_indices = @transform_6, window_bounds = array<i64: 1, 8>}, {pipeline_mode = #tpu.pipeline_mode<synchronous>, transform_indices = @transform_7, window_bounds = array<i64: 8, 8>}, {pipeline_mode = #tpu.pipeline_mode<synchronous>, transform_indices = @transform_8, window_bounds = array<i64: 8, 8>}, {pipeline_mode = #tpu.pipeline_mode<synchronous>, transform_indices = @transform_9, window_bounds = array<i64: 1, 8>}, {pipeline_mode = #tpu.pipeline_mode<synchronous>, transform_indices = @transform_10, window_bounds = array<i64: 8, 8>}, {pipeline_mode = #tpu.pipeline_mode<synchronous>, transform_indices = @transform_11, window_bounds = array<i64: 8, 8>}, {pipeline_mode = #tpu.pipeline_mode<synchronous>, transform_indices = @transform_12, window_bounds = array<i64: 1, 8>}, {pipeline_mode = #tpu.pipeline_mode<synchronous>, transform_indices = @transform_13, window_bounds = array<i64: 2, 8>}]} {
    %c0 = arith.constant 0 : index
    %c0_0 = arith.constant 0 : index
    %0 = vector.load %arg1[%c0, %c0_0] : memref<2x8xbf16, #tpu.memory_space<vmem>>, vector<2x8xbf16>
    %c0_1 = arith.constant 0 : index
    %c0_2 = arith.constant 0 : index
    %1 = vector.load %arg2[%c0_1, %c0_2] : memref<8x8xbf16, #tpu.memory_space<vmem>>, vector<8x8xbf16>
    %cst = arith.constant dense<0.000000e+00> : vector<2x8xf32>
    %2 = tpu.matmul %0, %1, %cst {dimension_numbers = #tpu.dot_dimension_numbers<[1], [0], [0], [1], [0, 0, 1, 1], [], []>} : vector<2x8xbf16>, vector<8x8xbf16>, vector<2x8xf32> -> vector<2x8xf32>
    %c0_3 = arith.constant 0 : index
    %c0_4 = arith.constant 0 : index
    %3 = vector.load %arg3[%c0_3, %c0_4] : memref<1x8xf32, #tpu.memory_space<vmem>>, vector<1x8xf32>
    %4 = vector.broadcast %3 : vector<1x8xf32> to vector<2x8xf32>
    %5 = arith.addf %2, %4 : vector<2x8xf32>
    %cst_5 = arith.constant 0.000000e+00 : f32
    %6 = vector.broadcast %cst_5 : f32 to vector<2x8xf32>
    %7 = arith.maximumf %5, %6 : vector<2x8xf32>
    %8 = arith.truncf %7 : vector<2x8xf32> to vector<2x8xbf16>
    %c0_6 = arith.constant 0 : index
    %c0_7 = arith.constant 0 : index
    %9 = vector.load %arg4[%c0_6, %c0_7] : memref<8x8xbf16, #tpu.memory_space<vmem>>, vector<8x8xbf16>
    %cst_8 = arith.constant dense<0.000000e+00> : vector<2x8xf32>
    %10 = tpu.matmul %8, %9, %cst_8 {dimension_numbers = #tpu.dot_dimension_numbers<[1], [0], [0], [1], [0, 0, 1, 1], [], []>} : vector<2x8xbf16>, vector<8x8xbf16>, vector<2x8xf32> -> vector<2x8xf32>
    %c0_9 = arith.constant 0 : index
    %c0_10 = arith.constant 0 : index
    %11 = vector.load %arg5[%c0_9, %c0_10] : memref<1x8xf32, #tpu.memory_space<vmem>>, vector<1x8xf32>
    %12 = vector.broadcast %11 : vector<1x8xf32> to vector<2x8xf32>
    %13 = arith.addf %10, %12 : vector<2x8xf32>
    %cst_11 = arith.constant 0.000000e+00 : f32
    %14 = vector.broadcast %cst_11 : f32 to vector<2x8xf32>
    %15 = arith.maximumf %13, %14 : vector<2x8xf32>
    %16 = arith.truncf %15 : vector<2x8xf32> to vector<2x8xbf16>
    %c0_12 = arith.constant 0 : index
    %c0_13 = arith.constant 0 : index
    %17 = vector.load %arg6[%c0_12, %c0_13] : memref<8x8xbf16, #tpu.memory_space<vmem>>, vector<8x8xbf16>
    %cst_14 = arith.constant dense<0.000000e+00> : vector<2x8xf32>
    %18 = tpu.matmul %16, %17, %cst_14 {dimension_numbers = #tpu.dot_dimension_numbers<[1], [0], [0], [1], [0, 0, 1, 1], [], []>} : vector<2x8xbf16>, vector<8x8xbf16>, vector<2x8xf32> -> vector<2x8xf32>
    %c0_15 = arith.constant 0 : index
    %c0_16 = arith.constant 0 : index
    %19 = vector.load %arg7[%c0_15, %c0_16] : memref<1x8xf32, #tpu.memory_space<vmem>>, vector<1x8xf32>
    %20 = vector.broadcast %19 : vector<1x8xf32> to vector<2x8xf32>
    %21 = arith.addf %18, %20 : vector<2x8xf32>
    %cst_17 = arith.constant 0.000000e+00 : f32
    %22 = vector.broadcast %cst_17 : f32 to vector<2x8xf32>
    %23 = arith.maximumf %21, %22 : vector<2x8xf32>
    %24 = arith.truncf %23 : vector<2x8xf32> to vector<2x8xbf16>
    %c0_18 = arith.constant 0 : index
    %c0_19 = arith.constant 0 : index
    %25 = vector.load %arg8[%c0_18, %c0_19] : memref<8x8xbf16, #tpu.memory_space<vmem>>, vector<8x8xbf16>
    %cst_20 = arith.constant dense<0.000000e+00> : vector<2x8xf32>
    %26 = tpu.matmul %24, %25, %cst_20 {dimension_numbers = #tpu.dot_dimension_numbers<[1], [0], [0], [1], [0, 0, 1, 1], [], []>} : vector<2x8xbf16>, vector<8x8xbf16>, vector<2x8xf32> -> vector<2x8xf32>
    %27 = arith.truncf %15 : vector<2x8xf32> to vector<2x8xbf16>
    %c0_21 = arith.constant 0 : index
    %c0_22 = arith.constant 0 : index
    %28 = vector.load %arg9[%c0_21, %c0_22] : memref<8x8xbf16, #tpu.memory_space<vmem>>, vector<8x8xbf16>
    %cst_23 = arith.constant dense<0.000000e+00> : vector<2x8xf32>
    %29 = tpu.matmul %27, %28, %cst_23 {dimension_numbers = #tpu.dot_dimension_numbers<[1], [0], [0], [1], [0, 0, 1, 1], [], []>} : vector<2x8xbf16>, vector<8x8xbf16>, vector<2x8xf32> -> vector<2x8xf32>
    %30 = arith.addf %26, %29 : vector<2x8xf32>
    %c0_24 = arith.constant 0 : index
    %c0_25 = arith.constant 0 : index
    %31 = vector.load %arg10[%c0_24, %c0_25] : memref<1x8xf32, #tpu.memory_space<vmem>>, vector<1x8xf32>
    %32 = vector.broadcast %31 : vector<1x8xf32> to vector<2x8xf32>
    %33 = arith.addf %30, %32 : vector<2x8xf32>
    %cst_26 = arith.constant 0.000000e+00 : f32
    %34 = vector.broadcast %cst_26 : f32 to vector<2x8xf32>
    %35 = arith.maximumf %33, %34 : vector<2x8xf32>
    %36 = arith.truncf %35 : vector<2x8xf32> to vector<2x8xbf16>
    %c0_27 = arith.constant 0 : index
    %c0_28 = arith.constant 0 : index
    %37 = vector.load %arg11[%c0_27, %c0_28] : memref<8x8xbf16, #tpu.memory_space<vmem>>, vector<8x8xbf16>
    %cst_29 = arith.constant dense<0.000000e+00> : vector<2x8xf32>
    %38 = tpu.matmul %36, %37, %cst_29 {dimension_numbers = #tpu.dot_dimension_numbers<[1], [0], [0], [1], [0, 0, 1, 1], [], []>} : vector<2x8xbf16>, vector<8x8xbf16>, vector<2x8xf32> -> vector<2x8xf32>
    %39 = arith.truncf %7 : vector<2x8xf32> to vector<2x8xbf16>
    %c0_30 = arith.constant 0 : index
    %c0_31 = arith.constant 0 : index
    %40 = vector.load %arg12[%c0_30, %c0_31] : memref<8x8xbf16, #tpu.memory_space<vmem>>, vector<8x8xbf16>
    %cst_32 = arith.constant dense<0.000000e+00> : vector<2x8xf32>
    %41 = tpu.matmul %39, %40, %cst_32 {dimension_numbers = #tpu.dot_dimension_numbers<[1], [0], [0], [1], [0, 0, 1, 1], [], []>} : vector<2x8xbf16>, vector<8x8xbf16>, vector<2x8xf32> -> vector<2x8xf32>
    %42 = arith.addf %38, %41 : vector<2x8xf32>
    %c0_33 = arith.constant 0 : index
    %c0_34 = arith.constant 0 : index
    %43 = vector.load %arg13[%c0_33, %c0_34] : memref<1x8xf32, #tpu.memory_space<vmem>>, vector<1x8xf32>
    %44 = vector.broadcast %43 : vector<1x8xf32> to vector<2x8xf32>
    %45 = arith.addf %42, %44 : vector<2x8xf32>
    %cst_35 = arith.constant 0.000000e+00 : f32
    %46 = vector.broadcast %cst_35 : f32 to vector<2x8xf32>
    %47 = arith.maximumf %45, %46 : vector<2x8xf32>
    %48 = arith.truncf %47 : vector<2x8xf32> to vector<2x8xbf16>
    %c0_36 = arith.constant 0 : index
    %c0_37 = arith.constant 0 : index
    %49 = vector.load %arg14[%c0_36, %c0_37] : memref<2x8xbf16, #tpu.memory_space<vmem>>, vector<2x8xbf16>
    tpu.vector_store %arg14[%c0_36, %c0_37], %48 {strides = array<i32>} : memref<2x8xbf16, #tpu.memory_space<vmem>>, vector<2x8xbf16>,
    return
  }
  func.func @transform_0(%arg0: i32) -> (i32, i32) {
    %c0_i32 = arith.constant 0 : i32
    %c0_i32_0 = arith.constant 0 : i32
    %c0_i32_1 = arith.constant 0 : i32
    return %c0_i32, %c0_i32_0 : i32, i32
  }
  func.func @transform_1(%arg0: i32) -> (i32, i32) {
    %c0_i32 = arith.constant 0 : i32
    %c0_i32_0 = arith.constant 0 : i32
    %c0_i32_1 = arith.constant 0 : i32
    return %c0_i32, %c0_i32_0 : i32, i32
  }
  func.func @transform_2(%arg0: i32) -> (i32, i32) {
    %c0_i32 = arith.constant 0 : i32
    %c0_i32_0 = arith.constant 0 : i32
    %c0_i32_1 = arith.constant 0 : i32
    return %c0_i32, %c0_i32_0 : i32, i32
  }
  func.func @transform_3(%arg0: i32) -> (i32, i32) {
    %c0_i32 = arith.constant 0 : i32
    %c0_i32_0 = arith.constant 0 : i32
    %c0_i32_1 = arith.constant 0 : i32
    return %c0_i32, %c0_i32_0 : i32, i32
  }
  func.func @transform_4(%arg0: i32) -> (i32, i32) {
    %c0_i32 = arith.constant 0 : i32
    %c0_i32_0 = arith.constant 0 : i32
    %c0_i32_1 = arith.constant 0 : i32
    return %c0_i32, %c0_i32_0 : i32, i32
  }
  func.func @transform_5(%arg0: i32) -> (i32, i32) {
    %c0_i32 = arith.constant 0 : i32
    %c0_i32_0 = arith.constant 0 : i32
    %c0_i32_1 = arith.constant 0 : i32
    return %c0_i32, %c0_i32_0 : i32, i32
  }
  func.func @transform_6(%arg0: i32) -> (i32, i32) {
    %c0_i32 = arith.constant 0 : i32
    %c0_i32_0 = arith.constant 0 : i32
    %c0_i32_1 = arith.constant 0 : i32
    return %c0_i32, %c0_i32_0 : i32, i32
  }
  func.func @transform_7(%arg0: i32) -> (i32, i32) {
    %c0_i32 = arith.constant 0 : i32
    %c0_i32_0 = arith.constant 0 : i32
    %c0_i32_1 = arith.constant 0 : i32
    return %c0_i32, %c0_i32_0 : i32, i32
  }
  func.func @transform_8(%arg0: i32) -> (i32, i32) {
    %c0_i32 = arith.constant 0 : i32
    %c0_i32_0 = arith.constant 0 : i32
    %c0_i32_1 = arith.constant 0 : i32
    return %c0_i32, %c0_i32_0 : i32, i32
  }
  func.func @transform_9(%arg0: i32) -> (i32, i32) {
    %c0_i32 = arith.constant 0 : i32
    %c0_i32_0 = arith.constant 0 : i32
    %c0_i32_1 = arith.constant 0 : i32
    return %c0_i32, %c0_i32_0 : i32, i32
  }
  func.func @transform_10(%arg0: i32) -> (i32, i32) {
    %c0_i32 = arith.constant 0 : i32
    %c0_i32_0 = arith.constant 0 : i32
    %c0_i32_1 = arith.constant 0 : i32
    return %c0_i32, %c0_i32_0 : i32, i32
  }
  func.func @transform_11(%arg0: i32) -> (i32, i32) {
    %c0_i32 = arith.constant 0 : i32
    %c0_i32_0 = arith.constant 0 : i32
    %c0_i32_1 = arith.constant 0 : i32
    return %c0_i32, %c0_i32_0 : i32, i32
  }
  func.func @transform_12(%arg0: i32) -> (i32, i32) {
    %c0_i32 = arith.constant 0 : i32
    %c0_i32_0 = arith.constant 0 : i32
    %c0_i32_1 = arith.constant 0 : i32
    return %c0_i32, %c0_i32_0 : i32, i32
  }
  func.func @transform_13(%arg0: i32) -> (i32, i32) {
    %c0_i32 = arith.constant 0 : i32
    %c0_i32_0 = arith.constant 0 : i32
    %c0_i32_1 = arith.constant 0 : i32
    return %c0_i32, %c0_i32_0 : i32, i32
  }
}

module attributes {stable_mosaic.version = 11 : i64} {
  func.func @_conv_kernel(%arg0: i32, %arg1: memref<4x16xbf16, #tpu.memory_space<vmem>>, %arg2: memref<4x16xbf16, #tpu.memory_space<vmem>>, %arg3: memref<3x16x16xbf16, #tpu.memory_space<vmem>>, %arg4: memref<3x16x16xbf16, #tpu.memory_space<vmem>>, %arg5: memref<1x16xf32, #tpu.memory_space<vmem>>, %arg6: memref<4x16xbf16, #tpu.memory_space<vmem>>) attributes {dimension_semantics = [#tpu.dimension_semantics<arbitrary>], iteration_bounds = array<i64: 1>, scalar_prefetch = 0 : i64, scratch_operands = 0 : i64, tpu.core_type = #tpu.core_type<tc>, window_params = [{pipeline_mode = #tpu.pipeline_mode<synchronous>, transform_indices = @transform_0, window_bounds = array<i64: 4, 16>}, {pipeline_mode = #tpu.pipeline_mode<synchronous>, transform_indices = @transform_1, window_bounds = array<i64: 4, 16>}, {pipeline_mode = #tpu.pipeline_mode<synchronous>, transform_indices = @transform_2, window_bounds = array<i64: 3, 16, 16>}, {pipeline_mode = #tpu.pipeline_mode<synchronous>, transform_indices = @transform_3, window_bounds = array<i64: 3, 16, 16>}, {pipeline_mode = #tpu.pipeline_mode<synchronous>, transform_indices = @transform_4, window_bounds = array<i64: 1, 16>}, {pipeline_mode = #tpu.pipeline_mode<synchronous>, transform_indices = @transform_5, window_bounds = array<i64: 4, 16>}]} {
    %c0 = arith.constant 0 : index
    %c0_0 = arith.constant 0 : index
    %0 = vector.load %arg1[%c0, %c0_0] : memref<4x16xbf16, #tpu.memory_space<vmem>>, vector<4x16xbf16>
    %c0_1 = arith.constant 0 : index
    %c0_2 = arith.constant 0 : index
    %1 = vector.load %arg2[%c0_1, %c0_2] : memref<4x16xbf16, #tpu.memory_space<vmem>>, vector<4x16xbf16>
    %c0_3 = arith.constant 0 : index
    %c0_4 = arith.constant 0 : index
    %c0_5 = arith.constant 0 : index
    %2 = vector.load %arg3[%c0_3, %c0_4, %c0_5] : memref<3x16x16xbf16, #tpu.memory_space<vmem>>, vector<1x16x16xbf16>
    %3 = vector.shape_cast %2 : vector<1x16x16xbf16> to vector<16x16xbf16>
    %cst = arith.constant dense<0.000000e+00> : vector<4x16xf32>
    %4 = tpu.matmul %0, %3, %cst {dimension_numbers = #tpu.dot_dimension_numbers<[1], [0], [0], [1], [0, 0, 1, 1], [], []>} : vector<4x16xbf16>, vector<16x16xbf16>, vector<4x16xf32> -> vector<4x16xf32>
    %c1 = arith.constant 1 : index
    %c0_6 = arith.constant 0 : index
    %c0_7 = arith.constant 0 : index
    %5 = vector.load %arg3[%c1, %c0_6, %c0_7] : memref<3x16x16xbf16, #tpu.memory_space<vmem>>, vector<1x16x16xbf16>
    %6 = vector.shape_cast %5 : vector<1x16x16xbf16> to vector<16x16xbf16>
    %cst_8 = arith.constant dense<0.000000e+00> : vector<4x16xf32>
    %7 = tpu.matmul %0, %6, %cst_8 {dimension_numbers = #tpu.dot_dimension_numbers<[1], [0], [0], [1], [0, 0, 1, 1], [], []>} : vector<4x16xbf16>, vector<16x16xbf16>, vector<4x16xf32> -> vector<4x16xf32>
    %c2 = arith.constant 2 : index
    %c0_9 = arith.constant 0 : index
    %c0_10 = arith.constant 0 : index
    %8 = vector.load %arg3[%c2, %c0_9, %c0_10] : memref<3x16x16xbf16, #tpu.memory_space<vmem>>, vector<1x16x16xbf16>
    %9 = vector.shape_cast %8 : vector<1x16x16xbf16> to vector<16x16xbf16>
    %cst_11 = arith.constant dense<0.000000e+00> : vector<4x16xf32>
    %10 = tpu.matmul %0, %9, %cst_11 {dimension_numbers = #tpu.dot_dimension_numbers<[1], [0], [0], [1], [0, 0, 1, 1], [], []>} : vector<4x16xbf16>, vector<16x16xbf16>, vector<4x16xf32> -> vector<4x16xf32>
    %c0_12 = arith.constant 0 : index
    %c0_13 = arith.constant 0 : index
    %c0_14 = arith.constant 0 : index
    %11 = vector.load %arg4[%c0_12, %c0_13, %c0_14] : memref<3x16x16xbf16, #tpu.memory_space<vmem>>, vector<1x16x16xbf16>
    %12 = vector.shape_cast %11 : vector<1x16x16xbf16> to vector<16x16xbf16>
    %cst_15 = arith.constant dense<0.000000e+00> : vector<4x16xf32>
    %13 = tpu.matmul %1, %12, %cst_15 {dimension_numbers = #tpu.dot_dimension_numbers<[1], [0], [0], [1], [0, 0, 1, 1], [], []>} : vector<4x16xbf16>, vector<16x16xbf16>, vector<4x16xf32> -> vector<4x16xf32>
    %14 = arith.addf %4, %13 : vector<4x16xf32>
    %c1_16 = arith.constant 1 : index
    %c0_17 = arith.constant 0 : index
    %c0_18 = arith.constant 0 : index
    %15 = vector.load %arg4[%c1_16, %c0_17, %c0_18] : memref<3x16x16xbf16, #tpu.memory_space<vmem>>, vector<1x16x16xbf16>
    %16 = vector.shape_cast %15 : vector<1x16x16xbf16> to vector<16x16xbf16>
    %cst_19 = arith.constant dense<0.000000e+00> : vector<4x16xf32>
    %17 = tpu.matmul %1, %16, %cst_19 {dimension_numbers = #tpu.dot_dimension_numbers<[1], [0], [0], [1], [0, 0, 1, 1], [], []>} : vector<4x16xbf16>, vector<16x16xbf16>, vector<4x16xf32> -> vector<4x16xf32>
    %18 = arith.addf %7, %17 : vector<4x16xf32>
    %c2_20 = arith.constant 2 : index
    %c0_21 = arith.constant 0 : index
    %c0_22 = arith.constant 0 : index
    %19 = vector.load %arg4[%c2_20, %c0_21, %c0_22] : memref<3x16x16xbf16, #tpu.memory_space<vmem>>, vector<1x16x16xbf16>
    %20 = vector.shape_cast %19 : vector<1x16x16xbf16> to vector<16x16xbf16>
    %cst_23 = arith.constant dense<0.000000e+00> : vector<4x16xf32>
    %21 = tpu.matmul %1, %20, %cst_23 {dimension_numbers = #tpu.dot_dimension_numbers<[1], [0], [0], [1], [0, 0, 1, 1], [], []>} : vector<4x16xbf16>, vector<16x16xbf16>, vector<4x16xf32> -> vector<4x16xf32>
    %22 = arith.addf %10, %21 : vector<4x16xf32>
    %cst_24 = arith.constant 0.000000e+00 : f32
    %23 = vector.broadcast %cst_24 : f32 to vector<1x16xf32>
    %24 = vector.extract_strided_slice %14 {offsets = [0, 0], sizes = [2, 16], strides = [1, 1]} : vector<4x16xf32> to vector<2x16xf32>
    %25 = vector.extract_strided_slice %18 {offsets = [0, 0], sizes = [2, 16], strides = [1, 1]} : vector<4x16xf32> to vector<2x16xf32>
    %26 = vector.extract_strided_slice %22 {offsets = [0, 0], sizes = [2, 16], strides = [1, 1]} : vector<4x16xf32> to vector<2x16xf32>
    %27 = vector.extract_strided_slice %24 {offsets = [0, 0], sizes = [1, 16], strides = [1, 1]} : vector<2x16xf32> to vector<1x16xf32>
    %28 = tpu.concatenate %23, %27 in 0 : vector<1x16xf32>, vector<1x16xf32> -> vector<2x16xf32>
    %29 = arith.addf %25, %28 : vector<2x16xf32>
    %30 = vector.extract_strided_slice %26 {offsets = [1, 0], sizes = [1, 16], strides = [1, 1]} : vector<2x16xf32> to vector<1x16xf32>
    %31 = tpu.concatenate %30, %23 in 0 : vector<1x16xf32>, vector<1x16xf32> -> vector<2x16xf32>
    %32 = arith.addf %29, %31 : vector<2x16xf32>
    %33 = vector.extract_strided_slice %14 {offsets = [2, 0], sizes = [2, 16], strides = [1, 1]} : vector<4x16xf32> to vector<2x16xf32>
    %34 = vector.extract_strided_slice %18 {offsets = [2, 0], sizes = [2, 16], strides = [1, 1]} : vector<4x16xf32> to vector<2x16xf32>
    %35 = vector.extract_strided_slice %22 {offsets = [2, 0], sizes = [2, 16], strides = [1, 1]} : vector<4x16xf32> to vector<2x16xf32>
    %36 = vector.extract_strided_slice %33 {offsets = [0, 0], sizes = [1, 16], strides = [1, 1]} : vector<2x16xf32> to vector<1x16xf32>
    %37 = tpu.concatenate %23, %36 in 0 : vector<1x16xf32>, vector<1x16xf32> -> vector<2x16xf32>
    %38 = arith.addf %34, %37 : vector<2x16xf32>
    %39 = vector.extract_strided_slice %35 {offsets = [1, 0], sizes = [1, 16], strides = [1, 1]} : vector<2x16xf32> to vector<1x16xf32>
    %40 = tpu.concatenate %39, %23 in 0 : vector<1x16xf32>, vector<1x16xf32> -> vector<2x16xf32>
    %41 = arith.addf %38, %40 : vector<2x16xf32>
    %42 = tpu.concatenate %32, %41 in 0 : vector<2x16xf32>, vector<2x16xf32> -> vector<4x16xf32>
    %c0_25 = arith.constant 0 : index
    %c0_26 = arith.constant 0 : index
    %43 = vector.load %arg5[%c0_25, %c0_26] : memref<1x16xf32, #tpu.memory_space<vmem>>, vector<1x16xf32>
    %44 = vector.broadcast %43 : vector<1x16xf32> to vector<4x16xf32>
    %45 = arith.addf %42, %44 : vector<4x16xf32>
    %cst_27 = arith.constant 0.000000e+00 : f32
    %46 = vector.broadcast %cst_27 : f32 to vector<4x16xf32>
    %47 = arith.maximumf %45, %46 : vector<4x16xf32>
    %48 = arith.truncf %47 : vector<4x16xf32> to vector<4x16xbf16>
    %c0_28 = arith.constant 0 : index
    %c0_29 = arith.constant 0 : index
    %49 = vector.load %arg6[%c0_28, %c0_29] : memref<4x16xbf16, #tpu.memory_space<vmem>>, vector<4x16xbf16>
    tpu.vector_store %arg6[%c0_28, %c0_29], %48 {strides = array<i32>} : memref<4x16xbf16, #tpu.memory_space<vmem>>, vector<4x16xbf16>,
    return
  }
  func.func @transform_0(%arg0: i32) -> (i32, i32) {
    %c0_i32 = arith.constant 0 : i32
    %c0_i32_0 = arith.constant 0 : i32
    %c0_i32_1 = arith.constant 0 : i32
    return %c0_i32, %c0_i32_0 : i32, i32
  }
  func.func @transform_1(%arg0: i32) -> (i32, i32) {
    %c0_i32 = arith.constant 0 : i32
    %c0_i32_0 = arith.constant 0 : i32
    %c0_i32_1 = arith.constant 0 : i32
    return %c0_i32, %c0_i32_0 : i32, i32
  }
  func.func @transform_2(%arg0: i32) -> (i32, i32, i32) {
    %c0_i32 = arith.constant 0 : i32
    %c0_i32_0 = arith.constant 0 : i32
    %c0_i32_1 = arith.constant 0 : i32
    %c0_i32_2 = arith.constant 0 : i32
    return %c0_i32, %c0_i32_0, %c0_i32_1 : i32, i32, i32
  }
  func.func @transform_3(%arg0: i32) -> (i32, i32, i32) {
    %c0_i32 = arith.constant 0 : i32
    %c0_i32_0 = arith.constant 0 : i32
    %c0_i32_1 = arith.constant 0 : i32
    %c0_i32_2 = arith.constant 0 : i32
    return %c0_i32, %c0_i32_0, %c0_i32_1 : i32, i32, i32
  }
  func.func @transform_4(%arg0: i32) -> (i32, i32) {
    %c0_i32 = arith.constant 0 : i32
    %c0_i32_0 = arith.constant 0 : i32
    %c0_i32_1 = arith.constant 0 : i32
    return %c0_i32, %c0_i32_0 : i32, i32
  }
  func.func @transform_5(%arg0: i32) -> (i32, i32) {
    %c0_i32 = arith.constant 0 : i32
    %c0_i32_0 = arith.constant 0 : i32
    %c0_i32_1 = arith.constant 0 : i32
    return %c0_i32, %c0_i32_0 : i32, i32
  }
}

module attributes {stable_mosaic.version = 11 : i64} {
  func.func @_conv_kernel(%arg0: i32, %arg1: memref<8x32xbf16, #tpu.memory_space<vmem>>, %arg2: memref<8x32xbf16, #tpu.memory_space<vmem>>, %arg3: memref<3x32x32xbf16, #tpu.memory_space<vmem>>, %arg4: memref<3x32x32xbf16, #tpu.memory_space<vmem>>, %arg5: memref<1x32xf32, #tpu.memory_space<vmem>>, %arg6: memref<8x32xbf16, #tpu.memory_space<vmem>>) attributes {dimension_semantics = [#tpu.dimension_semantics<arbitrary>], iteration_bounds = array<i64: 1>, scalar_prefetch = 0 : i64, scratch_operands = 0 : i64, tpu.core_type = #tpu.core_type<tc>, window_params = [{pipeline_mode = #tpu.pipeline_mode<synchronous>, transform_indices = @transform_0, window_bounds = array<i64: 8, 32>}, {pipeline_mode = #tpu.pipeline_mode<synchronous>, transform_indices = @transform_1, window_bounds = array<i64: 8, 32>}, {pipeline_mode = #tpu.pipeline_mode<synchronous>, transform_indices = @transform_2, window_bounds = array<i64: 3, 32, 32>}, {pipeline_mode = #tpu.pipeline_mode<synchronous>, transform_indices = @transform_3, window_bounds = array<i64: 3, 32, 32>}, {pipeline_mode = #tpu.pipeline_mode<synchronous>, transform_indices = @transform_4, window_bounds = array<i64: 1, 32>}, {pipeline_mode = #tpu.pipeline_mode<synchronous>, transform_indices = @transform_5, window_bounds = array<i64: 8, 32>}]} {
    %c0 = arith.constant 0 : index
    %c0_0 = arith.constant 0 : index
    %0 = vector.load %arg1[%c0, %c0_0] : memref<8x32xbf16, #tpu.memory_space<vmem>>, vector<8x32xbf16>
    %c0_1 = arith.constant 0 : index
    %c0_2 = arith.constant 0 : index
    %1 = vector.load %arg2[%c0_1, %c0_2] : memref<8x32xbf16, #tpu.memory_space<vmem>>, vector<8x32xbf16>
    %c0_3 = arith.constant 0 : index
    %c0_4 = arith.constant 0 : index
    %c0_5 = arith.constant 0 : index
    %2 = vector.load %arg3[%c0_3, %c0_4, %c0_5] : memref<3x32x32xbf16, #tpu.memory_space<vmem>>, vector<1x32x32xbf16>
    %3 = vector.shape_cast %2 : vector<1x32x32xbf16> to vector<32x32xbf16>
    %cst = arith.constant dense<0.000000e+00> : vector<8x32xf32>
    %4 = tpu.matmul %0, %3, %cst {dimension_numbers = #tpu.dot_dimension_numbers<[1], [0], [0], [1], [0, 0, 1, 1], [], []>} : vector<8x32xbf16>, vector<32x32xbf16>, vector<8x32xf32> -> vector<8x32xf32>
    %c1 = arith.constant 1 : index
    %c0_6 = arith.constant 0 : index
    %c0_7 = arith.constant 0 : index
    %5 = vector.load %arg3[%c1, %c0_6, %c0_7] : memref<3x32x32xbf16, #tpu.memory_space<vmem>>, vector<1x32x32xbf16>
    %6 = vector.shape_cast %5 : vector<1x32x32xbf16> to vector<32x32xbf16>
    %cst_8 = arith.constant dense<0.000000e+00> : vector<8x32xf32>
    %7 = tpu.matmul %0, %6, %cst_8 {dimension_numbers = #tpu.dot_dimension_numbers<[1], [0], [0], [1], [0, 0, 1, 1], [], []>} : vector<8x32xbf16>, vector<32x32xbf16>, vector<8x32xf32> -> vector<8x32xf32>
    %c2 = arith.constant 2 : index
    %c0_9 = arith.constant 0 : index
    %c0_10 = arith.constant 0 : index
    %8 = vector.load %arg3[%c2, %c0_9, %c0_10] : memref<3x32x32xbf16, #tpu.memory_space<vmem>>, vector<1x32x32xbf16>
    %9 = vector.shape_cast %8 : vector<1x32x32xbf16> to vector<32x32xbf16>
    %cst_11 = arith.constant dense<0.000000e+00> : vector<8x32xf32>
    %10 = tpu.matmul %0, %9, %cst_11 {dimension_numbers = #tpu.dot_dimension_numbers<[1], [0], [0], [1], [0, 0, 1, 1], [], []>} : vector<8x32xbf16>, vector<32x32xbf16>, vector<8x32xf32> -> vector<8x32xf32>
    %c0_12 = arith.constant 0 : index
    %c0_13 = arith.constant 0 : index
    %c0_14 = arith.constant 0 : index
    %11 = vector.load %arg4[%c0_12, %c0_13, %c0_14] : memref<3x32x32xbf16, #tpu.memory_space<vmem>>, vector<1x32x32xbf16>
    %12 = vector.shape_cast %11 : vector<1x32x32xbf16> to vector<32x32xbf16>
    %cst_15 = arith.constant dense<0.000000e+00> : vector<8x32xf32>
    %13 = tpu.matmul %1, %12, %cst_15 {dimension_numbers = #tpu.dot_dimension_numbers<[1], [0], [0], [1], [0, 0, 1, 1], [], []>} : vector<8x32xbf16>, vector<32x32xbf16>, vector<8x32xf32> -> vector<8x32xf32>
    %14 = arith.addf %4, %13 : vector<8x32xf32>
    %c1_16 = arith.constant 1 : index
    %c0_17 = arith.constant 0 : index
    %c0_18 = arith.constant 0 : index
    %15 = vector.load %arg4[%c1_16, %c0_17, %c0_18] : memref<3x32x32xbf16, #tpu.memory_space<vmem>>, vector<1x32x32xbf16>
    %16 = vector.shape_cast %15 : vector<1x32x32xbf16> to vector<32x32xbf16>
    %cst_19 = arith.constant dense<0.000000e+00> : vector<8x32xf32>
    %17 = tpu.matmul %1, %16, %cst_19 {dimension_numbers = #tpu.dot_dimension_numbers<[1], [0], [0], [1], [0, 0, 1, 1], [], []>} : vector<8x32xbf16>, vector<32x32xbf16>, vector<8x32xf32> -> vector<8x32xf32>
    %18 = arith.addf %7, %17 : vector<8x32xf32>
    %c2_20 = arith.constant 2 : index
    %c0_21 = arith.constant 0 : index
    %c0_22 = arith.constant 0 : index
    %19 = vector.load %arg4[%c2_20, %c0_21, %c0_22] : memref<3x32x32xbf16, #tpu.memory_space<vmem>>, vector<1x32x32xbf16>
    %20 = vector.shape_cast %19 : vector<1x32x32xbf16> to vector<32x32xbf16>
    %cst_23 = arith.constant dense<0.000000e+00> : vector<8x32xf32>
    %21 = tpu.matmul %1, %20, %cst_23 {dimension_numbers = #tpu.dot_dimension_numbers<[1], [0], [0], [1], [0, 0, 1, 1], [], []>} : vector<8x32xbf16>, vector<32x32xbf16>, vector<8x32xf32> -> vector<8x32xf32>
    %22 = arith.addf %10, %21 : vector<8x32xf32>
    %cst_24 = arith.constant 0.000000e+00 : f32
    %23 = vector.broadcast %cst_24 : f32 to vector<1x32xf32>
    %24 = vector.extract_strided_slice %14 {offsets = [0, 0], sizes = [4, 32], strides = [1, 1]} : vector<8x32xf32> to vector<4x32xf32>
    %25 = vector.extract_strided_slice %18 {offsets = [0, 0], sizes = [4, 32], strides = [1, 1]} : vector<8x32xf32> to vector<4x32xf32>
    %26 = vector.extract_strided_slice %22 {offsets = [0, 0], sizes = [4, 32], strides = [1, 1]} : vector<8x32xf32> to vector<4x32xf32>
    %27 = vector.extract_strided_slice %24 {offsets = [0, 0], sizes = [3, 32], strides = [1, 1]} : vector<4x32xf32> to vector<3x32xf32>
    %28 = tpu.concatenate %23, %27 in 0 : vector<1x32xf32>, vector<3x32xf32> -> vector<4x32xf32>
    %29 = arith.addf %25, %28 : vector<4x32xf32>
    %30 = vector.extract_strided_slice %26 {offsets = [1, 0], sizes = [3, 32], strides = [1, 1]} : vector<4x32xf32> to vector<3x32xf32>
    %31 = tpu.concatenate %30, %23 in 0 : vector<3x32xf32>, vector<1x32xf32> -> vector<4x32xf32>
    %32 = arith.addf %29, %31 : vector<4x32xf32>
    %33 = vector.extract_strided_slice %14 {offsets = [4, 0], sizes = [4, 32], strides = [1, 1]} : vector<8x32xf32> to vector<4x32xf32>
    %34 = vector.extract_strided_slice %18 {offsets = [4, 0], sizes = [4, 32], strides = [1, 1]} : vector<8x32xf32> to vector<4x32xf32>
    %35 = vector.extract_strided_slice %22 {offsets = [4, 0], sizes = [4, 32], strides = [1, 1]} : vector<8x32xf32> to vector<4x32xf32>
    %36 = vector.extract_strided_slice %33 {offsets = [0, 0], sizes = [3, 32], strides = [1, 1]} : vector<4x32xf32> to vector<3x32xf32>
    %37 = tpu.concatenate %23, %36 in 0 : vector<1x32xf32>, vector<3x32xf32> -> vector<4x32xf32>
    %38 = arith.addf %34, %37 : vector<4x32xf32>
    %39 = vector.extract_strided_slice %35 {offsets = [1, 0], sizes = [3, 32], strides = [1, 1]} : vector<4x32xf32> to vector<3x32xf32>
    %40 = tpu.concatenate %39, %23 in 0 : vector<3x32xf32>, vector<1x32xf32> -> vector<4x32xf32>
    %41 = arith.addf %38, %40 : vector<4x32xf32>
    %42 = tpu.concatenate %32, %41 in 0 : vector<4x32xf32>, vector<4x32xf32> -> vector<8x32xf32>
    %c0_25 = arith.constant 0 : index
    %c0_26 = arith.constant 0 : index
    %43 = vector.load %arg5[%c0_25, %c0_26] : memref<1x32xf32, #tpu.memory_space<vmem>>, vector<1x32xf32>
    %44 = vector.broadcast %43 : vector<1x32xf32> to vector<8x32xf32>
    %45 = arith.addf %42, %44 : vector<8x32xf32>
    %cst_27 = arith.constant 0.000000e+00 : f32
    %46 = vector.broadcast %cst_27 : f32 to vector<8x32xf32>
    %47 = arith.maximumf %45, %46 : vector<8x32xf32>
    %48 = arith.truncf %47 : vector<8x32xf32> to vector<8x32xbf16>
    %c0_28 = arith.constant 0 : index
    %c0_29 = arith.constant 0 : index
    %49 = vector.load %arg6[%c0_28, %c0_29] : memref<8x32xbf16, #tpu.memory_space<vmem>>, vector<8x32xbf16>
    tpu.vector_store %arg6[%c0_28, %c0_29], %48 {strides = array<i32>} : memref<8x32xbf16, #tpu.memory_space<vmem>>, vector<8x32xbf16>,
    return
  }
  func.func @transform_0(%arg0: i32) -> (i32, i32) {
    %c0_i32 = arith.constant 0 : i32
    %c0_i32_0 = arith.constant 0 : i32
    %c0_i32_1 = arith.constant 0 : i32
    return %c0_i32, %c0_i32_0 : i32, i32
  }
  func.func @transform_1(%arg0: i32) -> (i32, i32) {
    %c0_i32 = arith.constant 0 : i32
    %c0_i32_0 = arith.constant 0 : i32
    %c0_i32_1 = arith.constant 0 : i32
    return %c0_i32, %c0_i32_0 : i32, i32
  }
  func.func @transform_2(%arg0: i32) -> (i32, i32, i32) {
    %c0_i32 = arith.constant 0 : i32
    %c0_i32_0 = arith.constant 0 : i32
    %c0_i32_1 = arith.constant 0 : i32
    %c0_i32_2 = arith.constant 0 : i32
    return %c0_i32, %c0_i32_0, %c0_i32_1 : i32, i32, i32
  }
  func.func @transform_3(%arg0: i32) -> (i32, i32, i32) {
    %c0_i32 = arith.constant 0 : i32
    %c0_i32_0 = arith.constant 0 : i32
    %c0_i32_1 = arith.constant 0 : i32
    %c0_i32_2 = arith.constant 0 : i32
    return %c0_i32, %c0_i32_0, %c0_i32_1 : i32, i32, i32
  }
  func.func @transform_4(%arg0: i32) -> (i32, i32) {
    %c0_i32 = arith.constant 0 : i32
    %c0_i32_0 = arith.constant 0 : i32
    %c0_i32_1 = arith.constant 0 : i32
    return %c0_i32, %c0_i32_0 : i32, i32
  }
  func.func @transform_5(%arg0: i32) -> (i32, i32) {
    %c0_i32 = arith.constant 0 : i32
    %c0_i32_0 = arith.constant 0 : i32
    %c0_i32_1 = arith.constant 0 : i32
    return %c0_i32, %c0_i32_0 : i32, i32
  }
}

module attributes {stable_mosaic.version = 11 : i64} {
  func.func @_conv_kernel(%arg0: i32, %arg1: memref<16x64xbf16, #tpu.memory_space<vmem>>, %arg2: memref<16x64xbf16, #tpu.memory_space<vmem>>, %arg3: memref<3x64x64xbf16, #tpu.memory_space<vmem>>, %arg4: memref<3x64x64xbf16, #tpu.memory_space<vmem>>, %arg5: memref<1x64xf32, #tpu.memory_space<vmem>>, %arg6: memref<16x64xbf16, #tpu.memory_space<vmem>>) attributes {dimension_semantics = [#tpu.dimension_semantics<arbitrary>], iteration_bounds = array<i64: 1>, scalar_prefetch = 0 : i64, scratch_operands = 0 : i64, tpu.core_type = #tpu.core_type<tc>, window_params = [{pipeline_mode = #tpu.pipeline_mode<synchronous>, transform_indices = @transform_0, window_bounds = array<i64: 16, 64>}, {pipeline_mode = #tpu.pipeline_mode<synchronous>, transform_indices = @transform_1, window_bounds = array<i64: 16, 64>}, {pipeline_mode = #tpu.pipeline_mode<synchronous>, transform_indices = @transform_2, window_bounds = array<i64: 3, 64, 64>}, {pipeline_mode = #tpu.pipeline_mode<synchronous>, transform_indices = @transform_3, window_bounds = array<i64: 3, 64, 64>}, {pipeline_mode = #tpu.pipeline_mode<synchronous>, transform_indices = @transform_4, window_bounds = array<i64: 1, 64>}, {pipeline_mode = #tpu.pipeline_mode<synchronous>, transform_indices = @transform_5, window_bounds = array<i64: 16, 64>}]} {
    %c0 = arith.constant 0 : index
    %c0_0 = arith.constant 0 : index
    %0 = vector.load %arg1[%c0, %c0_0] : memref<16x64xbf16, #tpu.memory_space<vmem>>, vector<16x64xbf16>
    %c0_1 = arith.constant 0 : index
    %c0_2 = arith.constant 0 : index
    %1 = vector.load %arg2[%c0_1, %c0_2] : memref<16x64xbf16, #tpu.memory_space<vmem>>, vector<16x64xbf16>
    %c0_3 = arith.constant 0 : index
    %c0_4 = arith.constant 0 : index
    %c0_5 = arith.constant 0 : index
    %2 = vector.load %arg3[%c0_3, %c0_4, %c0_5] : memref<3x64x64xbf16, #tpu.memory_space<vmem>>, vector<1x64x64xbf16>
    %3 = vector.shape_cast %2 : vector<1x64x64xbf16> to vector<64x64xbf16>
    %cst = arith.constant dense<0.000000e+00> : vector<16x64xf32>
    %4 = tpu.matmul %0, %3, %cst {dimension_numbers = #tpu.dot_dimension_numbers<[1], [0], [0], [1], [0, 0, 1, 1], [], []>} : vector<16x64xbf16>, vector<64x64xbf16>, vector<16x64xf32> -> vector<16x64xf32>
    %c1 = arith.constant 1 : index
    %c0_6 = arith.constant 0 : index
    %c0_7 = arith.constant 0 : index
    %5 = vector.load %arg3[%c1, %c0_6, %c0_7] : memref<3x64x64xbf16, #tpu.memory_space<vmem>>, vector<1x64x64xbf16>
    %6 = vector.shape_cast %5 : vector<1x64x64xbf16> to vector<64x64xbf16>
    %cst_8 = arith.constant dense<0.000000e+00> : vector<16x64xf32>
    %7 = tpu.matmul %0, %6, %cst_8 {dimension_numbers = #tpu.dot_dimension_numbers<[1], [0], [0], [1], [0, 0, 1, 1], [], []>} : vector<16x64xbf16>, vector<64x64xbf16>, vector<16x64xf32> -> vector<16x64xf32>
    %c2 = arith.constant 2 : index
    %c0_9 = arith.constant 0 : index
    %c0_10 = arith.constant 0 : index
    %8 = vector.load %arg3[%c2, %c0_9, %c0_10] : memref<3x64x64xbf16, #tpu.memory_space<vmem>>, vector<1x64x64xbf16>
    %9 = vector.shape_cast %8 : vector<1x64x64xbf16> to vector<64x64xbf16>
    %cst_11 = arith.constant dense<0.000000e+00> : vector<16x64xf32>
    %10 = tpu.matmul %0, %9, %cst_11 {dimension_numbers = #tpu.dot_dimension_numbers<[1], [0], [0], [1], [0, 0, 1, 1], [], []>} : vector<16x64xbf16>, vector<64x64xbf16>, vector<16x64xf32> -> vector<16x64xf32>
    %c0_12 = arith.constant 0 : index
    %c0_13 = arith.constant 0 : index
    %c0_14 = arith.constant 0 : index
    %11 = vector.load %arg4[%c0_12, %c0_13, %c0_14] : memref<3x64x64xbf16, #tpu.memory_space<vmem>>, vector<1x64x64xbf16>
    %12 = vector.shape_cast %11 : vector<1x64x64xbf16> to vector<64x64xbf16>
    %cst_15 = arith.constant dense<0.000000e+00> : vector<16x64xf32>
    %13 = tpu.matmul %1, %12, %cst_15 {dimension_numbers = #tpu.dot_dimension_numbers<[1], [0], [0], [1], [0, 0, 1, 1], [], []>} : vector<16x64xbf16>, vector<64x64xbf16>, vector<16x64xf32> -> vector<16x64xf32>
    %14 = arith.addf %4, %13 : vector<16x64xf32>
    %c1_16 = arith.constant 1 : index
    %c0_17 = arith.constant 0 : index
    %c0_18 = arith.constant 0 : index
    %15 = vector.load %arg4[%c1_16, %c0_17, %c0_18] : memref<3x64x64xbf16, #tpu.memory_space<vmem>>, vector<1x64x64xbf16>
    %16 = vector.shape_cast %15 : vector<1x64x64xbf16> to vector<64x64xbf16>
    %cst_19 = arith.constant dense<0.000000e+00> : vector<16x64xf32>
    %17 = tpu.matmul %1, %16, %cst_19 {dimension_numbers = #tpu.dot_dimension_numbers<[1], [0], [0], [1], [0, 0, 1, 1], [], []>} : vector<16x64xbf16>, vector<64x64xbf16>, vector<16x64xf32> -> vector<16x64xf32>
    %18 = arith.addf %7, %17 : vector<16x64xf32>
    %c2_20 = arith.constant 2 : index
    %c0_21 = arith.constant 0 : index
    %c0_22 = arith.constant 0 : index
    %19 = vector.load %arg4[%c2_20, %c0_21, %c0_22] : memref<3x64x64xbf16, #tpu.memory_space<vmem>>, vector<1x64x64xbf16>
    %20 = vector.shape_cast %19 : vector<1x64x64xbf16> to vector<64x64xbf16>
    %cst_23 = arith.constant dense<0.000000e+00> : vector<16x64xf32>
    %21 = tpu.matmul %1, %20, %cst_23 {dimension_numbers = #tpu.dot_dimension_numbers<[1], [0], [0], [1], [0, 0, 1, 1], [], []>} : vector<16x64xbf16>, vector<64x64xbf16>, vector<16x64xf32> -> vector<16x64xf32>
    %22 = arith.addf %10, %21 : vector<16x64xf32>
    %cst_24 = arith.constant 0.000000e+00 : f32
    %23 = vector.broadcast %cst_24 : f32 to vector<1x64xf32>
    %24 = vector.extract_strided_slice %14 {offsets = [0, 0], sizes = [8, 64], strides = [1, 1]} : vector<16x64xf32> to vector<8x64xf32>
    %25 = vector.extract_strided_slice %18 {offsets = [0, 0], sizes = [8, 64], strides = [1, 1]} : vector<16x64xf32> to vector<8x64xf32>
    %26 = vector.extract_strided_slice %22 {offsets = [0, 0], sizes = [8, 64], strides = [1, 1]} : vector<16x64xf32> to vector<8x64xf32>
    %27 = vector.extract_strided_slice %24 {offsets = [0, 0], sizes = [7, 64], strides = [1, 1]} : vector<8x64xf32> to vector<7x64xf32>
    %28 = tpu.concatenate %23, %27 in 0 : vector<1x64xf32>, vector<7x64xf32> -> vector<8x64xf32>
    %29 = arith.addf %25, %28 : vector<8x64xf32>
    %30 = vector.extract_strided_slice %26 {offsets = [1, 0], sizes = [7, 64], strides = [1, 1]} : vector<8x64xf32> to vector<7x64xf32>
    %31 = tpu.concatenate %30, %23 in 0 : vector<7x64xf32>, vector<1x64xf32> -> vector<8x64xf32>
    %32 = arith.addf %29, %31 : vector<8x64xf32>
    %33 = vector.extract_strided_slice %14 {offsets = [8, 0], sizes = [8, 64], strides = [1, 1]} : vector<16x64xf32> to vector<8x64xf32>
    %34 = vector.extract_strided_slice %18 {offsets = [8, 0], sizes = [8, 64], strides = [1, 1]} : vector<16x64xf32> to vector<8x64xf32>
    %35 = vector.extract_strided_slice %22 {offsets = [8, 0], sizes = [8, 64], strides = [1, 1]} : vector<16x64xf32> to vector<8x64xf32>
    %36 = vector.extract_strided_slice %33 {offsets = [0, 0], sizes = [7, 64], strides = [1, 1]} : vector<8x64xf32> to vector<7x64xf32>
    %37 = tpu.concatenate %23, %36 in 0 : vector<1x64xf32>, vector<7x64xf32> -> vector<8x64xf32>
    %38 = arith.addf %34, %37 : vector<8x64xf32>
    %39 = vector.extract_strided_slice %35 {offsets = [1, 0], sizes = [7, 64], strides = [1, 1]} : vector<8x64xf32> to vector<7x64xf32>
    %40 = tpu.concatenate %39, %23 in 0 : vector<7x64xf32>, vector<1x64xf32> -> vector<8x64xf32>
    %41 = arith.addf %38, %40 : vector<8x64xf32>
    %42 = tpu.concatenate %32, %41 in 0 : vector<8x64xf32>, vector<8x64xf32> -> vector<16x64xf32>
    %c0_25 = arith.constant 0 : index
    %c0_26 = arith.constant 0 : index
    %43 = vector.load %arg5[%c0_25, %c0_26] : memref<1x64xf32, #tpu.memory_space<vmem>>, vector<1x64xf32>
    %44 = vector.broadcast %43 : vector<1x64xf32> to vector<16x64xf32>
    %45 = arith.addf %42, %44 : vector<16x64xf32>
    %cst_27 = arith.constant 0.000000e+00 : f32
    %46 = vector.broadcast %cst_27 : f32 to vector<16x64xf32>
    %47 = arith.maximumf %45, %46 : vector<16x64xf32>
    %48 = arith.truncf %47 : vector<16x64xf32> to vector<16x64xbf16>
    %c0_28 = arith.constant 0 : index
    %c0_29 = arith.constant 0 : index
    %49 = vector.load %arg6[%c0_28, %c0_29] : memref<16x64xbf16, #tpu.memory_space<vmem>>, vector<16x64xbf16>
    tpu.vector_store %arg6[%c0_28, %c0_29], %48 {strides = array<i32>} : memref<16x64xbf16, #tpu.memory_space<vmem>>, vector<16x64xbf16>,
    return
  }
  func.func @transform_0(%arg0: i32) -> (i32, i32) {
    %c0_i32 = arith.constant 0 : i32
    %c0_i32_0 = arith.constant 0 : i32
    %c0_i32_1 = arith.constant 0 : i32
    return %c0_i32, %c0_i32_0 : i32, i32
  }
  func.func @transform_1(%arg0: i32) -> (i32, i32) {
    %c0_i32 = arith.constant 0 : i32
    %c0_i32_0 = arith.constant 0 : i32
    %c0_i32_1 = arith.constant 0 : i32
    return %c0_i32, %c0_i32_0 : i32, i32
  }
  func.func @transform_2(%arg0: i32) -> (i32, i32, i32) {
    %c0_i32 = arith.constant 0 : i32
    %c0_i32_0 = arith.constant 0 : i32
    %c0_i32_1 = arith.constant 0 : i32
    %c0_i32_2 = arith.constant 0 : i32
    return %c0_i32, %c0_i32_0, %c0_i32_1 : i32, i32, i32
  }
  func.func @transform_3(%arg0: i32) -> (i32, i32, i32) {
    %c0_i32 = arith.constant 0 : i32
    %c0_i32_0 = arith.constant 0 : i32
    %c0_i32_1 = arith.constant 0 : i32
    %c0_i32_2 = arith.constant 0 : i32
    return %c0_i32, %c0_i32_0, %c0_i32_1 : i32, i32, i32
  }
  func.func @transform_4(%arg0: i32) -> (i32, i32) {
    %c0_i32 = arith.constant 0 : i32
    %c0_i32_0 = arith.constant 0 : i32
    %c0_i32_1 = arith.constant 0 : i32
    return %c0_i32, %c0_i32_0 : i32, i32
  }
  func.func @transform_5(%arg0: i32) -> (i32, i32) {
    %c0_i32 = arith.constant 0 : i32
    %c0_i32_0 = arith.constant 0 : i32
    %c0_i32_1 = arith.constant 0 : i32
    return %c0_i32, %c0_i32_0 : i32, i32
  }
}

module attributes {stable_mosaic.version = 11 : i64} {
  func.func @_conv_kernel(%arg0: i32, %arg1: memref<32x128xbf16, #tpu.memory_space<vmem>>, %arg2: memref<32x128xbf16, #tpu.memory_space<vmem>>, %arg3: memref<32x64xbf16, #tpu.memory_space<vmem>>, %arg4: memref<3x256x64xbf16, #tpu.memory_space<vmem>>, %arg5: memref<1x64xf32, #tpu.memory_space<vmem>>, %arg6: memref<32x64xbf16, #tpu.memory_space<vmem>>) attributes {dimension_semantics = [#tpu.dimension_semantics<arbitrary>], iteration_bounds = array<i64: 1>, scalar_prefetch = 0 : i64, scratch_operands = 0 : i64, tpu.core_type = #tpu.core_type<tc>, window_params = [{pipeline_mode = #tpu.pipeline_mode<synchronous>, transform_indices = @transform_0, window_bounds = array<i64: 32, 128>}, {pipeline_mode = #tpu.pipeline_mode<synchronous>, transform_indices = @transform_1, window_bounds = array<i64: 32, 128>}, {pipeline_mode = #tpu.pipeline_mode<synchronous>, transform_indices = @transform_2, window_bounds = array<i64: 32, 64>}, {pipeline_mode = #tpu.pipeline_mode<synchronous>, transform_indices = @transform_3, window_bounds = array<i64: 3, 256, 64>}, {pipeline_mode = #tpu.pipeline_mode<synchronous>, transform_indices = @transform_4, window_bounds = array<i64: 1, 64>}, {pipeline_mode = #tpu.pipeline_mode<synchronous>, transform_indices = @transform_5, window_bounds = array<i64: 32, 64>}]} {
    %c0 = arith.constant 0 : index
    %c0_0 = arith.constant 0 : index
    %0 = vector.load %arg1[%c0, %c0_0] : memref<32x128xbf16, #tpu.memory_space<vmem>>, vector<32x128xbf16>
    %c0_1 = arith.constant 0 : index
    %c0_2 = arith.constant 0 : index
    %1 = vector.load %arg2[%c0_1, %c0_2] : memref<32x128xbf16, #tpu.memory_space<vmem>>, vector<32x128xbf16>
    %2 = tpu.concatenate %0, %1 in 1 : vector<32x128xbf16>, vector<32x128xbf16> -> vector<32x256xbf16>
    %c0_3 = arith.constant 0 : index
    %c0_4 = arith.constant 0 : index
    %c0_5 = arith.constant 0 : index
    %3 = vector.load %arg4[%c0_3, %c0_4, %c0_5] : memref<3x256x64xbf16, #tpu.memory_space<vmem>>, vector<1x256x64xbf16>
    %4 = vector.shape_cast %3 : vector<1x256x64xbf16> to vector<256x64xbf16>
    %cst = arith.constant dense<0.000000e+00> : vector<32x64xf32>
    %5 = tpu.matmul %2, %4, %cst {dimension_numbers = #tpu.dot_dimension_numbers<[1], [0], [0], [1], [0, 0, 1, 1], [], []>} : vector<32x256xbf16>, vector<256x64xbf16>, vector<32x64xf32> -> vector<32x64xf32>
    %c1 = arith.constant 1 : index
    %c0_6 = arith.constant 0 : index
    %c0_7 = arith.constant 0 : index
    %6 = vector.load %arg4[%c1, %c0_6, %c0_7] : memref<3x256x64xbf16, #tpu.memory_space<vmem>>, vector<1x256x64xbf16>
    %7 = vector.shape_cast %6 : vector<1x256x64xbf16> to vector<256x64xbf16>
    %cst_8 = arith.constant dense<0.000000e+00> : vector<32x64xf32>
    %8 = tpu.matmul %2, %7, %cst_8 {dimension_numbers = #tpu.dot_dimension_numbers<[1], [0], [0], [1], [0, 0, 1, 1], [], []>} : vector<32x256xbf16>, vector<256x64xbf16>, vector<32x64xf32> -> vector<32x64xf32>
    %c2 = arith.constant 2 : index
    %c0_9 = arith.constant 0 : index
    %c0_10 = arith.constant 0 : index
    %9 = vector.load %arg4[%c2, %c0_9, %c0_10] : memref<3x256x64xbf16, #tpu.memory_space<vmem>>, vector<1x256x64xbf16>
    %10 = vector.shape_cast %9 : vector<1x256x64xbf16> to vector<256x64xbf16>
    %cst_11 = arith.constant dense<0.000000e+00> : vector<32x64xf32>
    %11 = tpu.matmul %2, %10, %cst_11 {dimension_numbers = #tpu.dot_dimension_numbers<[1], [0], [0], [1], [0, 0, 1, 1], [], []>} : vector<32x256xbf16>, vector<256x64xbf16>, vector<32x64xf32> -> vector<32x64xf32>
    %cst_12 = arith.constant 0.000000e+00 : f32
    %12 = vector.broadcast %cst_12 : f32 to vector<1x64xf32>
    %13 = vector.extract_strided_slice %5 {offsets = [0, 0], sizes = [16, 64], strides = [1, 1]} : vector<32x64xf32> to vector<16x64xf32>
    %14 = vector.extract_strided_slice %8 {offsets = [0, 0], sizes = [16, 64], strides = [1, 1]} : vector<32x64xf32> to vector<16x64xf32>
    %15 = vector.extract_strided_slice %11 {offsets = [0, 0], sizes = [16, 64], strides = [1, 1]} : vector<32x64xf32> to vector<16x64xf32>
    %16 = vector.extract_strided_slice %13 {offsets = [0, 0], sizes = [15, 64], strides = [1, 1]} : vector<16x64xf32> to vector<15x64xf32>
    %17 = tpu.concatenate %12, %16 in 0 : vector<1x64xf32>, vector<15x64xf32> -> vector<16x64xf32>
    %18 = arith.addf %14, %17 : vector<16x64xf32>
    %19 = vector.extract_strided_slice %15 {offsets = [1, 0], sizes = [15, 64], strides = [1, 1]} : vector<16x64xf32> to vector<15x64xf32>
    %20 = tpu.concatenate %19, %12 in 0 : vector<15x64xf32>, vector<1x64xf32> -> vector<16x64xf32>
    %21 = arith.addf %18, %20 : vector<16x64xf32>
    %22 = vector.extract_strided_slice %5 {offsets = [16, 0], sizes = [16, 64], strides = [1, 1]} : vector<32x64xf32> to vector<16x64xf32>
    %23 = vector.extract_strided_slice %8 {offsets = [16, 0], sizes = [16, 64], strides = [1, 1]} : vector<32x64xf32> to vector<16x64xf32>
    %24 = vector.extract_strided_slice %11 {offsets = [16, 0], sizes = [16, 64], strides = [1, 1]} : vector<32x64xf32> to vector<16x64xf32>
    %25 = vector.extract_strided_slice %22 {offsets = [0, 0], sizes = [15, 64], strides = [1, 1]} : vector<16x64xf32> to vector<15x64xf32>
    %26 = tpu.concatenate %12, %25 in 0 : vector<1x64xf32>, vector<15x64xf32> -> vector<16x64xf32>
    %27 = arith.addf %23, %26 : vector<16x64xf32>
    %28 = vector.extract_strided_slice %24 {offsets = [1, 0], sizes = [15, 64], strides = [1, 1]} : vector<16x64xf32> to vector<15x64xf32>
    %29 = tpu.concatenate %28, %12 in 0 : vector<15x64xf32>, vector<1x64xf32> -> vector<16x64xf32>
    %30 = arith.addf %27, %29 : vector<16x64xf32>
    %31 = tpu.concatenate %21, %30 in 0 : vector<16x64xf32>, vector<16x64xf32> -> vector<32x64xf32>
    %c0_13 = arith.constant 0 : index
    %c0_14 = arith.constant 0 : index
    %32 = vector.load %arg5[%c0_13, %c0_14] : memref<1x64xf32, #tpu.memory_space<vmem>>, vector<1x64xf32>
    %33 = vector.broadcast %32 : vector<1x64xf32> to vector<32x64xf32>
    %34 = arith.addf %31, %33 : vector<32x64xf32>
    %cst_15 = arith.constant 0.000000e+00 : f32
    %35 = vector.broadcast %cst_15 : f32 to vector<32x64xf32>
    %36 = arith.maximumf %34, %35 : vector<32x64xf32>
    %c0_16 = arith.constant 0 : index
    %c0_17 = arith.constant 0 : index
    %37 = vector.load %arg3[%c0_16, %c0_17] : memref<32x64xbf16, #tpu.memory_space<vmem>>, vector<32x64xbf16>
    %38 = arith.extf %37 : vector<32x64xbf16> to vector<32x64xf32>
    %39 = arith.addf %36, %38 : vector<32x64xf32>
    %40 = arith.truncf %39 : vector<32x64xf32> to vector<32x64xbf16>
    %c0_18 = arith.constant 0 : index
    %c0_19 = arith.constant 0 : index
    %41 = vector.load %arg6[%c0_18, %c0_19] : memref<32x64xbf16, #tpu.memory_space<vmem>>, vector<32x64xbf16>
    tpu.vector_store %arg6[%c0_18, %c0_19], %40 {strides = array<i32>} : memref<32x64xbf16, #tpu.memory_space<vmem>>, vector<32x64xbf16>,
    return
  }
  func.func @transform_0(%arg0: i32) -> (i32, i32) {
    %c0_i32 = arith.constant 0 : i32
    %c0_i32_0 = arith.constant 0 : i32
    %c0_i32_1 = arith.constant 0 : i32
    return %c0_i32, %c0_i32_0 : i32, i32
  }
  func.func @transform_1(%arg0: i32) -> (i32, i32) {
    %c0_i32 = arith.constant 0 : i32
    %c0_i32_0 = arith.constant 0 : i32
    %c0_i32_1 = arith.constant 0 : i32
    return %c0_i32, %c0_i32_0 : i32, i32
  }
  func.func @transform_2(%arg0: i32) -> (i32, i32) {
    %c0_i32 = arith.constant 0 : i32
    %c0_i32_0 = arith.constant 0 : i32
    %c0_i32_1 = arith.constant 0 : i32
    return %c0_i32, %c0_i32_0 : i32, i32
  }
  func.func @transform_3(%arg0: i32) -> (i32, i32, i32) {
    %c0_i32 = arith.constant 0 : i32
    %c0_i32_0 = arith.constant 0 : i32
    %c0_i32_1 = arith.constant 0 : i32
    %c0_i32_2 = arith.constant 0 : i32
    return %c0_i32, %c0_i32_0, %c0_i32_1 : i32, i32, i32
  }
  func.func @transform_4(%arg0: i32) -> (i32, i32) {
    %c0_i32 = arith.constant 0 : i32
    %c0_i32_0 = arith.constant 0 : i32
    %c0_i32_1 = arith.constant 0 : i32
    return %c0_i32, %c0_i32_0 : i32, i32
  }
  func.func @transform_5(%arg0: i32) -> (i32, i32) {
    %c0_i32 = arith.constant 0 : i32
    %c0_i32_0 = arith.constant 0 : i32
    %c0_i32_1 = arith.constant 0 : i32
    return %c0_i32, %c0_i32_0 : i32, i32
  }
}

</mosaic_0001>

<llo_original>
// kernel: _lambda_.10
$region0: #{_lambda_.10}
  #allocation0 [shape = 'u32[]', space=smem, size = 0x4, offset = 0x4, fixed_abs, tag = 'smem constant byte address 0x4 - core index']
  #allocation1 [shape = 'u32[72,128]{1,0:T(1,128)}', space=vmem, size = 0x9000, scoped, tag = 'internal scratch']
  %s0 = inlined_call_operand.vmem [shape: bf16[32,64], index: 0, kind: input, shape index: {}]
  %s1 = inlined_call_operand.vmem [shape: bf16[3,64,64], index: 1, kind: input, shape index: {}]
  %s2 = inlined_call_operand.vmem [shape: f32[1,64], index: 2, kind: input, shape index: {}]
  %s3 = inlined_call_operand.vmem [shape: bf16[32,64], index: 3, kind: output, shape index: {}]
  %s4 = sld [smem:[#allocation0]]
  $region22: #{_lambda_.10} parent=0
    _
  %s6 = ssub.s32 1, %s4
  %s7 = scalar_select 0, %s6, %s4
  // Predicated region
  $region2: #{_lambda_.10} parent=0 // pred_check
    _
  $region3: #{_lambda_.10} parent=0 // pred_check_branch
    %9 = sbr.rel (0) target = $region5
  $region4: #{_lambda_.10} parent=0 // pred_region
    _
  $region5: #{_lambda_.10} parent=0 // pred_fallthru
    _
  // Predicated region
  $region6: #{_lambda_.10} parent=0 // pred_check
    _
  $region7: #{_lambda_.10} parent=0 // pred_check_branch
    %11 = sbr.rel (0) target = $region9
  $region8: #{_lambda_.10} parent=0 // pred_region
    _
  $region9: #{_lambda_.10} parent=0 // pred_fallthru
    _
  // Predicated region
  $region10: #{_lambda_.10} parent=0 // pred_check
    _
  $region11: #{_lambda_.10} parent=0 // pred_check_branch
    %13 = sbr.rel (0) target = $region13
  $region12: #{_lambda_.10} parent=0 // pred_region
    _
  $region13: #{_lambda_.10} parent=0 // pred_fallthru
    _
  %v15 = vld [vmem:[%s0] sm:$0xf]
  %v16 = vld [vmem:[%s0 + $0x4] sm:$0xf]
  %v17 = vld [vmem:[%s0 + $0x8] sm:$0xf]
  %v18 = vld [vmem:[%s0 + $0xc] sm:$0xf]
  %v19 = vld [vmem:[%s1] sm:$0xf]
  %v20 = vld [vmem:[%s1 + $0x4] sm:$0xf]
  %v21 = vld [vmem:[%s1 + $0x8] sm:$0xf]
  %v22 = vld [vmem:[%s1 + $0xc] sm:$0xf]
  %v23 = vld [vmem:[%s1 + $0x10] sm:$0xf]
  %v24 = vld [vmem:[%s1 + $0x14] sm:$0xf]
  %v25 = vld [vmem:[%s1 + $0x18] sm:$0xf]
  %v26 = vld [vmem:[%s1 + $0x1c] sm:$0xf]
  %v31 = vunpack.c.l.b16 %v15
  %v32 = vunpack.c.l.b16 %v16
  %v33 = vunpack.c.l.b16 %v17
  %v34 = vunpack.c.l.b16 %v18
  %v35 = vpack.c.b16 %v32, %v31
  %v36 = vpack.c.b16 %v34, %v33
  %v45 = vunpack.c.l.b16 %v19
  %v46 = vunpack.c.l.b16 %v20
  %v47 = vunpack.c.l.b16 %v21
  %v48 = vunpack.c.l.b16 %v22
  %v49 = vunpack.c.l.b16 %v23
  %v50 = vunpack.c.l.b16 %v24
  %v51 = vunpack.c.l.b16 %v25
  %v52 = vunpack.c.l.b16 %v26
  %v53 = vpack.c.b16 %v46, %v45
  %v54 = vpack.c.b16 %v48, %v47
  %v55 = vpack.c.b16 %v50, %v49
  %v56 = vpack.c.b16 %v52, %v51
  %vm61 = vcmask 523264
  %v63 = vsel %vm61, %v35, 0
  %v66 = vsel %vm61, %v36, 0
  %68 = vmatpush.bf16.msra.mxu0 0
  %69 = vmatpush.bf16.msra.mxu0 0
  %70 = vmatpush.bf16.msra.mxu0 0
  %71 = vmatpush.bf16.msra.mxu0 0
  %72 = vmatpush.bf16.msra.mxu0 %v56
  %73 = vmatpush.bf16.msra.mxu0 %v55
  %74 = vmatpush.bf16.msra.mxu0 %v54
  %75 = vmatpush.bf16.msra.mxu0 %v53
  %76 = vmatmul.bf16.gmra.mxu0 %v63
  %v77 = vpop.f32.mrf.mxu0
  %v78 = vadd.f32 0.0, %v77
  %v79 = vpop.f32.mrf.mxu0
  %v80 = vadd.f32 0.0, %v79
  %81 = vmatmul.bf16.gmra.mxu0 %v66
  %v82 = vpop.f32.mrf.mxu0
  %v83 = vadd.f32 0.0, %v82
  %v84 = vpop.f32.mrf.mxu0
  %v85 = vadd.f32 0.0, %v84
  %86 = vdwg.mxu0
  %s87 = scalar_lea.vmem %s1, 32
  %v88 = vld [vmem:[%s87] sm:$0xf]
  %v89 = vld [vmem:[%s87 + $0x4] sm:$0xf]
  %v90 = vld [vmem:[%s87 + $0x8] sm:$0xf]
  %v91 = vld [vmem:[%s87 + $0xc] sm:$0xf]
  %v92 = vld [vmem:[%s87 + $0x10] sm:$0xf]
  %v93 = vld [vmem:[%s87 + $0x14] sm:$0xf]
  %v94 = vld [vmem:[%s87 + $0x18] sm:$0xf]
  %v95 = vld [vmem:[%s87 + $0x1c] sm:$0xf]
  %v104 = vunpack.c.l.b16 %v88
  %v105 = vunpack.c.l.b16 %v89
  %v106 = vunpack.c.l.b16 %v90
  %v107 = vunpack.c.l.b16 %v91
  %v108 = vunpack.c.l.b16 %v92
  %v109 = vunpack.c.l.b16 %v93
  %v110 = vunpack.c.l.b16 %v94
  %v111 = vunpack.c.l.b16 %v95
  %v112 = vpack.c.b16 %v105, %v104
  %v113 = vpack.c.b16 %v107, %v106
  %v114 = vpack.c.b16 %v109, %v108
  %v115 = vpack.c.b16 %v111, %v110
  %120 = vmatpush.bf16.msra.mxu0 0
  %121 = vmatpush.bf16.msra.mxu0 0
  %122 = vmatpush.bf16.msra.mxu0 0
  %123 = vmatpush.bf16.msra.mxu0 0
  %124 = vmatpush.bf16.msra.mxu0 %v115
  %125 = vmatpush.bf16.msra.mxu0 %v114
  %126 = vmatpush.bf16.msra.mxu0 %v113
  %127 = vmatpush.bf16.msra.mxu0 %v112
  %128 = vmatmul.bf16.gmra.mxu0 %v63
  %v129 = vpop.f32.mrf.mxu0
  %v130 = vadd.f32 0.0, %v129
  %v131 = vpop.f32.mrf.mxu0
  %v132 = vadd.f32 0.0, %v131
  %133 = vmatmul.bf16.gmra.mxu0 %v66
  %v134 = vpop.f32.mrf.mxu0
  %v135 = vadd.f32 0.0, %v134
  %v136 = vpop.f32.mrf.mxu0
  %v137 = vadd.f32 0.0, %v136
  %138 = vdwg.mxu0
  %s139 = scalar_lea.vmem %s1, 64
  %v140 = vld [vmem:[%s139] sm:$0xf]
  %v141 = vld [vmem:[%s139 + $0x4] sm:$0xf]
  %v142 = vld [vmem:[%s139 + $0x8] sm:$0xf]
  %v143 = vld [vmem:[%s139 + $0xc] sm:$0xf]
  %v144 = vld [vmem:[%s139 + $0x10] sm:$0xf]
  %v145 = vld [vmem:[%s139 + $0x14] sm:$0xf]
  %v146 = vld [vmem:[%s139 + $0x18] sm:$0xf]
  %v147 = vld [vmem:[%s139 + $0x1c] sm:$0xf]
  %v156 = vunpack.c.l.b16 %v140
  %v157 = vunpack.c.l.b16 %v141
  %v158 = vunpack.c.l.b16 %v142
  %v159 = vunpack.c.l.b16 %v143
  %v160 = vunpack.c.l.b16 %v144
  %v161 = vunpack.c.l.b16 %v145
  %v162 = vunpack.c.l.b16 %v146
  %v163 = vunpack.c.l.b16 %v147
  %v164 = vpack.c.b16 %v157, %v156
  %v165 = vpack.c.b16 %v159, %v158
  %v166 = vpack.c.b16 %v161, %v160
  %v167 = vpack.c.b16 %v163, %v162
  %172 = vmatpush.bf16.msra.mxu0 0
  %173 = vmatpush.bf16.msra.mxu0 0
  %174 = vmatpush.bf16.msra.mxu0 0
  %175 = vmatpush.bf16.msra.mxu0 0
  %176 = vmatpush.bf16.msra.mxu0 %v167
  %177 = vmatpush.bf16.msra.mxu0 %v166
  %178 = vmatpush.bf16.msra.mxu0 %v165
  %179 = vmatpush.bf16.msra.mxu0 %v164
  %180 = vmatmul.bf16.gmra.mxu0 %v63
  %v181 = vpop.f32.mrf.mxu0
  %v182 = vadd.f32 0.0, %v181
  %v183 = vpop.f32.mrf.mxu0
  %v184 = vadd.f32 0.0, %v183
  %185 = vmatmul.bf16.gmra.mxu0 %v66
  %v186 = vpop.f32.mrf.mxu0
  %v187 = vadd.f32 0.0, %v186
  %v188 = vpop.f32.mrf.mxu0
  %v189 = vadd.f32 0.0, %v188
  %190 = vdwg.mxu0
  %vm193 = vcmask 1040384
  %v194 = vrot.slane %v78, 7
  %v195 = vrot.slane %v80, 7
  %v196 = vsel %vm193, %v194, %v195
  %v199 = vsel %vm193, 0.0, %v194
  %v200 = vadd.f32 %v130, %v199
  %v201 = vadd.f32 %v132, %v196
  %vm204 = vcmask 1046528
  %v205 = vrot.slane %v182, 1
  %v206 = vrot.slane %v184, 1
  %v207 = vsel %vm204, %v205, %v206
  %v210 = vsel %vm204, %v206, 0.0
  %v211 = vadd.f32 %v200, %v207
  %v212 = vadd.f32 %v201, %v210
  %v215 = vrot.slane %v83, 7
  %v216 = vrot.slane %v85, 7
  %v217 = vsel %vm193, %v215, %v216
  %v220 = vsel %vm193, 0.0, %v215
  %v221 = vadd.f32 %v135, %v220
  %v222 = vadd.f32 %v137, %v217
  %v225 = vrot.slane %v187, 1
  %v226 = vrot.slane %v189, 1
  %v227 = vsel %vm204, %v225, %v226
  %v230 = vsel %vm204, %v226, 0.0
  %v231 = vadd.f32 %v221, %v227
  %v232 = vadd.f32 %v222, %v230
  %v233 = vld [vmem:[%s2] sm:$0x1]
  %v235 = vperm.slane %v233, 0
  %v237 = vadd.f32 %v211, %v235
  %v238 = vadd.f32 %v212, %v235
  %v239 = vadd.f32 %v231, %v235
  %v240 = vadd.f32 %v232, %v235
  %v241 = vmax.f32 %v237, 0.0
  %v242 = vmax.f32 %v238, 0.0
  %v243 = vmax.f32 %v239, 0.0
  %v244 = vmax.f32 %v240, 0.0
  %v245 = vpack.c.bf16 %v241, %v241
  %v246 = vpack.c.bf16 %v242, %v242
  %v247 = vpack.c.bf16 %v243, %v243
  %v248 = vpack.c.bf16 %v244, %v244
  %vm249 = vcmask 519168
  %250 = vst.msk [vmem:[%s3] sm:$0xf] %vm249, %v245
  %251 = vst.msk [vmem:[%s3 + $0x4] sm:$0xf] %vm249, %v246
  %252 = vst.msk [vmem:[%s3 + $0x8] sm:$0xf] %vm249, %v247
  %253 = vst.msk [vmem:[%s3 + $0xc] sm:$0xf] %vm249, %v248
  // Predicated region
  $region14: #{_lambda_.10} parent=0 // pred_check
    _
  $region15: #{_lambda_.10} parent=0 // pred_check_branch
    %255 = sbr.rel (0) target = $region17
  $region16: #{_lambda_.10} parent=0 // pred_region
    _
  $region17: #{_lambda_.10} parent=0 // pred_fallthru
    _
  // Predicated region
  $region18: #{_lambda_.10} parent=0 // pred_check
    _
  $region19: #{_lambda_.10} parent=0 // pred_check_branch
    %257 = sbr.rel (0) target = $region21
  $region20: #{_lambda_.10} parent=0 // pred_region
    _
  $region21: #{_lambda_.10} parent=0 // pred_fallthru
    _

// kernel: _lambda_.11
$region0: #{_lambda_.11}
  #allocation0 [shape = 'u32[]', space=smem, size = 0x4, offset = 0x4, fixed_abs, tag = 'smem constant byte address 0x4 - core index']
  #allocation1 [shape = 'u32[72,128]{1,0:T(1,128)}', space=vmem, size = 0x9000, scoped, tag = 'internal scratch']
  %s0 = inlined_call_operand.vmem [shape: bf16[32,64], index: 0, kind: input, shape index: {}]
  %s1 = inlined_call_operand.vmem [shape: bf16[3,64,128], index: 1, kind: input, shape index: {}]
  %s2 = inlined_call_operand.vmem [shape: f32[1,128], index: 2, kind: input, shape index: {}]
  %s3 = inlined_call_operand.vmem [shape: bf16[32,128], index: 3, kind: output, shape index: {}]
  %s4 = sld [smem:[#allocation0]]
  $region22: #{_lambda_.11} parent=0
    _
  %s6 = ssub.s32 1, %s4
  %s7 = scalar_select 0, %s6, %s4
  // Predicated region
  $region2: #{_lambda_.11} parent=0 // pred_check
    _
  $region3: #{_lambda_.11} parent=0 // pred_check_branch
    %9 = sbr.rel (0) target = $region5
  $region4: #{_lambda_.11} parent=0 // pred_region
    _
  $region5: #{_lambda_.11} parent=0 // pred_fallthru
    _
  // Predicated region
  $region6: #{_lambda_.11} parent=0 // pred_check
    _
  $region7: #{_lambda_.11} parent=0 // pred_check_branch
    %11 = sbr.rel (0) target = $region9
  $region8: #{_lambda_.11} parent=0 // pred_region
    _
  $region9: #{_lambda_.11} parent=0 // pred_fallthru
    _
  // Predicated region
  $region10: #{_lambda_.11} parent=0 // pred_check
    _
  $region11: #{_lambda_.11} parent=0 // pred_check_branch
    %13 = sbr.rel (0) target = $region13
  $region12: #{_lambda_.11} parent=0 // pred_region
    _
  $region13: #{_lambda_.11} parent=0 // pred_fallthru
    _
  %v15 = vld [vmem:[%s0] sm:$0xf]
  %v16 = vld [vmem:[%s0 + $0x4] sm:$0xf]
  %v17 = vld [vmem:[%s0 + $0x8] sm:$0xf]
  %v18 = vld [vmem:[%s0 + $0xc] sm:$0xf]
  %v19 = vld [vmem:[%s1] sm:$0xf]
  %v20 = vld [vmem:[%s1 + $0x4] sm:$0xf]
  %v21 = vld [vmem:[%s1 + $0x8] sm:$0xf]
  %v22 = vld [vmem:[%s1 + $0xc] sm:$0xf]
  %v23 = vld [vmem:[%s1 + $0x10] sm:$0xf]
  %v24 = vld [vmem:[%s1 + $0x14] sm:$0xf]
  %v25 = vld [vmem:[%s1 + $0x18] sm:$0xf]
  %v26 = vld [vmem:[%s1 + $0x1c] sm:$0xf]
  %v31 = vunpack.c.l.b16 %v15
  %v32 = vunpack.c.l.b16 %v16
  %v33 = vunpack.c.l.b16 %v17
  %v34 = vunpack.c.l.b16 %v18
  %v35 = vpack.c.b16 %v32, %v31
  %v36 = vpack.c.b16 %v34, %v33
  %v45 = vunpack.c.l.b16 %v19
  %v46 = vunpack.c.l.b16 %v20
  %v47 = vunpack.c.l.b16 %v21
  %v48 = vunpack.c.l.b16 %v22
  %v49 = vunpack.c.l.b16 %v23
  %v50 = vunpack.c.l.b16 %v24
  %v51 = vunpack.c.l.b16 %v25
  %v52 = vunpack.c.l.b16 %v26
  %v53 = vpack.c.b16 %v46, %v45
  %v54 = vpack.c.b16 %v48, %v47
  %v55 = vpack.c.b16 %v50, %v49
  %v56 = vpack.c.b16 %v52, %v51
  %vm61 = vcmask 523264
  %v63 = vsel %vm61, %v35, 0
  %v66 = vsel %vm61, %v36, 0
  %68 = vmatpush.bf16.msra.mxu0 0
  %69 = vmatpush.bf16.msra.mxu0 0
  %70 = vmatpush.bf16.msra.mxu0 0
  %71 = vmatpush.bf16.msra.mxu0 0
  %72 = vmatpush.bf16.msra.mxu0 %v56
  %73 = vmatpush.bf16.msra.mxu0 %v55
  %74 = vmatpush.bf16.msra.mxu0 %v54
  %75 = vmatpush.bf16.msra.mxu0 %v53
  %76 = vmatmul.bf16.gmra.mxu0 %v63
  %v77 = vpop.f32.mrf.mxu0
  %v78 = vadd.f32 0.0, %v77
  %v79 = vpop.f32.mrf.mxu0
  %v80 = vadd.f32 0.0, %v79
  %81 = vmatmul.bf16.gmra.mxu0 %v66
  %v82 = vpop.f32.mrf.mxu0
  %v83 = vadd.f32 0.0, %v82
  %v84 = vpop.f32.mrf.mxu0
  %v85 = vadd.f32 0.0, %v84
  %86 = vdwg.mxu0
  %s87 = scalar_lea.vmem %s1, 32
  %v88 = vld [vmem:[%s87] sm:$0xf]
  %v89 = vld [vmem:[%s87 + $0x4] sm:$0xf]
  %v90 = vld [vmem:[%s87 + $0x8] sm:$0xf]
  %v91 = vld [vmem:[%s87 + $0xc] sm:$0xf]
  %v92 = vld [vmem:[%s87 + $0x10] sm:$0xf]
  %v93 = vld [vmem:[%s87 + $0x14] sm:$0xf]
  %v94 = vld [vmem:[%s87 + $0x18] sm:$0xf]
  %v95 = vld [vmem:[%s87 + $0x1c] sm:$0xf]
  %v104 = vunpack.c.l.b16 %v88
  %v105 = vunpack.c.l.b16 %v89
  %v106 = vunpack.c.l.b16 %v90
  %v107 = vunpack.c.l.b16 %v91
  %v108 = vunpack.c.l.b16 %v92
  %v109 = vunpack.c.l.b16 %v93
  %v110 = vunpack.c.l.b16 %v94
  %v111 = vunpack.c.l.b16 %v95
  %v112 = vpack.c.b16 %v105, %v104
  %v113 = vpack.c.b16 %v107, %v106
  %v114 = vpack.c.b16 %v109, %v108
  %v115 = vpack.c.b16 %v111, %v110
  %120 = vmatpush.bf16.msra.mxu0 0
  %121 = vmatpush.bf16.msra.mxu0 0
  %122 = vmatpush.bf16.msra.mxu0 0
  %123 = vmatpush.bf16.msra.mxu0 0
  %124 = vmatpush.bf16.msra.mxu0 %v115
  %125 = vmatpush.bf16.msra.mxu0 %v114
  %126 = vmatpush.bf16.msra.mxu0 %v113
  %127 = vmatpush.bf16.msra.mxu0 %v112
  %128 = vmatmul.bf16.gmra.mxu0 %v63
  %v129 = vpop.f32.mrf.mxu0
  %v130 = vadd.f32 0.0, %v129
  %v131 = vpop.f32.mrf.mxu0
  %v132 = vadd.f32 0.0, %v131
  %133 = vmatmul.bf16.gmra.mxu0 %v66
  %v134 = vpop.f32.mrf.mxu0
  %v135 = vadd.f32 0.0, %v134
  %v136 = vpop.f32.mrf.mxu0
  %v137 = vadd.f32 0.0, %v136
  %138 = vdwg.mxu0
  %s139 = scalar_lea.vmem %s1, 64
  %v140 = vld [vmem:[%s139] sm:$0xf]
  %v141 = vld [vmem:[%s139 + $0x4] sm:$0xf]
  %v142 = vld [vmem:[%s139 + $0x8] sm:$0xf]
  %v143 = vld [vmem:[%s139 + $0xc] sm:$0xf]
  %v144 = vld [vmem:[%s139 + $0x10] sm:$0xf]
  %v145 = vld [vmem:[%s139 + $0x14] sm:$0xf]
  %v146 = vld [vmem:[%s139 + $0x18] sm:$0xf]
  %v147 = vld [vmem:[%s139 + $0x1c] sm:$0xf]
  %v156 = vunpack.c.l.b16 %v140
  %v157 = vunpack.c.l.b16 %v141
  %v158 = vunpack.c.l.b16 %v142
  %v159 = vunpack.c.l.b16 %v143
  %v160 = vunpack.c.l.b16 %v144
  %v161 = vunpack.c.l.b16 %v145
  %v162 = vunpack.c.l.b16 %v146
  %v163 = vunpack.c.l.b16 %v147
  %v164 = vpack.c.b16 %v157, %v156
  %v165 = vpack.c.b16 %v159, %v158
  %v166 = vpack.c.b16 %v161, %v160
  %v167 = vpack.c.b16 %v163, %v162
  %172 = vmatpush.bf16.msra.mxu0 0
  %173 = vmatpush.bf16.msra.mxu0 0
  %174 = vmatpush.bf16.msra.mxu0 0
  %175 = vmatpush.bf16.msra.mxu0 0
  %176 = vmatpush.bf16.msra.mxu0 %v167
  %177 = vmatpush.bf16.msra.mxu0 %v166
  %178 = vmatpush.bf16.msra.mxu0 %v165
  %179 = vmatpush.bf16.msra.mxu0 %v164
  %180 = vmatmul.bf16.gmra.mxu0 %v63
  %v181 = vpop.f32.mrf.mxu0
  %v182 = vadd.f32 0.0, %v181
  %v183 = vpop.f32.mrf.mxu0
  %v184 = vadd.f32 0.0, %v183
  %185 = vmatmul.bf16.gmra.mxu0 %v66
  %v186 = vpop.f32.mrf.mxu0
  %v187 = vadd.f32 0.0, %v186
  %v188 = vpop.f32.mrf.mxu0
  %v189 = vadd.f32 0.0, %v188
  %190 = vdwg.mxu0
  %vm193 = vcmask 1040384
  %v194 = vrot.slane %v78, 7
  %v195 = vrot.slane %v80, 7
  %v196 = vsel %vm193, %v194, %v195
  %v199 = vsel %vm193, 0.0, %v194
  %v200 = vadd.f32 %v130, %v199
  %v201 = vadd.f32 %v132, %v196
  %vm204 = vcmask 1046528
  %v205 = vrot.slane %v182, 1
  %v206 = vrot.slane %v184, 1
  %v207 = vsel %vm204, %v205, %v206
  %v210 = vsel %vm204, %v206, 0.0
  %v211 = vadd.f32 %v200, %v207
  %v212 = vadd.f32 %v201, %v210
  %v215 = vrot.slane %v83, 7
  %v216 = vrot.slane %v85, 7
  %v217 = vsel %vm193, %v215, %v216
  %v220 = vsel %vm193, 0.0, %v215
  %v221 = vadd.f32 %v135, %v220
  %v222 = vadd.f32 %v137, %v217
  %v225 = vrot.slane %v187, 1
  %v226 = vrot.slane %v189, 1
  %v227 = vsel %vm204, %v225, %v226
  %v230 = vsel %vm204, %v226, 0.0
  %v231 = vadd.f32 %v221, %v227
  %v232 = vadd.f32 %v222, %v230
  %v233 = vld [vmem:[%s2] sm:$0x1]
  %v235 = vperm.slane %v233, 0
  %v237 = vadd.f32 %v211, %v235
  %v238 = vadd.f32 %v212, %v235
  %v239 = vadd.f32 %v231, %v235
  %v240 = vadd.f32 %v232, %v235
  %v241 = vmax.f32 %v237, 0.0
  %v242 = vmax.f32 %v238, 0.0
  %v243 = vmax.f32 %v239, 0.0
  %v244 = vmax.f32 %v240, 0.0
  %v245 = vpack.c.bf16 %v241, %v241
  %v246 = vpack.c.bf16 %v242, %v242
  %v247 = vpack.c.bf16 %v243, %v243
  %v248 = vpack.c.bf16 %v244, %v244
  %249 = vst [vmem:[%s3] sm:$0xf] %v245
  %250 = vst [vmem:[%s3 + $0x4] sm:$0xf] %v246
  %251 = vst [vmem:[%s3 + $0x8] sm:$0xf] %v247
  %252 = vst [vmem:[%s3 + $0xc] sm:$0xf] %v248
  // Predicated region
  $region14: #{_lambda_.11} parent=0 // pred_check
    _
  $region15: #{_lambda_.11} parent=0 // pred_check_branch
    %254 = sbr.rel (0) target = $region17
  $region16: #{_lambda_.11} parent=0 // pred_region
    _
  $region17: #{_lambda_.11} parent=0 // pred_fallthru
    _
  // Predicated region
  $region18: #{_lambda_.11} parent=0 // pred_check
    _
  $region19: #{_lambda_.11} parent=0 // pred_check_branch
    %256 = sbr.rel (0) target = $region21
  $region20: #{_lambda_.11} parent=0 // pred_region
    _
  $region21: #{_lambda_.11} parent=0 // pred_fallthru
    _

// kernel: _lambda_.12
$region0: #{_lambda_.12}
  #allocation0 [shape = 'u32[]', space=smem, size = 0x4, offset = 0x4, fixed_abs, tag = 'smem constant byte address 0x4 - core index']
  #allocation1 [shape = 'u32[72,128]{1,0:T(1,128)}', space=vmem, size = 0x9000, scoped, tag = 'internal scratch']
  %s0 = inlined_call_operand.vmem [shape: bf16[16,64], index: 0, kind: input, shape index: {}]
  %s1 = inlined_call_operand.vmem [shape: bf16[3,64,64], index: 1, kind: input, shape index: {}]
  %s2 = inlined_call_operand.vmem [shape: f32[1,64], index: 2, kind: input, shape index: {}]
  %s3 = inlined_call_operand.vmem [shape: bf16[16,64], index: 3, kind: output, shape index: {}]
  %s4 = sld [smem:[#allocation0]]
  $region22: #{_lambda_.12} parent=0
    _
  %s6 = ssub.s32 1, %s4
  %s7 = scalar_select 0, %s6, %s4
  // Predicated region
  $region2: #{_lambda_.12} parent=0 // pred_check
    _
  $region3: #{_lambda_.12} parent=0 // pred_check_branch
    %9 = sbr.rel (0) target = $region5
  $region4: #{_lambda_.12} parent=0 // pred_region
    _
  $region5: #{_lambda_.12} parent=0 // pred_fallthru
    _
  // Predicated region
  $region6: #{_lambda_.12} parent=0 // pred_check
    _
  $region7: #{_lambda_.12} parent=0 // pred_check_branch
    %11 = sbr.rel (0) target = $region9
  $region8: #{_lambda_.12} parent=0 // pred_region
    _
  $region9: #{_lambda_.12} parent=0 // pred_fallthru
    _
  // Predicated region
  $region10: #{_lambda_.12} parent=0 // pred_check
    _
  $region11: #{_lambda_.12} parent=0 // pred_check_branch
    %13 = sbr.rel (0) target = $region13
  $region12: #{_lambda_.12} parent=0 // pred_region
    _
  $region13: #{_lambda_.12} parent=0 // pred_fallthru
    _
  %v15 = vld [vmem:[%s0] sm:$0xf]
  %v16 = vld [vmem:[%s0 + $0x4] sm:$0xf]
  %v17 = vld [vmem:[%s1] sm:$0xf]
  %v18 = vld [vmem:[%s1 + $0x4] sm:$0xf]
  %v19 = vld [vmem:[%s1 + $0x8] sm:$0xf]
  %v20 = vld [vmem:[%s1 + $0xc] sm:$0xf]
  %v21 = vld [vmem:[%s1 + $0x10] sm:$0xf]
  %v22 = vld [vmem:[%s1 + $0x14] sm:$0xf]
  %v23 = vld [vmem:[%s1 + $0x18] sm:$0xf]
  %v24 = vld [vmem:[%s1 + $0x1c] sm:$0xf]
  %v27 = vunpack.c.l.b16 %v15
  %v28 = vunpack.c.l.b16 %v16
  %v29 = vpack.c.b16 %v28, %v27
  %v38 = vunpack.c.l.b16 %v17
  %v39 = vunpack.c.l.b16 %v18
  %v40 = vunpack.c.l.b16 %v19
  %v41 = vunpack.c.l.b16 %v20
  %v42 = vunpack.c.l.b16 %v21
  %v43 = vunpack.c.l.b16 %v22
  %v44 = vunpack.c.l.b16 %v23
  %v45 = vunpack.c.l.b16 %v24
  %v46 = vpack.c.b16 %v39, %v38
  %v47 = vpack.c.b16 %v41, %v40
  %v48 = vpack.c.b16 %v43, %v42
  %v49 = vpack.c.b16 %v45, %v44
  %vm54 = vcmask 523264
  %v56 = vsel %vm54, %v29, 0
  %58 = vmatpush.bf16.msra.mxu0 0
  %59 = vmatpush.bf16.msra.mxu0 0
  %60 = vmatpush.bf16.msra.mxu0 0
  %61 = vmatpush.bf16.msra.mxu0 0
  %62 = vmatpush.bf16.msra.mxu0 %v49
  %63 = vmatpush.bf16.msra.mxu0 %v48
  %64 = vmatpush.bf16.msra.mxu0 %v47
  %65 = vmatpush.bf16.msra.mxu0 %v46
  %66 = vmatmul.bf16.gmra.mxu0 %v56
  %v67 = vpop.f32.mrf.mxu0
  %v68 = vadd.f32 0.0, %v67
  %v69 = vpop.f32.mrf.mxu0
  %v70 = vadd.f32 0.0, %v69
  %71 = vdwg.mxu0
  %s72 = scalar_lea.vmem %s1, 32
  %v73 = vld [vmem:[%s72] sm:$0xf]
  %v74 = vld [vmem:[%s72 + $0x4] sm:$0xf]
  %v75 = vld [vmem:[%s72 + $0x8] sm:$0xf]
  %v76 = vld [vmem:[%s72 + $0xc] sm:$0xf]
  %v77 = vld [vmem:[%s72 + $0x10] sm:$0xf]
  %v78 = vld [vmem:[%s72 + $0x14] sm:$0xf]
  %v79 = vld [vmem:[%s72 + $0x18] sm:$0xf]
  %v80 = vld [vmem:[%s72 + $0x1c] sm:$0xf]
  %v89 = vunpack.c.l.b16 %v73
  %v90 = vunpack.c.l.b16 %v74
  %v91 = vunpack.c.l.b16 %v75
  %v92 = vunpack.c.l.b16 %v76
  %v93 = vunpack.c.l.b16 %v77
  %v94 = vunpack.c.l.b16 %v78
  %v95 = vunpack.c.l.b16 %v79
  %v96 = vunpack.c.l.b16 %v80
  %v97 = vpack.c.b16 %v90, %v89
  %v98 = vpack.c.b16 %v92, %v91
  %v99 = vpack.c.b16 %v94, %v93
  %v100 = vpack.c.b16 %v96, %v95
  %105 = vmatpush.bf16.msra.mxu0 0
  %106 = vmatpush.bf16.msra.mxu0 0
  %107 = vmatpush.bf16.msra.mxu0 0
  %108 = vmatpush.bf16.msra.mxu0 0
  %109 = vmatpush.bf16.msra.mxu0 %v100
  %110 = vmatpush.bf16.msra.mxu0 %v99
  %111 = vmatpush.bf16.msra.mxu0 %v98
  %112 = vmatpush.bf16.msra.mxu0 %v97
  %113 = vmatmul.bf16.gmra.mxu0 %v56
  %v114 = vpop.f32.mrf.mxu0
  %v115 = vadd.f32 0.0, %v114
  %v116 = vpop.f32.mrf.mxu0
  %v117 = vadd.f32 0.0, %v116
  %118 = vdwg.mxu0
  %s119 = scalar_lea.vmem %s1, 64
  %v120 = vld [vmem:[%s119] sm:$0xf]
  %v121 = vld [vmem:[%s119 + $0x4] sm:$0xf]
  %v122 = vld [vmem:[%s119 + $0x8] sm:$0xf]
  %v123 = vld [vmem:[%s119 + $0xc] sm:$0xf]
  %v124 = vld [vmem:[%s119 + $0x10] sm:$0xf]
  %v125 = vld [vmem:[%s119 + $0x14] sm:$0xf]
  %v126 = vld [vmem:[%s119 + $0x18] sm:$0xf]
  %v127 = vld [vmem:[%s119 + $0x1c] sm:$0xf]
  %v136 = vunpack.c.l.b16 %v120
  %v137 = vunpack.c.l.b16 %v121
  %v138 = vunpack.c.l.b16 %v122
  %v139 = vunpack.c.l.b16 %v123
  %v140 = vunpack.c.l.b16 %v124
  %v141 = vunpack.c.l.b16 %v125
  %v142 = vunpack.c.l.b16 %v126
  %v143 = vunpack.c.l.b16 %v127
  %v144 = vpack.c.b16 %v137, %v136
  %v145 = vpack.c.b16 %v139, %v138
  %v146 = vpack.c.b16 %v141, %v140
  %v147 = vpack.c.b16 %v143, %v142
  %152 = vmatpush.bf16.msra.mxu0 0
  %153 = vmatpush.bf16.msra.mxu0 0
  %154 = vmatpush.bf16.msra.mxu0 0
  %155 = vmatpush.bf16.msra.mxu0 0
  %156 = vmatpush.bf16.msra.mxu0 %v147
  %157 = vmatpush.bf16.msra.mxu0 %v146
  %158 = vmatpush.bf16.msra.mxu0 %v145
  %159 = vmatpush.bf16.msra.mxu0 %v144
  %160 = vmatmul.bf16.gmra.mxu0 %v56
  %v161 = vpop.f32.mrf.mxu0
  %v162 = vadd.f32 0.0, %v161
  %v163 = vpop.f32.mrf.mxu0
  %v164 = vadd.f32 0.0, %v163
  %165 = vdwg.mxu0
  %v167 = vrot.slane %v68, 7
  %vm169 = vcmask 1040384
  %v170 = vsel %vm169, 0.0, %v167
  %v171 = vadd.f32 %v115, %v170
  %v173 = vrot.slane %v162, 1
  %vm175 = vcmask 1046528
  %v176 = vsel %vm175, %v173, 0.0
  %v177 = vadd.f32 %v171, %v176
  %v179 = vrot.slane %v70, 7
  %v181 = vsel %vm169, 0.0, %v179
  %v182 = vadd.f32 %v117, %v181
  %v184 = vrot.slane %v164, 1
  %v186 = vsel %vm175, %v184, 0.0
  %v187 = vadd.f32 %v182, %v186
  %v188 = vld [vmem:[%s2] sm:$0x1]
  %v190 = vperm.slane %v188, 0
  %v192 = vadd.f32 %v177, %v190
  %v193 = vadd.f32 %v187, %v190
  %v194 = vmax.f32 %v192, 0.0
  %v195 = vmax.f32 %v193, 0.0
  %v196 = vpack.c.bf16 %v194, %v194
  %v197 = vpack.c.bf16 %v195, %v195
  %vm198 = vcmask 519168
  %199 = vst.msk [vmem:[%s3] sm:$0xf] %vm198, %v196
  %200 = vst.msk [vmem:[%s3 + $0x4] sm:$0xf] %vm198, %v197
  // Predicated region
  $region14: #{_lambda_.12} parent=0 // pred_check
    _
  $region15: #{_lambda_.12} parent=0 // pred_check_branch
    %202 = sbr.rel (0) target = $region17
  $region16: #{_lambda_.12} parent=0 // pred_region
    _
  $region17: #{_lambda_.12} parent=0 // pred_fallthru
    _
  // Predicated region
  $region18: #{_lambda_.12} parent=0 // pred_check
    _
  $region19: #{_lambda_.12} parent=0 // pred_check_branch
    %204 = sbr.rel (0) target = $region21
  $region20: #{_lambda_.12} parent=0 // pred_region
    _
  $region21: #{_lambda_.12} parent=0 // pred_fallthru
    _

// kernel: _lambda_.13
$region0: #{_lambda_.13}
  #allocation0 [shape = 'u32[]', space=smem, size = 0x4, offset = 0x4, fixed_abs, tag = 'smem constant byte address 0x4 - core index']
  #allocation1 [shape = 'u32[72,128]{1,0:T(1,128)}', space=vmem, size = 0x9000, scoped, tag = 'internal scratch']
  %s0 = inlined_call_operand.vmem [shape: bf16[8,32], index: 0, kind: input, shape index: {}]
  %s1 = inlined_call_operand.vmem [shape: bf16[3,32,32], index: 1, kind: input, shape index: {}]
  %s2 = inlined_call_operand.vmem [shape: f32[1,32], index: 2, kind: input, shape index: {}]
  %s3 = inlined_call_operand.vmem [shape: bf16[8,32], index: 3, kind: output, shape index: {}]
  %s4 = sld [smem:[#allocation0]]
  $region22: #{_lambda_.13} parent=0
    _
  %s6 = ssub.s32 1, %s4
  %s7 = scalar_select 0, %s6, %s4
  // Predicated region
  $region2: #{_lambda_.13} parent=0 // pred_check
    _
  $region3: #{_lambda_.13} parent=0 // pred_check_branch
    %9 = sbr.rel (0) target = $region5
  $region4: #{_lambda_.13} parent=0 // pred_region
    _
  $region5: #{_lambda_.13} parent=0 // pred_fallthru
    _
  // Predicated region
  $region6: #{_lambda_.13} parent=0 // pred_check
    _
  $region7: #{_lambda_.13} parent=0 // pred_check_branch
    %11 = sbr.rel (0) target = $region9
  $region8: #{_lambda_.13} parent=0 // pred_region
    _
  $region9: #{_lambda_.13} parent=0 // pred_fallthru
    _
  // Predicated region
  $region10: #{_lambda_.13} parent=0 // pred_check
    _
  $region11: #{_lambda_.13} parent=0 // pred_check_branch
    %13 = sbr.rel (0) target = $region13
  $region12: #{_lambda_.13} parent=0 // pred_region
    _
  $region13: #{_lambda_.13} parent=0 // pred_fallthru
    _
  %v15 = vld [vmem:[%s0] sm:$0xf]
  %v16 = vld [vmem:[%s1] sm:$0xf]
  %v17 = vld [vmem:[%s1 + $0x4] sm:$0xf]
  %v18 = vld [vmem:[%s1 + $0x8] sm:$0xf]
  %v19 = vld [vmem:[%s1 + $0xc] sm:$0xf]
  %v24 = vunpack.c.l.b16 %v16
  %v25 = vunpack.c.l.b16 %v17
  %v26 = vunpack.c.l.b16 %v18
  %v27 = vunpack.c.l.b16 %v19
  %v28 = vpack.c.b16 %v25, %v24
  %v29 = vpack.c.b16 %v27, %v26
  %vm32 = vcmask 261120
  %v34 = vsel %vm32, %v15, 0
  %36 = vmatpush.bf16.msra.mxu0 0
  %37 = vmatpush.bf16.msra.mxu0 0
  %38 = vmatpush.bf16.msra.mxu0 0
  %39 = vmatpush.bf16.msra.mxu0 0
  %40 = vmatpush.bf16.msra.mxu0 0
  %41 = vmatpush.bf16.msra.mxu0 0
  %42 = vmatpush.bf16.msra.mxu0 %v29
  %43 = vmatpush.bf16.msra.mxu0 %v28
  %44 = vmatmul.bf16.gmra.mxu0 %v34
  %v45 = vpop.f32.mrf.mxu0
  %v46 = vadd.f32 0.0, %v45
  %v47 = vpop.f32.mrf.mxu0
  %48 = vdwg.mxu0
  %s49 = scalar_lea.vmem %s1, 16
  %v50 = vld [vmem:[%s49] sm:$0xf]
  %v51 = vld [vmem:[%s49 + $0x4] sm:$0xf]
  %v52 = vld [vmem:[%s49 + $0x8] sm:$0xf]
  %v53 = vld [vmem:[%s49 + $0xc] sm:$0xf]
  %v58 = vunpack.c.l.b16 %v50
  %v59 = vunpack.c.l.b16 %v51
  %v60 = vunpack.c.l.b16 %v52
  %v61 = vunpack.c.l.b16 %v53
  %v62 = vpack.c.b16 %v59, %v58
  %v63 = vpack.c.b16 %v61, %v60
  %66 = vmatpush.bf16.msra.mxu0 0
  %67 = vmatpush.bf16.msra.mxu0 0
  %68 = vmatpush.bf16.msra.mxu0 0
  %69 = vmatpush.bf16.msra.mxu0 0
  %70 = vmatpush.bf16.msra.mxu0 0
  %71 = vmatpush.bf16.msra.mxu0 0
  %72 = vmatpush.bf16.msra.mxu0 %v63
  %73 = vmatpush.bf16.msra.mxu0 %v62
  %74 = vmatmul.bf16.gmra.mxu0 %v34
  %v75 = vpop.f32.mrf.mxu0
  %v76 = vadd.f32 0.0, %v75
  %v77 = vpop.f32.mrf.mxu0
  %78 = vdwg.mxu0
  %s79 = scalar_lea.vmem %s1, 32
  %v80 = vld [vmem:[%s79] sm:$0xf]
  %v81 = vld [vmem:[%s79 + $0x4] sm:$0xf]
  %v82 = vld [vmem:[%s79 + $0x8] sm:$0xf]
  %v83 = vld [vmem:[%s79 + $0xc] sm:$0xf]
  %v88 = vunpack.c.l.b16 %v80
  %v89 = vunpack.c.l.b16 %v81
  %v90 = vunpack.c.l.b16 %v82
  %v91 = vunpack.c.l.b16 %v83
  %v92 = vpack.c.b16 %v89, %v88
  %v93 = vpack.c.b16 %v91, %v90
  %96 = vmatpush.bf16.msra.mxu0 0
  %97 = vmatpush.bf16.msra.mxu0 0
  %98 = vmatpush.bf16.msra.mxu0 0
  %99 = vmatpush.bf16.msra.mxu0 0
  %100 = vmatpush.bf16.msra.mxu0 0
  %101 = vmatpush.bf16.msra.mxu0 0
  %102 = vmatpush.bf16.msra.mxu0 %v93
  %103 = vmatpush.bf16.msra.mxu0 %v92
  %104 = vmatmul.bf16.gmra.mxu0 %v34
  %v105 = vpop.f32.mrf.mxu0
  %v106 = vadd.f32 0.0, %v105
  %v107 = vpop.f32.mrf.mxu0
  %108 = vdwg.mxu0
  %v110 = vrot.slane %v46, 7
  %vm112 = vcmask 1040384
  %v113 = vsel %vm112, 0.0, %v110
  %v114 = vadd.f32 %v76, %v113
  %v116 = vrot.slane %v106, 1
  %vm118 = vcmask 1042432
  %v119 = vsel %vm118, %v116, 0.0
  %v120 = vadd.f32 %v114, %v119
  %v121 = vrot.slane %v46, 3
  %v123 = vsel %vm112, 0.0, %v121
  %v125 = vrot.slane %v123, 4
  %v127 = vadd.f32 %v76, %v125
  %v128 = vrot.slane %v106, 5
  %v130 = vsel %vm118, %v128, 0.0
  %v132 = vrot.slane %v130, 4
  %v134 = vadd.f32 %v127, %v132
  %vm135 = vcmask 1043456
  %v136 = vsel %vm135, %v120, %v134
  %v137 = vld [vmem:[%s2] sm:$0x1]
  %v139 = vperm.slane %v137, 0
  %v141 = vadd.f32 %v136, %v139
  %v142 = vmax.f32 %v141, 0.0
  %v143 = vpack.c.bf16 %v142, %v142
  %vm144 = vcmask 257024
  %145 = vst.msk [vmem:[%s3] sm:$0xf] %vm144, %v143
  // Predicated region
  $region14: #{_lambda_.13} parent=0 // pred_check
    _
  $region15: #{_lambda_.13} parent=0 // pred_check_branch
    %147 = sbr.rel (0) target = $region17
  $region16: #{_lambda_.13} parent=0 // pred_region
    _
  $region17: #{_lambda_.13} parent=0 // pred_fallthru
    _
  // Predicated region
  $region18: #{_lambda_.13} parent=0 // pred_check
    _
  $region19: #{_lambda_.13} parent=0 // pred_check_branch
    %149 = sbr.rel (0) target = $region21
  $region20: #{_lambda_.13} parent=0 // pred_region
    _
  $region21: #{_lambda_.13} parent=0 // pred_fallthru
    _

// kernel: _lambda_.14
$region0: #{_lambda_.14}
  #allocation0 [shape = 'u32[]', space=smem, size = 0x4, offset = 0x4, fixed_abs, tag = 'smem constant byte address 0x4 - core index']
  #allocation1 [shape = 'u32[72,128]{1,0:T(1,128)}', space=vmem, size = 0x9000, scoped, tag = 'internal scratch']
  %s0 = inlined_call_operand.vmem [shape: bf16[4,16], index: 0, kind: input, shape index: {}]
  %s1 = inlined_call_operand.vmem [shape: bf16[3,16,16], index: 1, kind: input, shape index: {}]
  %s2 = inlined_call_operand.vmem [shape: f32[1,16], index: 2, kind: input, shape index: {}]
  %s3 = inlined_call_operand.vmem [shape: bf16[4,16], index: 3, kind: output, shape index: {}]
  %s4 = sld [smem:[#allocation0]]
  $region22: #{_lambda_.14} parent=0
    _
  %s6 = ssub.s32 1, %s4
  %s7 = scalar_select 0, %s6, %s4
  // Predicated region
  $region2: #{_lambda_.14} parent=0 // pred_check
    _
  $region3: #{_lambda_.14} parent=0 // pred_check_branch
    %9 = sbr.rel (0) target = $region5
  $region4: #{_lambda_.14} parent=0 // pred_region
    _
  $region5: #{_lambda_.14} parent=0 // pred_fallthru
    _
  // Predicated region
  $region6: #{_lambda_.14} parent=0 // pred_check
    _
  $region7: #{_lambda_.14} parent=0 // pred_check_branch
    %11 = sbr.rel (0) target = $region9
  $region8: #{_lambda_.14} parent=0 // pred_region
    _
  $region9: #{_lambda_.14} parent=0 // pred_fallthru
    _
  // Predicated region
  $region10: #{_lambda_.14} parent=0 // pred_check
    _
  $region11: #{_lambda_.14} parent=0 // pred_check_branch
    %13 = sbr.rel (0) target = $region13
  $region12: #{_lambda_.14} parent=0 // pred_region
    _
  $region13: #{_lambda_.14} parent=0 // pred_fallthru
    _
  %v15 = vld [vmem:[%s0] sm:$0x3]
  %v16 = vld [vmem:[%s1] sm:$0xf]
  %v17 = vld [vmem:[%s1 + $0x4] sm:$0xf]
  %v20 = vunpack.c.l.b16 %v16
  %v21 = vunpack.c.l.b16 %v17
  %v22 = vpack.c.b16 %v21, %v20
  %vm24 = vcmask 130048
  %v26 = vsel %vm24, %v15, 0
  %28 = vmatpush.bf16.msra.mxu0 0
  %29 = vmatpush.bf16.msra.mxu0 0
  %30 = vmatpush.bf16.msra.mxu0 0
  %31 = vmatpush.bf16.msra.mxu0 0
  %32 = vmatpush.bf16.msra.mxu0 0
  %33 = vmatpush.bf16.msra.mxu0 0
  %34 = vmatpush.bf16.msra.mxu0 0
  %35 = vmatpush.bf16.msra.mxu0 %v22
  %36 = vmatmul.bf16.gmra.mxu0 %v26
  %v37 = vpop.f32.mrf.mxu0
  %v38 = vadd.f32 0.0, %v37
  %v39 = vpop.f32.mrf.mxu0
  %40 = vdwg.mxu0
  %s41 = scalar_lea.vmem %s1, 8
  %v42 = vld [vmem:[%s41] sm:$0xf]
  %v43 = vld [vmem:[%s41 + $0x4] sm:$0xf]
  %v46 = vunpack.c.l.b16 %v42
  %v47 = vunpack.c.l.b16 %v43
  %v48 = vpack.c.b16 %v47, %v46
  %50 = vmatpush.bf16.msra.mxu0 0
  %51 = vmatpush.bf16.msra.mxu0 0
  %52 = vmatpush.bf16.msra.mxu0 0
  %53 = vmatpush.bf16.msra.mxu0 0
  %54 = vmatpush.bf16.msra.mxu0 0
  %55 = vmatpush.bf16.msra.mxu0 0
  %56 = vmatpush.bf16.msra.mxu0 0
  %57 = vmatpush.bf16.msra.mxu0 %v48
  %58 = vmatmul.bf16.gmra.mxu0 %v26
  %v59 = vpop.f32.mrf.mxu0
  %v60 = vadd.f32 0.0, %v59
  %v61 = vpop.f32.mrf.mxu0
  %62 = vdwg.mxu0
  %s63 = scalar_lea.vmem %s1, 16
  %v64 = vld [vmem:[%s63] sm:$0xf]
  %v65 = vld [vmem:[%s63 + $0x4] sm:$0xf]
  %v68 = vunpack.c.l.b16 %v64
  %v69 = vunpack.c.l.b16 %v65
  %v70 = vpack.c.b16 %v69, %v68
  %72 = vmatpush.bf16.msra.mxu0 0
  %73 = vmatpush.bf16.msra.mxu0 0
  %74 = vmatpush.bf16.msra.mxu0 0
  %75 = vmatpush.bf16.msra.mxu0 0
  %76 = vmatpush.bf16.msra.mxu0 0
  %77 = vmatpush.bf16.msra.mxu0 0
  %78 = vmatpush.bf16.msra.mxu0 0
  %79 = vmatpush.bf16.msra.mxu0 %v70
  %80 = vmatmul.bf16.gmra.mxu0 %v26
  %v81 = vpop.f32.mrf.mxu0
  %v82 = vadd.f32 0.0, %v81
  %v83 = vpop.f32.mrf.mxu0
  %84 = vdwg.mxu0
  %v86 = vrot.slane %v38, 7
  %vm88 = vcmask 1040384
  %v89 = vsel %vm88, 0.0, %v86
  %v90 = vadd.f32 %v60, %v89
  %v92 = vrot.slane %v82, 1
  %v94 = vsel %vm88, %v92, 0.0
  %v95 = vadd.f32 %v90, %v94
  %v96 = vrot.slane %v38, 1
  %v98 = vsel %vm88, 0.0, %v96
  %v100 = vrot.slane %v98, 6
  %v102 = vadd.f32 %v60, %v100
  %v103 = vrot.slane %v82, 3
  %v105 = vsel %vm88, %v103, 0.0
  %v107 = vrot.slane %v105, 6
  %v109 = vadd.f32 %v102, %v107
  %vm110 = vcmask 1041408
  %v111 = vsel %vm110, %v95, %v109
  %v112 = vld [vmem:[%s2] sm:$0x1]
  %v114 = vperm.slane %v112, 0
  %v116 = vadd.f32 %v111, %v114
  %v117 = vmax.f32 %v116, 0.0
  %v118 = vpack.c.bf16 %v117, %v117
  %vm119 = vcmask 123904
  %120 = vst.msk [vmem:[%s3] sm:$0x3] %vm119, %v118
  // Predicated region
  $region14: #{_lambda_.14} parent=0 // pred_check
    _
  $region15: #{_lambda_.14} parent=0 // pred_check_branch
    %122 = sbr.rel (0) target = $region17
  $region16: #{_lambda_.14} parent=0 // pred_region
    _
  $region17: #{_lambda_.14} parent=0 // pred_fallthru
    _
  // Predicated region
  $region18: #{_lambda_.14} parent=0 // pred_check
    _
  $region19: #{_lambda_.14} parent=0 // pred_check_branch
    %124 = sbr.rel (0) target = $region21
  $region20: #{_lambda_.14} parent=0 // pred_region
    _
  $region21: #{_lambda_.14} parent=0 // pred_fallthru
    _

// kernel: _lambda_.15
$region0: #{_lambda_.15}
  #allocation0 [shape = 'u32[]', space=smem, size = 0x4, offset = 0x4, fixed_abs, tag = 'smem constant byte address 0x4 - core index']
  #allocation1 [shape = 'u32[72,128]{1,0:T(1,128)}', space=vmem, size = 0x9000, scoped, tag = 'internal scratch']
  %s0 = inlined_call_operand.vmem [shape: bf16[2,8], index: 0, kind: input, shape index: {}]
  %s1 = inlined_call_operand.vmem [shape: bf16[8,8], index: 1, kind: input, shape index: {}]
  %s2 = inlined_call_operand.vmem [shape: f32[1,8], index: 2, kind: input, shape index: {}]
  %s3 = inlined_call_operand.vmem [shape: bf16[8,8], index: 3, kind: input, shape index: {}]
  %s4 = inlined_call_operand.vmem [shape: f32[1,8], index: 4, kind: input, shape index: {}]
  %s5 = inlined_call_operand.vmem [shape: bf16[8,8], index: 5, kind: input, shape index: {}]
  %s6 = inlined_call_operand.vmem [shape: f32[1,8], index: 6, kind: input, shape index: {}]
  %s7 = inlined_call_operand.vmem [shape: bf16[8,8], index: 7, kind: input, shape index: {}]
  %s8 = inlined_call_operand.vmem [shape: bf16[8,8], index: 8, kind: input, shape index: {}]
  %s9 = inlined_call_operand.vmem [shape: f32[1,8], index: 9, kind: input, shape index: {}]
  %s10 = inlined_call_operand.vmem [shape: bf16[8,8], index: 10, kind: input, shape index: {}]
  %s11 = inlined_call_operand.vmem [shape: bf16[8,8], index: 11, kind: input, shape index: {}]
  %s12 = inlined_call_operand.vmem [shape: f32[1,8], index: 12, kind: input, shape index: {}]
  %s13 = inlined_call_operand.vmem [shape: bf16[2,8], index: 13, kind: output, shape index: {}]
  %s14 = sld [smem:[#allocation0]]
  $region62: #{_lambda_.15} parent=0
    _
  %s16 = ssub.s32 1, %s14
  %s17 = scalar_select 0, %s16, %s14
  // Predicated region
  $region2: #{_lambda_.15} parent=0 // pred_check
    _
  $region3: #{_lambda_.15} parent=0 // pred_check_branch
    %19 = sbr.rel (0) target = $region5
  $region4: #{_lambda_.15} parent=0 // pred_region
    _
  $region5: #{_lambda_.15} parent=0 // pred_fallthru
    _
  // Predicated region
  $region6: #{_lambda_.15} parent=0 // pred_check
    _
  $region7: #{_lambda_.15} parent=0 // pred_check_branch
    %21 = sbr.rel (0) target = $region9
  $region8: #{_lambda_.15} parent=0 // pred_region
    _
  $region9: #{_lambda_.15} parent=0 // pred_fallthru
    _
  // Predicated region
  $region10: #{_lambda_.15} parent=0 // pred_check
    _
  $region11: #{_lambda_.15} parent=0 // pred_check_branch
    %23 = sbr.rel (0) target = $region13
  $region12: #{_lambda_.15} parent=0 // pred_region
    _
  $region13: #{_lambda_.15} parent=0 // pred_fallthru
    _
  // Predicated region
  $region14: #{_lambda_.15} parent=0 // pred_check
    _
  $region15: #{_lambda_.15} parent=0 // pred_check_branch
    %25 = sbr.rel (0) target = $region17
  $region16: #{_lambda_.15} parent=0 // pred_region
    _
  $region17: #{_lambda_.15} parent=0 // pred_fallthru
    _
  // Predicated region
  $region18: #{_lambda_.15} parent=0 // pred_check
    _
  $region19: #{_lambda_.15} parent=0 // pred_check_branch
    %27 = sbr.rel (0) target = $region21
  $region20: #{_lambda_.15} parent=0 // pred_region
    _
  $region21: #{_lambda_.15} parent=0 // pred_fallthru
    _
  // Predicated region
  $region22: #{_lambda_.15} parent=0 // pred_check
    _
  $region23: #{_lambda_.15} parent=0 // pred_check_branch
    %29 = sbr.rel (0) target = $region25
  $region24: #{_lambda_.15} parent=0 // pred_region
    _
  $region25: #{_lambda_.15} parent=0 // pred_fallthru
    _
  // Predicated region
  $region26: #{_lambda_.15} parent=0 // pred_check
    _
  $region27: #{_lambda_.15} parent=0 // pred_check_branch
    %31 = sbr.rel (0) target = $region29
  $region28: #{_lambda_.15} parent=0 // pred_region
    _
  $region29: #{_lambda_.15} parent=0 // pred_fallthru
    _
  // Predicated region
  $region30: #{_lambda_.15} parent=0 // pred_check
    _
  $region31: #{_lambda_.15} parent=0 // pred_check_branch
    %33 = sbr.rel (0) target = $region33
  $region32: #{_lambda_.15} parent=0 // pred_region
    _
  $region33: #{_lambda_.15} parent=0 // pred_fallthru
    _
  // Predicated region
  $region34: #{_lambda_.15} parent=0 // pred_check
    _
  $region35: #{_lambda_.15} parent=0 // pred_check_branch
    %35 = sbr.rel (0) target = $region37
  $region36: #{_lambda_.15} parent=0 // pred_region
    _
  $region37: #{_lambda_.15} parent=0 // pred_fallthru
    _
  // Predicated region
  $region38: #{_lambda_.15} parent=0 // pred_check
    _
  $region39: #{_lambda_.15} parent=0 // pred_check_branch
    %37 = sbr.rel (0) target = $region41
  $region40: #{_lambda_.15} parent=0 // pred_region
    _
  $region41: #{_lambda_.15} parent=0 // pred_fallthru
    _
  // Predicated region
  $region42: #{_lambda_.15} parent=0 // pred_check
    _
  $region43: #{_lambda_.15} parent=0 // pred_check_branch
    %39 = sbr.rel (0) target = $region45
  $region44: #{_lambda_.15} parent=0 // pred_region
    _
  $region45: #{_lambda_.15} parent=0 // pred_fallthru
    _
  // Predicated region
  $region46: #{_lambda_.15} parent=0 // pred_check
    _
  $region47: #{_lambda_.15} parent=0 // pred_check_branch
    %41 = sbr.rel (0) target = $region49
  $region48: #{_lambda_.15} parent=0 // pred_region
    _
  $region49: #{_lambda_.15} parent=0 // pred_fallthru
    _
  // Predicated region
  $region50: #{_lambda_.15} parent=0 // pred_check
    _
  $region51: #{_lambda_.15} parent=0 // pred_check_branch
    %43 = sbr.rel (0) target = $region53
  $region52: #{_lambda_.15} parent=0 // pred_region
    _
  $region53: #{_lambda_.15} parent=0 // pred_fallthru
    _
  %v45 = vld [vmem:[%s0] sm:$0x1]
  %v46 = vld [vmem:[%s1] sm:$0xf]
  %v47 = vld [vmem:[%s2] sm:$0x1]
  %v49 = vperm.slane %v47, 0
  %vm51 = vcmask 64512
  %v53 = vsel %vm51, %v45, 0
  %vm55 = vcmask 1043456
  %v57 = vsel %vm55, %v46, 0
  %59 = vmatpush.bf16.msra.mxu0 0
  %60 = vmatpush.bf16.msra.mxu0 0
  %61 = vmatpush.bf16.msra.mxu0 0
  %62 = vmatpush.bf16.msra.mxu0 0
  %63 = vmatpush.bf16.msra.mxu0 0
  %64 = vmatpush.bf16.msra.mxu0 0
  %65 = vmatpush.bf16.msra.mxu0 0
  %66 = vmatpush.bf16.msra.mxu0 %v57
  %67 = vmatmul.bf16.gmra.mxu0 %v53
  %v68 = vpop.f32.mrf.mxu0
  %v69 = vadd.f32 %v49, %v68
  %v70 = vpop.f32.mrf.mxu0
  %71 = vdwg.mxu0
  %v72 = vmax.f32 %v69, 0.0
  %v73 = vpack.c.bf16 %v72, %v72
  %v74 = vld [vmem:[%s3] sm:$0xf]
  %v75 = vld [vmem:[%s4] sm:$0x1]
  %v77 = vperm.slane %v75, 0
  %v80 = vsel %vm51, %v73, 0
  %v83 = vsel %vm55, %v74, 0
  %85 = vmatpush.bf16.msra.mxu0 0
  %86 = vmatpush.bf16.msra.mxu0 0
  %87 = vmatpush.bf16.msra.mxu0 0
  %88 = vmatpush.bf16.msra.mxu0 0
  %89 = vmatpush.bf16.msra.mxu0 0
  %90 = vmatpush.bf16.msra.mxu0 0
  %91 = vmatpush.bf16.msra.mxu0 0
  %92 = vmatpush.bf16.msra.mxu0 %v83
  %93 = vmatmul.bf16.gmra.mxu0 %v80
  %v94 = vpop.f32.mrf.mxu0
  %v95 = vadd.f32 %v77, %v94
  %v96 = vpop.f32.mrf.mxu0
  %97 = vdwg.mxu0
  %v98 = vmax.f32 %v95, 0.0
  %v99 = vpack.c.bf16 %v98, %v98
  %v100 = vld [vmem:[%s5] sm:$0xf]
  %v101 = vld [vmem:[%s6] sm:$0x1]
  %v103 = vperm.slane %v101, 0
  %v106 = vsel %vm51, %v99, 0
  %v109 = vsel %vm55, %v100, 0
  %111 = vmatpush.bf16.msra.mxu0 0
  %112 = vmatpush.bf16.msra.mxu0 0
  %113 = vmatpush.bf16.msra.mxu0 0
  %114 = vmatpush.bf16.msra.mxu0 0
  %115 = vmatpush.bf16.msra.mxu0 0
  %116 = vmatpush.bf16.msra.mxu0 0
  %117 = vmatpush.bf16.msra.mxu0 0
  %118 = vmatpush.bf16.msra.mxu0 %v109
  %119 = vmatmul.bf16.gmra.mxu0 %v106
  %v120 = vpop.f32.mrf.mxu0
  %v121 = vadd.f32 %v103, %v120
  %v122 = vpop.f32.mrf.mxu0
  %123 = vdwg.mxu0
  %v124 = vmax.f32 %v121, 0.0
  %v125 = vpack.c.bf16 %v124, %v124
  %v126 = vld [vmem:[%s7] sm:$0xf]
  %v127 = vld [vmem:[%s8] sm:$0xf]
  %v129 = vsel %vm55, %v127, 0
  %131 = vmatpush.bf16.msra.mxu0 0
  %132 = vmatpush.bf16.msra.mxu0 0
  %133 = vmatpush.bf16.msra.mxu0 0
  %134 = vmatpush.bf16.msra.mxu0 0
  %135 = vmatpush.bf16.msra.mxu0 0
  %136 = vmatpush.bf16.msra.mxu0 0
  %137 = vmatpush.bf16.msra.mxu0 0
  %138 = vmatpush.bf16.msra.mxu0 %v129
  %139 = vmatmul.bf16.gmra.mxu0 %v106
  %v140 = vpop.f32.mrf.mxu0
  %v141 = vadd.f32 0.0, %v140
  %v142 = vpop.f32.mrf.mxu0
  %143 = vdwg.mxu0
  %v145 = vsel %vm51, %v125, 0
  %v148 = vsel %vm55, %v126, 0
  %150 = vmatpush.bf16.msra.mxu0 0
  %151 = vmatpush.bf16.msra.mxu0 0
  %152 = vmatpush.bf16.msra.mxu0 0
  %153 = vmatpush.bf16.msra.mxu0 0
  %154 = vmatpush.bf16.msra.mxu0 0
  %155 = vmatpush.bf16.msra.mxu0 0
  %156 = vmatpush.bf16.msra.mxu0 0
  %157 = vmatpush.bf16.msra.mxu0 %v148
  %158 = vmatmul.bf16.gmra.mxu0 %v145
  %v159 = vpop.f32.mrf.mxu0
  %v160 = vadd.f32 %v141, %v159
  %v161 = vpop.f32.mrf.mxu0
  %162 = vdwg.mxu0
  %v163 = vld [vmem:[%s9] sm:$0x1]
  %v165 = vperm.slane %v163, 0
  %v167 = vadd.f32 %v160, %v165
  %v168 = vmax.f32 %v167, 0.0
  %v169 = vpack.c.bf16 %v168, %v168
  %v170 = vld [vmem:[%s10] sm:$0xf]
  %v171 = vld [vmem:[%s11] sm:$0xf]
  %v173 = vsel %vm55, %v171, 0
  %175 = vmatpush.bf16.msra.mxu0 0
  %176 = vmatpush.bf16.msra.mxu0 0
  %177 = vmatpush.bf16.msra.mxu0 0
  %178 = vmatpush.bf16.msra.mxu0 0
  %179 = vmatpush.bf16.msra.mxu0 0
  %180 = vmatpush.bf16.msra.mxu0 0
  %181 = vmatpush.bf16.msra.mxu0 0
  %182 = vmatpush.bf16.msra.mxu0 %v173
  %183 = vmatmul.bf16.gmra.mxu0 %v80
  %v184 = vpop.f32.mrf.mxu0
  %v185 = vadd.f32 0.0, %v184
  %v186 = vpop.f32.mrf.mxu0
  %187 = vdwg.mxu0
  %v189 = vsel %vm51, %v169, 0
  %v192 = vsel %vm55, %v170, 0
  %194 = vmatpush.bf16.msra.mxu0 0
  %195 = vmatpush.bf16.msra.mxu0 0
  %196 = vmatpush.bf16.msra.mxu0 0
  %197 = vmatpush.bf16.msra.mxu0 0
  %198 = vmatpush.bf16.msra.mxu0 0
  %199 = vmatpush.bf16.msra.mxu0 0
  %200 = vmatpush.bf16.msra.mxu0 0
  %201 = vmatpush.bf16.msra.mxu0 %v192
  %202 = vmatmul.bf16.gmra.mxu0 %v189
  %v203 = vpop.f32.mrf.mxu0
  %v204 = vadd.f32 %v185, %v203
  %v205 = vpop.f32.mrf.mxu0
  %206 = vdwg.mxu0
  %v207 = vld [vmem:[%s12] sm:$0x1]
  %v209 = vperm.slane %v207, 0
  %v211 = vadd.f32 %v204, %v209
  %v212 = vmax.f32 %v211, 0.0
  %v213 = vpack.c.bf16 %v212, %v212
  %vm214 = vcmask 57344
  %215 = vst.msk [vmem:[%s13] sm:$0x1] %vm214, %v213
  // Predicated region
  $region54: #{_lambda_.15} parent=0 // pred_check
    _
  $region55: #{_lambda_.15} parent=0 // pred_check_branch
    %217 = sbr.rel (0) target = $region57
  $region56: #{_lambda_.15} parent=0 // pred_region
    _
  $region57: #{_lambda_.15} parent=0 // pred_fallthru
    _
  // Predicated region
  $region58: #{_lambda_.15} parent=0 // pred_check
    _
  $region59: #{_lambda_.15} parent=0 // pred_check_branch
    %219 = sbr.rel (0) target = $region61
  $region60: #{_lambda_.15} parent=0 // pred_region
    _
  $region61: #{_lambda_.15} parent=0 // pred_fallthru
    _

// kernel: _lambda_.16
$region0: #{_lambda_.16}
  #allocation0 [shape = 'u32[]', space=smem, size = 0x4, offset = 0x4, fixed_abs, tag = 'smem constant byte address 0x4 - core index']
  #allocation1 [shape = 'u32[72,128]{1,0:T(1,128)}', space=vmem, size = 0x9000, scoped, tag = 'internal scratch']
  %s0 = inlined_call_operand.vmem [shape: bf16[4,16], index: 0, kind: input, shape index: {}]
  %s1 = inlined_call_operand.vmem [shape: bf16[4,16], index: 1, kind: input, shape index: {}]
  %s2 = inlined_call_operand.vmem [shape: bf16[3,16,16], index: 2, kind: input, shape index: {}]
  %s3 = inlined_call_operand.vmem [shape: bf16[3,16,16], index: 3, kind: input, shape index: {}]
  %s4 = inlined_call_operand.vmem [shape: f32[1,16], index: 4, kind: input, shape index: {}]
  %s5 = inlined_call_operand.vmem [shape: bf16[4,16], index: 5, kind: output, shape index: {}]
  %s6 = sld [smem:[#allocation0]]
  $region30: #{_lambda_.16} parent=0
    _
  %s8 = ssub.s32 1, %s6
  %s9 = scalar_select 0, %s8, %s6
  // Predicated region
  $region2: #{_lambda_.16} parent=0 // pred_check
    _
  $region3: #{_lambda_.16} parent=0 // pred_check_branch
    %11 = sbr.rel (0) target = $region5
  $region4: #{_lambda_.16} parent=0 // pred_region
    _
  $region5: #{_lambda_.16} parent=0 // pred_fallthru
    _
  // Predicated region
  $region6: #{_lambda_.16} parent=0 // pred_check
    _
  $region7: #{_lambda_.16} parent=0 // pred_check_branch
    %13 = sbr.rel (0) target = $region9
  $region8: #{_lambda_.16} parent=0 // pred_region
    _
  $region9: #{_lambda_.16} parent=0 // pred_fallthru
    _
  // Predicated region
  $region10: #{_lambda_.16} parent=0 // pred_check
    _
  $region11: #{_lambda_.16} parent=0 // pred_check_branch
    %15 = sbr.rel (0) target = $region13
  $region12: #{_lambda_.16} parent=0 // pred_region
    _
  $region13: #{_lambda_.16} parent=0 // pred_fallthru
    _
  // Predicated region
  $region14: #{_lambda_.16} parent=0 // pred_check
    _
  $region15: #{_lambda_.16} parent=0 // pred_check_branch
    %17 = sbr.rel (0) target = $region17
  $region16: #{_lambda_.16} parent=0 // pred_region
    _
  $region17: #{_lambda_.16} parent=0 // pred_fallthru
    _
  // Predicated region
  $region18: #{_lambda_.16} parent=0 // pred_check
    _
  $region19: #{_lambda_.16} parent=0 // pred_check_branch
    %19 = sbr.rel (0) target = $region21
  $region20: #{_lambda_.16} parent=0 // pred_region
    _
  $region21: #{_lambda_.16} parent=0 // pred_fallthru
    _
  %v21 = vld [vmem:[%s0] sm:$0x3]
  %v22 = vld [vmem:[%s1] sm:$0x3]
  %v23 = vld [vmem:[%s2] sm:$0xf]
  %v24 = vld [vmem:[%s2 + $0x4] sm:$0xf]
  %s25 = scalar_lea.vmem %s2, 8
  %v26 = vld [vmem:[%s25] sm:$0xf]
  %v27 = vld [vmem:[%s25 + $0x4] sm:$0xf]
  %s28 = scalar_lea.vmem %s2, 16
  %v29 = vld [vmem:[%s28] sm:$0xf]
  %v30 = vld [vmem:[%s28 + $0x4] sm:$0xf]
  %v31 = vld [vmem:[%s3] sm:$0xf]
  %v32 = vld [vmem:[%s3 + $0x4] sm:$0xf]
  %v35 = vunpack.c.l.b16 %v31
  %v36 = vunpack.c.l.b16 %v32
  %v37 = vpack.c.b16 %v36, %v35
  %vm39 = vcmask 130048
  %v41 = vsel %vm39, %v22, 0
  %43 = vmatpush.bf16.msra.mxu0 0
  %44 = vmatpush.bf16.msra.mxu0 0
  %45 = vmatpush.bf16.msra.mxu0 0
  %46 = vmatpush.bf16.msra.mxu0 0
  %47 = vmatpush.bf16.msra.mxu0 0
  %48 = vmatpush.bf16.msra.mxu0 0
  %49 = vmatpush.bf16.msra.mxu0 0
  %50 = vmatpush.bf16.msra.mxu0 %v37
  %51 = vmatmul.bf16.gmra.mxu0 %v41
  %v52 = vpop.f32.mrf.mxu0
  %v53 = vadd.f32 0.0, %v52
  %v54 = vpop.f32.mrf.mxu0
  %55 = vdwg.mxu0
  %v58 = vunpack.c.l.b16 %v23
  %v59 = vunpack.c.l.b16 %v24
  %v60 = vpack.c.b16 %v59, %v58
  %v63 = vsel %vm39, %v21, 0
  %65 = vmatpush.bf16.msra.mxu0 0
  %66 = vmatpush.bf16.msra.mxu0 0
  %67 = vmatpush.bf16.msra.mxu0 0
  %68 = vmatpush.bf16.msra.mxu0 0
  %69 = vmatpush.bf16.msra.mxu0 0
  %70 = vmatpush.bf16.msra.mxu0 0
  %71 = vmatpush.bf16.msra.mxu0 0
  %72 = vmatpush.bf16.msra.mxu0 %v60
  %73 = vmatmul.bf16.gmra.mxu0 %v63
  %v74 = vpop.f32.mrf.mxu0
  %v75 = vadd.f32 %v53, %v74
  %v76 = vpop.f32.mrf.mxu0
  %77 = vdwg.mxu0
  %s78 = scalar_lea.vmem %s3, 8
  %v79 = vld [vmem:[%s78] sm:$0xf]
  %v80 = vld [vmem:[%s78 + $0x4] sm:$0xf]
  %v83 = vunpack.c.l.b16 %v79
  %v84 = vunpack.c.l.b16 %v80
  %v85 = vpack.c.b16 %v84, %v83
  %87 = vmatpush.bf16.msra.mxu0 0
  %88 = vmatpush.bf16.msra.mxu0 0
  %89 = vmatpush.bf16.msra.mxu0 0
  %90 = vmatpush.bf16.msra.mxu0 0
  %91 = vmatpush.bf16.msra.mxu0 0
  %92 = vmatpush.bf16.msra.mxu0 0
  %93 = vmatpush.bf16.msra.mxu0 0
  %94 = vmatpush.bf16.msra.mxu0 %v85
  %95 = vmatmul.bf16.gmra.mxu0 %v41
  %v96 = vpop.f32.mrf.mxu0
  %v97 = vadd.f32 0.0, %v96
  %v98 = vpop.f32.mrf.mxu0
  %99 = vdwg.mxu0
  %v102 = vunpack.c.l.b16 %v26
  %v103 = vunpack.c.l.b16 %v27
  %v104 = vpack.c.b16 %v103, %v102
  %106 = vmatpush.bf16.msra.mxu0 0
  %107 = vmatpush.bf16.msra.mxu0 0
  %108 = vmatpush.bf16.msra.mxu0 0
  %109 = vmatpush.bf16.msra.mxu0 0
  %110 = vmatpush.bf16.msra.mxu0 0
  %111 = vmatpush.bf16.msra.mxu0 0
  %112 = vmatpush.bf16.msra.mxu0 0
  %113 = vmatpush.bf16.msra.mxu0 %v104
  %114 = vmatmul.bf16.gmra.mxu0 %v63
  %v115 = vpop.f32.mrf.mxu0
  %v116 = vadd.f32 %v97, %v115
  %v117 = vpop.f32.mrf.mxu0
  %118 = vdwg.mxu0
  %s119 = scalar_lea.vmem %s3, 16
  %v120 = vld [vmem:[%s119] sm:$0xf]
  %v121 = vld [vmem:[%s119 + $0x4] sm:$0xf]
  %v124 = vunpack.c.l.b16 %v120
  %v125 = vunpack.c.l.b16 %v121
  %v126 = vpack.c.b16 %v125, %v124
  %128 = vmatpush.bf16.msra.mxu0 0
  %129 = vmatpush.bf16.msra.mxu0 0
  %130 = vmatpush.bf16.msra.mxu0 0
  %131 = vmatpush.bf16.msra.mxu0 0
  %132 = vmatpush.bf16.msra.mxu0 0
  %133 = vmatpush.bf16.msra.mxu0 0
  %134 = vmatpush.bf16.msra.mxu0 0
  %135 = vmatpush.bf16.msra.mxu0 %v126
  %136 = vmatmul.bf16.gmra.mxu0 %v41
  %v137 = vpop.f32.mrf.mxu0
  %v138 = vadd.f32 0.0, %v137
  %v139 = vpop.f32.mrf.mxu0
  %140 = vdwg.mxu0
  %v143 = vunpack.c.l.b16 %v29
  %v144 = vunpack.c.l.b16 %v30
  %v145 = vpack.c.b16 %v144, %v143
  %147 = vmatpush.bf16.msra.mxu0 0
  %148 = vmatpush.bf16.msra.mxu0 0
  %149 = vmatpush.bf16.msra.mxu0 0
  %150 = vmatpush.bf16.msra.mxu0 0
  %151 = vmatpush.bf16.msra.mxu0 0
  %152 = vmatpush.bf16.msra.mxu0 0
  %153 = vmatpush.bf16.msra.mxu0 0
  %154 = vmatpush.bf16.msra.mxu0 %v145
  %155 = vmatmul.bf16.gmra.mxu0 %v63
  %v156 = vpop.f32.mrf.mxu0
  %v157 = vadd.f32 %v138, %v156
  %v158 = vpop.f32.mrf.mxu0
  %159 = vdwg.mxu0
  %v161 = vrot.slane %v75, 7
  %vm163 = vcmask 1040384
  %v164 = vsel %vm163, 0.0, %v161
  %v165 = vadd.f32 %v116, %v164
  %v167 = vrot.slane %v157, 1
  %v169 = vsel %vm163, %v167, 0.0
  %v170 = vadd.f32 %v165, %v169
  %v171 = vrot.slane %v75, 1
  %v173 = vsel %vm163, 0.0, %v171
  %v175 = vrot.slane %v173, 6
  %v177 = vadd.f32 %v116, %v175
  %v178 = vrot.slane %v157, 3
  %v180 = vsel %vm163, %v178, 0.0
  %v182 = vrot.slane %v180, 6
  %v184 = vadd.f32 %v177, %v182
  %vm185 = vcmask 1041408
  %v186 = vsel %vm185, %v170, %v184
  %v187 = vld [vmem:[%s4] sm:$0x1]
  %v189 = vperm.slane %v187, 0
  %v191 = vadd.f32 %v186, %v189
  %v192 = vmax.f32 %v191, 0.0
  %v193 = vpack.c.bf16 %v192, %v192
  %vm194 = vcmask 123904
  %195 = vst.msk [vmem:[%s5] sm:$0x3] %vm194, %v193
  // Predicated region
  $region22: #{_lambda_.16} parent=0 // pred_check
    _
  $region23: #{_lambda_.16} parent=0 // pred_check_branch
    %197 = sbr.rel (0) target = $region25
  $region24: #{_lambda_.16} parent=0 // pred_region
    _
  $region25: #{_lambda_.16} parent=0 // pred_fallthru
    _
  // Predicated region
  $region26: #{_lambda_.16} parent=0 // pred_check
    _
  $region27: #{_lambda_.16} parent=0 // pred_check_branch
    %199 = sbr.rel (0) target = $region29
  $region28: #{_lambda_.16} parent=0 // pred_region
    _
  $region29: #{_lambda_.16} parent=0 // pred_fallthru
    _

// kernel: _lambda_.17
$region0: #{_lambda_.17}
  #allocation0 [shape = 'u32[]', space=smem, size = 0x4, offset = 0x4, fixed_abs, tag = 'smem constant byte address 0x4 - core index']
  #allocation1 [shape = 'u32[72,128]{1,0:T(1,128)}', space=vmem, size = 0x9000, scoped, tag = 'internal scratch']
  %s0 = inlined_call_operand.vmem [shape: bf16[8,32], index: 0, kind: input, shape index: {}]
  %s1 = inlined_call_operand.vmem [shape: bf16[8,32], index: 1, kind: input, shape index: {}]
  %s2 = inlined_call_operand.vmem [shape: bf16[3,32,32], index: 2, kind: input, shape index: {}]
  %s3 = inlined_call_operand.vmem [shape: bf16[3,32,32], index: 3, kind: input, shape index: {}]
  %s4 = inlined_call_operand.vmem [shape: f32[1,32], index: 4, kind: input, shape index: {}]
  %s5 = inlined_call_operand.vmem [shape: bf16[8,32], index: 5, kind: output, shape index: {}]
  %s6 = sld [smem:[#allocation0]]
  $region30: #{_lambda_.17} parent=0
    _
  %s8 = ssub.s32 1, %s6
  %s9 = scalar_select 0, %s8, %s6
  // Predicated region
  $region2: #{_lambda_.17} parent=0 // pred_check
    _
  $region3: #{_lambda_.17} parent=0 // pred_check_branch
    %11 = sbr.rel (0) target = $region5
  $region4: #{_lambda_.17} parent=0 // pred_region
    _
  $region5: #{_lambda_.17} parent=0 // pred_fallthru
    _
  // Predicated region
  $region6: #{_lambda_.17} parent=0 // pred_check
    _
  $region7: #{_lambda_.17} parent=0 // pred_check_branch
    %13 = sbr.rel (0) target = $region9
  $region8: #{_lambda_.17} parent=0 // pred_region
    _
  $region9: #{_lambda_.17} parent=0 // pred_fallthru
    _
  // Predicated region
  $region10: #{_lambda_.17} parent=0 // pred_check
    _
  $region11: #{_lambda_.17} parent=0 // pred_check_branch
    %15 = sbr.rel (0) target = $region13
  $region12: #{_lambda_.17} parent=0 // pred_region
    _
  $region13: #{_lambda_.17} parent=0 // pred_fallthru
    _
  // Predicated region
  $region14: #{_lambda_.17} parent=0 // pred_check
    _
  $region15: #{_lambda_.17} parent=0 // pred_check_branch
    %17 = sbr.rel (0) target = $region17
  $region16: #{_lambda_.17} parent=0 // pred_region
    _
  $region17: #{_lambda_.17} parent=0 // pred_fallthru
    _
  // Predicated region
  $region18: #{_lambda_.17} parent=0 // pred_check
    _
  $region19: #{_lambda_.17} parent=0 // pred_check_branch
    %19 = sbr.rel (0) target = $region21
  $region20: #{_lambda_.17} parent=0 // pred_region
    _
  $region21: #{_lambda_.17} parent=0 // pred_fallthru
    _
  %v21 = vld [vmem:[%s0] sm:$0xf]
  %v22 = vld [vmem:[%s1] sm:$0xf]
  %v23 = vld [vmem:[%s2] sm:$0xf]
  %v24 = vld [vmem:[%s2 + $0x4] sm:$0xf]
  %v25 = vld [vmem:[%s2 + $0x8] sm:$0xf]
  %v26 = vld [vmem:[%s2 + $0xc] sm:$0xf]
  %s27 = scalar_lea.vmem %s2, 16
  %v28 = vld [vmem:[%s27] sm:$0xf]
  %v29 = vld [vmem:[%s27 + $0x4] sm:$0xf]
  %v30 = vld [vmem:[%s27 + $0x8] sm:$0xf]
  %v31 = vld [vmem:[%s27 + $0xc] sm:$0xf]
  %s32 = scalar_lea.vmem %s2, 32
  %v33 = vld [vmem:[%s32] sm:$0xf]
  %v34 = vld [vmem:[%s32 + $0x4] sm:$0xf]
  %v35 = vld [vmem:[%s32 + $0x8] sm:$0xf]
  %v36 = vld [vmem:[%s32 + $0xc] sm:$0xf]
  %v37 = vld [vmem:[%s3] sm:$0xf]
  %v38 = vld [vmem:[%s3 + $0x4] sm:$0xf]
  %v39 = vld [vmem:[%s3 + $0x8] sm:$0xf]
  %v40 = vld [vmem:[%s3 + $0xc] sm:$0xf]
  %v45 = vunpack.c.l.b16 %v37
  %v46 = vunpack.c.l.b16 %v38
  %v47 = vunpack.c.l.b16 %v39
  %v48 = vunpack.c.l.b16 %v40
  %v49 = vpack.c.b16 %v46, %v45
  %v50 = vpack.c.b16 %v48, %v47
  %vm53 = vcmask 261120
  %v55 = vsel %vm53, %v22, 0
  %57 = vmatpush.bf16.msra.mxu0 0
  %58 = vmatpush.bf16.msra.mxu0 0
  %59 = vmatpush.bf16.msra.mxu0 0
  %60 = vmatpush.bf16.msra.mxu0 0
  %61 = vmatpush.bf16.msra.mxu0 0
  %62 = vmatpush.bf16.msra.mxu0 0
  %63 = vmatpush.bf16.msra.mxu0 %v50
  %64 = vmatpush.bf16.msra.mxu0 %v49
  %65 = vmatmul.bf16.gmra.mxu0 %v55
  %v66 = vpop.f32.mrf.mxu0
  %v67 = vadd.f32 0.0, %v66
  %v68 = vpop.f32.mrf.mxu0
  %69 = vdwg.mxu0
  %v74 = vunpack.c.l.b16 %v23
  %v75 = vunpack.c.l.b16 %v24
  %v76 = vunpack.c.l.b16 %v25
  %v77 = vunpack.c.l.b16 %v26
  %v78 = vpack.c.b16 %v75, %v74
  %v79 = vpack.c.b16 %v77, %v76
  %v83 = vsel %vm53, %v21, 0
  %85 = vmatpush.bf16.msra.mxu0 0
  %86 = vmatpush.bf16.msra.mxu0 0
  %87 = vmatpush.bf16.msra.mxu0 0
  %88 = vmatpush.bf16.msra.mxu0 0
  %89 = vmatpush.bf16.msra.mxu0 0
  %90 = vmatpush.bf16.msra.mxu0 0
  %91 = vmatpush.bf16.msra.mxu0 %v79
  %92 = vmatpush.bf16.msra.mxu0 %v78
  %93 = vmatmul.bf16.gmra.mxu0 %v83
  %v94 = vpop.f32.mrf.mxu0
  %v95 = vadd.f32 %v67, %v94
  %v96 = vpop.f32.mrf.mxu0
  %97 = vdwg.mxu0
  %s98 = scalar_lea.vmem %s3, 16
  %v99 = vld [vmem:[%s98] sm:$0xf]
  %v100 = vld [vmem:[%s98 + $0x4] sm:$0xf]
  %v101 = vld [vmem:[%s98 + $0x8] sm:$0xf]
  %v102 = vld [vmem:[%s98 + $0xc] sm:$0xf]
  %v107 = vunpack.c.l.b16 %v99
  %v108 = vunpack.c.l.b16 %v100
  %v109 = vunpack.c.l.b16 %v101
  %v110 = vunpack.c.l.b16 %v102
  %v111 = vpack.c.b16 %v108, %v107
  %v112 = vpack.c.b16 %v110, %v109
  %115 = vmatpush.bf16.msra.mxu0 0
  %116 = vmatpush.bf16.msra.mxu0 0
  %117 = vmatpush.bf16.msra.mxu0 0
  %118 = vmatpush.bf16.msra.mxu0 0
  %119 = vmatpush.bf16.msra.mxu0 0
  %120 = vmatpush.bf16.msra.mxu0 0
  %121 = vmatpush.bf16.msra.mxu0 %v112
  %122 = vmatpush.bf16.msra.mxu0 %v111
  %123 = vmatmul.bf16.gmra.mxu0 %v55
  %v124 = vpop.f32.mrf.mxu0
  %v125 = vadd.f32 0.0, %v124
  %v126 = vpop.f32.mrf.mxu0
  %127 = vdwg.mxu0
  %v132 = vunpack.c.l.b16 %v28
  %v133 = vunpack.c.l.b16 %v29
  %v134 = vunpack.c.l.b16 %v30
  %v135 = vunpack.c.l.b16 %v31
  %v136 = vpack.c.b16 %v133, %v132
  %v137 = vpack.c.b16 %v135, %v134
  %140 = vmatpush.bf16.msra.mxu0 0
  %141 = vmatpush.bf16.msra.mxu0 0
  %142 = vmatpush.bf16.msra.mxu0 0
  %143 = vmatpush.bf16.msra.mxu0 0
  %144 = vmatpush.bf16.msra.mxu0 0
  %145 = vmatpush.bf16.msra.mxu0 0
  %146 = vmatpush.bf16.msra.mxu0 %v137
  %147 = vmatpush.bf16.msra.mxu0 %v136
  %148 = vmatmul.bf16.gmra.mxu0 %v83
  %v149 = vpop.f32.mrf.mxu0
  %v150 = vadd.f32 %v125, %v149
  %v151 = vpop.f32.mrf.mxu0
  %152 = vdwg.mxu0
  %s153 = scalar_lea.vmem %s3, 32
  %v154 = vld [vmem:[%s153] sm:$0xf]
  %v155 = vld [vmem:[%s153 + $0x4] sm:$0xf]
  %v156 = vld [vmem:[%s153 + $0x8] sm:$0xf]
  %v157 = vld [vmem:[%s153 + $0xc] sm:$0xf]
  %v162 = vunpack.c.l.b16 %v154
  %v163 = vunpack.c.l.b16 %v155
  %v164 = vunpack.c.l.b16 %v156
  %v165 = vunpack.c.l.b16 %v157
  %v166 = vpack.c.b16 %v163, %v162
  %v167 = vpack.c.b16 %v165, %v164
  %170 = vmatpush.bf16.msra.mxu0 0
  %171 = vmatpush.bf16.msra.mxu0 0
  %172 = vmatpush.bf16.msra.mxu0 0
  %173 = vmatpush.bf16.msra.mxu0 0
  %174 = vmatpush.bf16.msra.mxu0 0
  %175 = vmatpush.bf16.msra.mxu0 0
  %176 = vmatpush.bf16.msra.mxu0 %v167
  %177 = vmatpush.bf16.msra.mxu0 %v166
  %178 = vmatmul.bf16.gmra.mxu0 %v55
  %v179 = vpop.f32.mrf.mxu0
  %v180 = vadd.f32 0.0, %v179
  %v181 = vpop.f32.mrf.mxu0
  %182 = vdwg.mxu0
  %v187 = vunpack.c.l.b16 %v33
  %v188 = vunpack.c.l.b16 %v34
  %v189 = vunpack.c.l.b16 %v35
  %v190 = vunpack.c.l.b16 %v36
  %v191 = vpack.c.b16 %v188, %v187
  %v192 = vpack.c.b16 %v190, %v189
  %195 = vmatpush.bf16.msra.mxu0 0
  %196 = vmatpush.bf16.msra.mxu0 0
  %197 = vmatpush.bf16.msra.mxu0 0
  %198 = vmatpush.bf16.msra.mxu0 0
  %199 = vmatpush.bf16.msra.mxu0 0
  %200 = vmatpush.bf16.msra.mxu0 0
  %201 = vmatpush.bf16.msra.mxu0 %v192
  %202 = vmatpush.bf16.msra.mxu0 %v191
  %203 = vmatmul.bf16.gmra.mxu0 %v83
  %v204 = vpop.f32.mrf.mxu0
  %v205 = vadd.f32 %v180, %v204
  %v206 = vpop.f32.mrf.mxu0
  %207 = vdwg.mxu0
  %v209 = vrot.slane %v95, 7
  %vm211 = vcmask 1040384
  %v212 = vsel %vm211, 0.0, %v209
  %v213 = vadd.f32 %v150, %v212
  %v215 = vrot.slane %v205, 1
  %vm217 = vcmask 1042432
  %v218 = vsel %vm217, %v215, 0.0
  %v219 = vadd.f32 %v213, %v218
  %v220 = vrot.slane %v95, 3
  %v222 = vsel %vm211, 0.0, %v220
  %v224 = vrot.slane %v222, 4
  %v226 = vadd.f32 %v150, %v224
  %v227 = vrot.slane %v205, 5
  %v229 = vsel %vm217, %v227, 0.0
  %v231 = vrot.slane %v229, 4
  %v233 = vadd.f32 %v226, %v231
  %vm234 = vcmask 1043456
  %v235 = vsel %vm234, %v219, %v233
  %v236 = vld [vmem:[%s4] sm:$0x1]
  %v238 = vperm.slane %v236, 0
  %v240 = vadd.f32 %v235, %v238
  %v241 = vmax.f32 %v240, 0.0
  %v242 = vpack.c.bf16 %v241, %v241
  %vm243 = vcmask 257024
  %244 = vst.msk [vmem:[%s5] sm:$0xf] %vm243, %v242
  // Predicated region
  $region22: #{_lambda_.17} parent=0 // pred_check
    _
  $region23: #{_lambda_.17} parent=0 // pred_check_branch
    %246 = sbr.rel (0) target = $region25
  $region24: #{_lambda_.17} parent=0 // pred_region
    _
  $region25: #{_lambda_.17} parent=0 // pred_fallthru
    _
  // Predicated region
  $region26: #{_lambda_.17} parent=0 // pred_check
    _
  $region27: #{_lambda_.17} parent=0 // pred_check_branch
    %248 = sbr.rel (0) target = $region29
  $region28: #{_lambda_.17} parent=0 // pred_region
    _
  $region29: #{_lambda_.17} parent=0 // pred_fallthru
    _

// kernel: _lambda_.18
$region0: #{_lambda_.18}
  #allocation0 [shape = 'u32[]', space=smem, size = 0x4, offset = 0x4, fixed_abs, tag = 'smem constant byte address 0x4 - core index']
  #allocation1 [shape = 'u32[72,128]{1,0:T(1,128)}', space=vmem, size = 0x9000, scoped, tag = 'internal scratch']
  %s0 = inlined_call_operand.vmem [shape: bf16[16,64], index: 0, kind: input, shape index: {}]
  %s1 = inlined_call_operand.vmem [shape: bf16[16,64], index: 1, kind: input, shape index: {}]
  %s2 = inlined_call_operand.vmem [shape: bf16[3,64,64], index: 2, kind: input, shape index: {}]
  %s3 = inlined_call_operand.vmem [shape: bf16[3,64,64], index: 3, kind: input, shape index: {}]
  %s4 = inlined_call_operand.vmem [shape: f32[1,64], index: 4, kind: input, shape index: {}]
  %s5 = inlined_call_operand.vmem [shape: bf16[16,64], index: 5, kind: output, shape index: {}]
  %s6 = sld [smem:[#allocation0]]
  $region30: #{_lambda_.18} parent=0
    _
  %s8 = ssub.s32 1, %s6
  %s9 = scalar_select 0, %s8, %s6
  // Predicated region
  $region2: #{_lambda_.18} parent=0 // pred_check
    _
  $region3: #{_lambda_.18} parent=0 // pred_check_branch
    %11 = sbr.rel (0) target = $region5
  $region4: #{_lambda_.18} parent=0 // pred_region
    _
  $region5: #{_lambda_.18} parent=0 // pred_fallthru
    _
  // Predicated region
  $region6: #{_lambda_.18} parent=0 // pred_check
    _
  $region7: #{_lambda_.18} parent=0 // pred_check_branch
    %13 = sbr.rel (0) target = $region9
  $region8: #{_lambda_.18} parent=0 // pred_region
    _
  $region9: #{_lambda_.18} parent=0 // pred_fallthru
    _
  // Predicated region
  $region10: #{_lambda_.18} parent=0 // pred_check
    _
  $region11: #{_lambda_.18} parent=0 // pred_check_branch
    %15 = sbr.rel (0) target = $region13
  $region12: #{_lambda_.18} parent=0 // pred_region
    _
  $region13: #{_lambda_.18} parent=0 // pred_fallthru
    _
  // Predicated region
  $region14: #{_lambda_.18} parent=0 // pred_check
    _
  $region15: #{_lambda_.18} parent=0 // pred_check_branch
    %17 = sbr.rel (0) target = $region17
  $region16: #{_lambda_.18} parent=0 // pred_region
    _
  $region17: #{_lambda_.18} parent=0 // pred_fallthru
    _
  // Predicated region
  $region18: #{_lambda_.18} parent=0 // pred_check
    _
  $region19: #{_lambda_.18} parent=0 // pred_check_branch
    %19 = sbr.rel (0) target = $region21
  $region20: #{_lambda_.18} parent=0 // pred_region
    _
  $region21: #{_lambda_.18} parent=0 // pred_fallthru
    _
  %v21 = vld [vmem:[%s0] sm:$0xf]
  %v22 = vld [vmem:[%s0 + $0x4] sm:$0xf]
  %v23 = vld [vmem:[%s1] sm:$0xf]
  %v24 = vld [vmem:[%s1 + $0x4] sm:$0xf]
  %v25 = vld [vmem:[%s2] sm:$0xf]
  %v26 = vld [vmem:[%s2 + $0x4] sm:$0xf]
  %v27 = vld [vmem:[%s2 + $0x8] sm:$0xf]
  %v28 = vld [vmem:[%s2 + $0xc] sm:$0xf]
  %v29 = vld [vmem:[%s2 + $0x10] sm:$0xf]
  %v30 = vld [vmem:[%s2 + $0x14] sm:$0xf]
  %v31 = vld [vmem:[%s2 + $0x18] sm:$0xf]
  %v32 = vld [vmem:[%s2 + $0x1c] sm:$0xf]
  %s33 = scalar_lea.vmem %s2, 32
  %v34 = vld [vmem:[%s33] sm:$0xf]
  %v35 = vld [vmem:[%s33 + $0x4] sm:$0xf]
  %v36 = vld [vmem:[%s33 + $0x8] sm:$0xf]
  %v37 = vld [vmem:[%s33 + $0xc] sm:$0xf]
  %v38 = vld [vmem:[%s33 + $0x10] sm:$0xf]
  %v39 = vld [vmem:[%s33 + $0x14] sm:$0xf]
  %v40 = vld [vmem:[%s33 + $0x18] sm:$0xf]
  %v41 = vld [vmem:[%s33 + $0x1c] sm:$0xf]
  %s42 = scalar_lea.vmem %s2, 64
  %v43 = vld [vmem:[%s42] sm:$0xf]
  %v44 = vld [vmem:[%s42 + $0x4] sm:$0xf]
  %v45 = vld [vmem:[%s42 + $0x8] sm:$0xf]
  %v46 = vld [vmem:[%s42 + $0xc] sm:$0xf]
  %v47 = vld [vmem:[%s42 + $0x10] sm:$0xf]
  %v48 = vld [vmem:[%s42 + $0x14] sm:$0xf]
  %v49 = vld [vmem:[%s42 + $0x18] sm:$0xf]
  %v50 = vld [vmem:[%s42 + $0x1c] sm:$0xf]
  %v51 = vld [vmem:[%s3] sm:$0xf]
  %v52 = vld [vmem:[%s3 + $0x4] sm:$0xf]
  %v53 = vld [vmem:[%s3 + $0x8] sm:$0xf]
  %v54 = vld [vmem:[%s3 + $0xc] sm:$0xf]
  %v55 = vld [vmem:[%s3 + $0x10] sm:$0xf]
  %v56 = vld [vmem:[%s3 + $0x14] sm:$0xf]
  %v57 = vld [vmem:[%s3 + $0x18] sm:$0xf]
  %v58 = vld [vmem:[%s3 + $0x1c] sm:$0xf]
  %v61 = vunpack.c.l.b16 %v23
  %v62 = vunpack.c.l.b16 %v24
  %v63 = vpack.c.b16 %v62, %v61
  %v72 = vunpack.c.l.b16 %v51
  %v73 = vunpack.c.l.b16 %v52
  %v74 = vunpack.c.l.b16 %v53
  %v75 = vunpack.c.l.b16 %v54
  %v76 = vunpack.c.l.b16 %v55
  %v77 = vunpack.c.l.b16 %v56
  %v78 = vunpack.c.l.b16 %v57
  %v79 = vunpack.c.l.b16 %v58
  %v80 = vpack.c.b16 %v73, %v72
  %v81 = vpack.c.b16 %v75, %v74
  %v82 = vpack.c.b16 %v77, %v76
  %v83 = vpack.c.b16 %v79, %v78
  %vm88 = vcmask 523264
  %v90 = vsel %vm88, %v63, 0
  %92 = vmatpush.bf16.msra.mxu0 0
  %93 = vmatpush.bf16.msra.mxu0 0
  %94 = vmatpush.bf16.msra.mxu0 0
  %95 = vmatpush.bf16.msra.mxu0 0
  %96 = vmatpush.bf16.msra.mxu0 %v83
  %97 = vmatpush.bf16.msra.mxu0 %v82
  %98 = vmatpush.bf16.msra.mxu0 %v81
  %99 = vmatpush.bf16.msra.mxu0 %v80
  %100 = vmatmul.bf16.gmra.mxu0 %v90
  %v101 = vpop.f32.mrf.mxu0
  %v102 = vadd.f32 0.0, %v101
  %v103 = vpop.f32.mrf.mxu0
  %v104 = vadd.f32 0.0, %v103
  %105 = vdwg.mxu0
  %v108 = vunpack.c.l.b16 %v21
  %v109 = vunpack.c.l.b16 %v22
  %v110 = vpack.c.b16 %v109, %v108
  %v119 = vunpack.c.l.b16 %v25
  %v120 = vunpack.c.l.b16 %v26
  %v121 = vunpack.c.l.b16 %v27
  %v122 = vunpack.c.l.b16 %v28
  %v123 = vunpack.c.l.b16 %v29
  %v124 = vunpack.c.l.b16 %v30
  %v125 = vunpack.c.l.b16 %v31
  %v126 = vunpack.c.l.b16 %v32
  %v127 = vpack.c.b16 %v120, %v119
  %v128 = vpack.c.b16 %v122, %v121
  %v129 = vpack.c.b16 %v124, %v123
  %v130 = vpack.c.b16 %v126, %v125
  %v136 = vsel %vm88, %v110, 0
  %138 = vmatpush.bf16.msra.mxu0 0
  %139 = vmatpush.bf16.msra.mxu0 0
  %140 = vmatpush.bf16.msra.mxu0 0
  %141 = vmatpush.bf16.msra.mxu0 0
  %142 = vmatpush.bf16.msra.mxu0 %v130
  %143 = vmatpush.bf16.msra.mxu0 %v129
  %144 = vmatpush.bf16.msra.mxu0 %v128
  %145 = vmatpush.bf16.msra.mxu0 %v127
  %146 = vmatmul.bf16.gmra.mxu0 %v136
  %v147 = vpop.f32.mrf.mxu0
  %v148 = vadd.f32 %v102, %v147
  %v149 = vpop.f32.mrf.mxu0
  %v150 = vadd.f32 %v104, %v149
  %151 = vdwg.mxu0
  %s152 = scalar_lea.vmem %s3, 32
  %v153 = vld [vmem:[%s152] sm:$0xf]
  %v154 = vld [vmem:[%s152 + $0x4] sm:$0xf]
  %v155 = vld [vmem:[%s152 + $0x8] sm:$0xf]
  %v156 = vld [vmem:[%s152 + $0xc] sm:$0xf]
  %v157 = vld [vmem:[%s152 + $0x10] sm:$0xf]
  %v158 = vld [vmem:[%s152 + $0x14] sm:$0xf]
  %v159 = vld [vmem:[%s152 + $0x18] sm:$0xf]
  %v160 = vld [vmem:[%s152 + $0x1c] sm:$0xf]
  %v169 = vunpack.c.l.b16 %v153
  %v170 = vunpack.c.l.b16 %v154
  %v171 = vunpack.c.l.b16 %v155
  %v172 = vunpack.c.l.b16 %v156
  %v173 = vunpack.c.l.b16 %v157
  %v174 = vunpack.c.l.b16 %v158
  %v175 = vunpack.c.l.b16 %v159
  %v176 = vunpack.c.l.b16 %v160
  %v177 = vpack.c.b16 %v170, %v169
  %v178 = vpack.c.b16 %v172, %v171
  %v179 = vpack.c.b16 %v174, %v173
  %v180 = vpack.c.b16 %v176, %v175
  %185 = vmatpush.bf16.msra.mxu0 0
  %186 = vmatpush.bf16.msra.mxu0 0
  %187 = vmatpush.bf16.msra.mxu0 0
  %188 = vmatpush.bf16.msra.mxu0 0
  %189 = vmatpush.bf16.msra.mxu0 %v180
  %190 = vmatpush.bf16.msra.mxu0 %v179
  %191 = vmatpush.bf16.msra.mxu0 %v178
  %192 = vmatpush.bf16.msra.mxu0 %v177
  %193 = vmatmul.bf16.gmra.mxu0 %v90
  %v194 = vpop.f32.mrf.mxu0
  %v195 = vadd.f32 0.0, %v194
  %v196 = vpop.f32.mrf.mxu0
  %v197 = vadd.f32 0.0, %v196
  %198 = vdwg.mxu0
  %v207 = vunpack.c.l.b16 %v34
  %v208 = vunpack.c.l.b16 %v35
  %v209 = vunpack.c.l.b16 %v36
  %v210 = vunpack.c.l.b16 %v37
  %v211 = vunpack.c.l.b16 %v38
  %v212 = vunpack.c.l.b16 %v39
  %v213 = vunpack.c.l.b16 %v40
  %v214 = vunpack.c.l.b16 %v41
  %v215 = vpack.c.b16 %v208, %v207
  %v216 = vpack.c.b16 %v210, %v209
  %v217 = vpack.c.b16 %v212, %v211
  %v218 = vpack.c.b16 %v214, %v213
  %223 = vmatpush.bf16.msra.mxu0 0
  %224 = vmatpush.bf16.msra.mxu0 0
  %225 = vmatpush.bf16.msra.mxu0 0
  %226 = vmatpush.bf16.msra.mxu0 0
  %227 = vmatpush.bf16.msra.mxu0 %v218
  %228 = vmatpush.bf16.msra.mxu0 %v217
  %229 = vmatpush.bf16.msra.mxu0 %v216
  %230 = vmatpush.bf16.msra.mxu0 %v215
  %231 = vmatmul.bf16.gmra.mxu0 %v136
  %v232 = vpop.f32.mrf.mxu0
  %v233 = vadd.f32 %v195, %v232
  %v234 = vpop.f32.mrf.mxu0
  %v235 = vadd.f32 %v197, %v234
  %236 = vdwg.mxu0
  %s237 = scalar_lea.vmem %s3, 64
  %v238 = vld [vmem:[%s237] sm:$0xf]
  %v239 = vld [vmem:[%s237 + $0x4] sm:$0xf]
  %v240 = vld [vmem:[%s237 + $0x8] sm:$0xf]
  %v241 = vld [vmem:[%s237 + $0xc] sm:$0xf]
  %v242 = vld [vmem:[%s237 + $0x10] sm:$0xf]
  %v243 = vld [vmem:[%s237 + $0x14] sm:$0xf]
  %v244 = vld [vmem:[%s237 + $0x18] sm:$0xf]
  %v245 = vld [vmem:[%s237 + $0x1c] sm:$0xf]
  %v254 = vunpack.c.l.b16 %v238
  %v255 = vunpack.c.l.b16 %v239
  %v256 = vunpack.c.l.b16 %v240
  %v257 = vunpack.c.l.b16 %v241
  %v258 = vunpack.c.l.b16 %v242
  %v259 = vunpack.c.l.b16 %v243
  %v260 = vunpack.c.l.b16 %v244
  %v261 = vunpack.c.l.b16 %v245
  %v262 = vpack.c.b16 %v255, %v254
  %v263 = vpack.c.b16 %v257, %v256
  %v264 = vpack.c.b16 %v259, %v258
  %v265 = vpack.c.b16 %v261, %v260
  %270 = vmatpush.bf16.msra.mxu0 0
  %271 = vmatpush.bf16.msra.mxu0 0
  %272 = vmatpush.bf16.msra.mxu0 0
  %273 = vmatpush.bf16.msra.mxu0 0
  %274 = vmatpush.bf16.msra.mxu0 %v265
  %275 = vmatpush.bf16.msra.mxu0 %v264
  %276 = vmatpush.bf16.msra.mxu0 %v263
  %277 = vmatpush.bf16.msra.mxu0 %v262
  %278 = vmatmul.bf16.gmra.mxu0 %v90
  %v279 = vpop.f32.mrf.mxu0
  %v280 = vadd.f32 0.0, %v279
  %v281 = vpop.f32.mrf.mxu0
  %v282 = vadd.f32 0.0, %v281
  %283 = vdwg.mxu0
  %v292 = vunpack.c.l.b16 %v43
  %v293 = vunpack.c.l.b16 %v44
  %v294 = vunpack.c.l.b16 %v45
  %v295 = vunpack.c.l.b16 %v46
  %v296 = vunpack.c.l.b16 %v47
  %v297 = vunpack.c.l.b16 %v48
  %v298 = vunpack.c.l.b16 %v49
  %v299 = vunpack.c.l.b16 %v50
  %v300 = vpack.c.b16 %v293, %v292
  %v301 = vpack.c.b16 %v295, %v294
  %v302 = vpack.c.b16 %v297, %v296
  %v303 = vpack.c.b16 %v299, %v298
  %308 = vmatpush.bf16.msra.mxu0 0
  %309 = vmatpush.bf16.msra.mxu0 0
  %310 = vmatpush.bf16.msra.mxu0 0
  %311 = vmatpush.bf16.msra.mxu0 0
  %312 = vmatpush.bf16.msra.mxu0 %v303
  %313 = vmatpush.bf16.msra.mxu0 %v302
  %314 = vmatpush.bf16.msra.mxu0 %v301
  %315 = vmatpush.bf16.msra.mxu0 %v300
  %316 = vmatmul.bf16.gmra.mxu0 %v136
  %v317 = vpop.f32.mrf.mxu0
  %v318 = vadd.f32 %v280, %v317
  %v319 = vpop.f32.mrf.mxu0
  %v320 = vadd.f32 %v282, %v319
  %321 = vdwg.mxu0
  %v323 = vrot.slane %v148, 7
  %vm325 = vcmask 1040384
  %v326 = vsel %vm325, 0.0, %v323
  %v327 = vadd.f32 %v233, %v326
  %v329 = vrot.slane %v318, 1
  %vm331 = vcmask 1046528
  %v332 = vsel %vm331, %v329, 0.0
  %v333 = vadd.f32 %v327, %v332
  %v335 = vrot.slane %v150, 7
  %v337 = vsel %vm325, 0.0, %v335
  %v338 = vadd.f32 %v235, %v337
  %v340 = vrot.slane %v320, 1
  %v342 = vsel %vm331, %v340, 0.0
  %v343 = vadd.f32 %v338, %v342
  %v344 = vld [vmem:[%s4] sm:$0x1]
  %v346 = vperm.slane %v344, 0
  %v348 = vadd.f32 %v333, %v346
  %v349 = vadd.f32 %v343, %v346
  %v350 = vmax.f32 %v348, 0.0
  %v351 = vmax.f32 %v349, 0.0
  %v352 = vpack.c.bf16 %v350, %v350
  %v353 = vpack.c.bf16 %v351, %v351
  %vm354 = vcmask 519168
  %355 = vst.msk [vmem:[%s5] sm:$0xf] %vm354, %v352
  %356 = vst.msk [vmem:[%s5 + $0x4] sm:$0xf] %vm354, %v353
  // Predicated region
  $region22: #{_lambda_.18} parent=0 // pred_check
    _
  $region23: #{_lambda_.18} parent=0 // pred_check_branch
    %358 = sbr.rel (0) target = $region25
  $region24: #{_lambda_.18} parent=0 // pred_region
    _
  $region25: #{_lambda_.18} parent=0 // pred_fallthru
    _
  // Predicated region
  $region26: #{_lambda_.18} parent=0 // pred_check
    _
  $region27: #{_lambda_.18} parent=0 // pred_check_branch
    %360 = sbr.rel (0) target = $region29
  $region28: #{_lambda_.18} parent=0 // pred_region
    _
  $region29: #{_lambda_.18} parent=0 // pred_fallthru
    _

// kernel: _lambda_.19
$region0: #{_lambda_.19}
  #allocation0 [shape = 'u32[]', space=smem, size = 0x4, offset = 0x4, fixed_abs, tag = 'smem constant byte address 0x4 - core index']
  #allocation1 [shape = 'u32[72,128]{1,0:T(1,128)}', space=vmem, size = 0x9000, scoped, tag = 'internal scratch']
  %s0 = inlined_call_operand.vmem [shape: bf16[32,128], index: 0, kind: input, shape index: {}]
  %s1 = inlined_call_operand.vmem [shape: bf16[32,128], index: 1, kind: input, shape index: {}]
  %s2 = inlined_call_operand.vmem [shape: bf16[32,64], index: 2, kind: input, shape index: {}]
  %s3 = inlined_call_operand.vmem [shape: bf16[3,256,64], index: 3, kind: input, shape index: {}]
  %s4 = inlined_call_operand.vmem [shape: f32[1,64], index: 4, kind: input, shape index: {}]
  %s5 = inlined_call_operand.vmem [shape: bf16[32,64], index: 5, kind: output, shape index: {}]
  %s6 = sld [smem:[#allocation0]]
  $region30: #{_lambda_.19} parent=0
    _
  %s8 = ssub.s32 1, %s6
  %s9 = scalar_select 0, %s8, %s6
  // Predicated region
  $region2: #{_lambda_.19} parent=0 // pred_check
    _
  $region3: #{_lambda_.19} parent=0 // pred_check_branch
    %11 = sbr.rel (0) target = $region5
  $region4: #{_lambda_.19} parent=0 // pred_region
    _
  $region5: #{_lambda_.19} parent=0 // pred_fallthru
    _
  // Predicated region
  $region6: #{_lambda_.19} parent=0 // pred_check
    _
  $region7: #{_lambda_.19} parent=0 // pred_check_branch
    %13 = sbr.rel (0) target = $region9
  $region8: #{_lambda_.19} parent=0 // pred_region
    _
  $region9: #{_lambda_.19} parent=0 // pred_fallthru
    _
  // Predicated region
  $region10: #{_lambda_.19} parent=0 // pred_check
    _
  $region11: #{_lambda_.19} parent=0 // pred_check_branch
    %15 = sbr.rel (0) target = $region13
  $region12: #{_lambda_.19} parent=0 // pred_region
    _
  $region13: #{_lambda_.19} parent=0 // pred_fallthru
    _
  // Predicated region
  $region14: #{_lambda_.19} parent=0 // pred_check
    _
  $region15: #{_lambda_.19} parent=0 // pred_check_branch
    %17 = sbr.rel (0) target = $region17
  $region16: #{_lambda_.19} parent=0 // pred_region
    _
  $region17: #{_lambda_.19} parent=0 // pred_fallthru
    _
  // Predicated region
  $region18: #{_lambda_.19} parent=0 // pred_check
    _
  $region19: #{_lambda_.19} parent=0 // pred_check_branch
    %19 = sbr.rel (0) target = $region21
  $region20: #{_lambda_.19} parent=0 // pred_region
    _
  $region21: #{_lambda_.19} parent=0 // pred_fallthru
    _
  %v20 = vld [vmem:[%s0] sm:$0xf]
  %v21 = vld [vmem:[%s0 + $0x4] sm:$0xf]
  %v22 = vld [vmem:[%s0 + $0x8] sm:$0xf]
  %v23 = vld [vmem:[%s0 + $0xc] sm:$0xf]
  %v24 = vld [vmem:[%s1] sm:$0xf]
  %v25 = vld [vmem:[%s1 + $0x4] sm:$0xf]
  %v26 = vld [vmem:[%s1 + $0x8] sm:$0xf]
  %v27 = vld [vmem:[%s1 + $0xc] sm:$0xf]
  %v32 = vunpack.c.l.b16 %v20
  %v33 = vunpack.c.l.b16 %v21
  %v34 = vunpack.c.l.b16 %v22
  %v35 = vunpack.c.l.b16 %v23
  %v36 = vpack.c.b16 %v33, %v32
  %v37 = vpack.c.b16 %v35, %v34
  %v44 = vunpack.c.l.b16 %v24
  %v45 = vunpack.c.l.b16 %v25
  %v46 = vunpack.c.l.b16 %v26
  %v47 = vunpack.c.l.b16 %v27
  %v48 = vpack.c.b16 %v45, %v44
  %v49 = vpack.c.b16 %v47, %v46
  %v52 = vld [vmem:[%s3] sm:$0xf]
  %v53 = vld [vmem:[%s3 + $0x4] sm:$0xf]
  %v54 = vld [vmem:[%s3 + $0x8] sm:$0xf]
  %v55 = vld [vmem:[%s3 + $0xc] sm:$0xf]
  %v56 = vld [vmem:[%s3 + $0x10] sm:$0xf]
  %v57 = vld [vmem:[%s3 + $0x14] sm:$0xf]
  %v58 = vld [vmem:[%s3 + $0x18] sm:$0xf]
  %v59 = vld [vmem:[%s3 + $0x1c] sm:$0xf]
  %v60 = vld [vmem:[%s3 + $0x20] sm:$0xf]
  %v61 = vld [vmem:[%s3 + $0x24] sm:$0xf]
  %v62 = vld [vmem:[%s3 + $0x28] sm:$0xf]
  %v63 = vld [vmem:[%s3 + $0x2c] sm:$0xf]
  %v64 = vld [vmem:[%s3 + $0x30] sm:$0xf]
  %v65 = vld [vmem:[%s3 + $0x34] sm:$0xf]
  %v66 = vld [vmem:[%s3 + $0x38] sm:$0xf]
  %v67 = vld [vmem:[%s3 + $0x3c] sm:$0xf]
  %v68 = vld [vmem:[%s3 + $0x40] sm:$0xf]
  %v69 = vld [vmem:[%s3 + $0x44] sm:$0xf]
  %v70 = vld [vmem:[%s3 + $0x48] sm:$0xf]
  %v71 = vld [vmem:[%s3 + $0x4c] sm:$0xf]
  %v72 = vld [vmem:[%s3 + $0x50] sm:$0xf]
  %v73 = vld [vmem:[%s3 + $0x54] sm:$0xf]
  %v74 = vld [vmem:[%s3 + $0x58] sm:$0xf]
  %v75 = vld [vmem:[%s3 + $0x5c] sm:$0xf]
  %v76 = vld [vmem:[%s3 + $0x60] sm:$0xf]
  %v77 = vld [vmem:[%s3 + $0x64] sm:$0xf]
  %v78 = vld [vmem:[%s3 + $0x68] sm:$0xf]
  %v79 = vld [vmem:[%s3 + $0x6c] sm:$0xf]
  %v80 = vld [vmem:[%s3 + $0x70] sm:$0xf]
  %v81 = vld [vmem:[%s3 + $0x74] sm:$0xf]
  %v82 = vld [vmem:[%s3 + $0x78] sm:$0xf]
  %v83 = vld [vmem:[%s3 + $0x7c] sm:$0xf]
  %v116 = vunpack.c.l.b16 %v52
  %v117 = vunpack.c.l.b16 %v53
  %v118 = vunpack.c.l.b16 %v54
  %v119 = vunpack.c.l.b16 %v55
  %v120 = vunpack.c.l.b16 %v56
  %v121 = vunpack.c.l.b16 %v57
  %v122 = vunpack.c.l.b16 %v58
  %v123 = vunpack.c.l.b16 %v59
  %v124 = vunpack.c.l.b16 %v60
  %v125 = vunpack.c.l.b16 %v61
  %v126 = vunpack.c.l.b16 %v62
  %v127 = vunpack.c.l.b16 %v63
  %v128 = vunpack.c.l.b16 %v64
  %v129 = vunpack.c.l.b16 %v65
  %v130 = vunpack.c.l.b16 %v66
  %v131 = vunpack.c.l.b16 %v67
  %v132 = vunpack.c.l.b16 %v68
  %v133 = vunpack.c.l.b16 %v69
  %v134 = vunpack.c.l.b16 %v70
  %v135 = vunpack.c.l.b16 %v71
  %v136 = vunpack.c.l.b16 %v72
  %v137 = vunpack.c.l.b16 %v73
  %v138 = vunpack.c.l.b16 %v74
  %v139 = vunpack.c.l.b16 %v75
  %v140 = vunpack.c.l.b16 %v76
  %v141 = vunpack.c.l.b16 %v77
  %v142 = vunpack.c.l.b16 %v78
  %v143 = vunpack.c.l.b16 %v79
  %v144 = vunpack.c.l.b16 %v80
  %v145 = vunpack.c.l.b16 %v81
  %v146 = vunpack.c.l.b16 %v82
  %v147 = vunpack.c.l.b16 %v83
  %v148 = vpack.c.b16 %v117, %v116
  %v149 = vpack.c.b16 %v119, %v118
  %v150 = vpack.c.b16 %v121, %v120
  %v151 = vpack.c.b16 %v123, %v122
  %v152 = vpack.c.b16 %v125, %v124
  %v153 = vpack.c.b16 %v127, %v126
  %v154 = vpack.c.b16 %v129, %v128
  %v155 = vpack.c.b16 %v131, %v130
  %v156 = vpack.c.b16 %v133, %v132
  %v157 = vpack.c.b16 %v135, %v134
  %v158 = vpack.c.b16 %v137, %v136
  %v159 = vpack.c.b16 %v139, %v138
  %v160 = vpack.c.b16 %v141, %v140
  %v161 = vpack.c.b16 %v143, %v142
  %v162 = vpack.c.b16 %v145, %v144
  %v163 = vpack.c.b16 %v147, %v146
  %180 = vmatpush.bf16.msra.mxu0 %v155
  %181 = vmatpush.bf16.msra.mxu0 %v154
  %182 = vmatpush.bf16.msra.mxu0 %v153
  %183 = vmatpush.bf16.msra.mxu0 %v152
  %184 = vmatpush.bf16.msra.mxu0 %v151
  %185 = vmatpush.bf16.msra.mxu0 %v150
  %186 = vmatpush.bf16.msra.mxu0 %v149
  %187 = vmatpush.bf16.msra.mxu0 %v148
  %188 = vmatmul.bf16.gmra.mxu0 %v36
  %v189 = vpop.f32.mrf.mxu0
  %v190 = vadd.f32 0.0, %v189
  %v191 = vpop.f32.mrf.mxu0
  %v192 = vadd.f32 0.0, %v191
  %193 = vmatmul.bf16.gmra.mxu0 %v37
  %v194 = vpop.f32.mrf.mxu0
  %v195 = vadd.f32 0.0, %v194
  %v196 = vpop.f32.mrf.mxu0
  %v197 = vadd.f32 0.0, %v196
  %198 = vdwg.mxu0
  %199 = vmatpush.bf16.msra.mxu0 %v163
  %200 = vmatpush.bf16.msra.mxu0 %v162
  %201 = vmatpush.bf16.msra.mxu0 %v161
  %202 = vmatpush.bf16.msra.mxu0 %v160
  %203 = vmatpush.bf16.msra.mxu0 %v159
  %204 = vmatpush.bf16.msra.mxu0 %v158
  %205 = vmatpush.bf16.msra.mxu0 %v157
  %206 = vmatpush.bf16.msra.mxu0 %v156
  %207 = vmatmul.bf16.gmra.mxu0 %v48
  %v208 = vpop.f32.mrf.mxu0
  %v209 = vadd.f32 %v190, %v208
  %v210 = vpop.f32.mrf.mxu0
  %v211 = vadd.f32 %v192, %v210
  %212 = vmatmul.bf16.gmra.mxu0 %v49
  %v213 = vpop.f32.mrf.mxu0
  %v214 = vadd.f32 %v195, %v213
  %v215 = vpop.f32.mrf.mxu0
  %v216 = vadd.f32 %v197, %v215
  %217 = vdwg.mxu0
  %s218 = scalar_lea.vmem %s3, 128
  %v219 = vld [vmem:[%s218] sm:$0xf]
  %v220 = vld [vmem:[%s218 + $0x4] sm:$0xf]
  %v221 = vld [vmem:[%s218 + $0x8] sm:$0xf]
  %v222 = vld [vmem:[%s218 + $0xc] sm:$0xf]
  %v223 = vld [vmem:[%s218 + $0x10] sm:$0xf]
  %v224 = vld [vmem:[%s218 + $0x14] sm:$0xf]
  %v225 = vld [vmem:[%s218 + $0x18] sm:$0xf]
  %v226 = vld [vmem:[%s218 + $0x1c] sm:$0xf]
  %v227 = vld [vmem:[%s218 + $0x20] sm:$0xf]
  %v228 = vld [vmem:[%s218 + $0x24] sm:$0xf]
  %v229 = vld [vmem:[%s218 + $0x28] sm:$0xf]
  %v230 = vld [vmem:[%s218 + $0x2c] sm:$0xf]
  %v231 = vld [vmem:[%s218 + $0x30] sm:$0xf]
  %v232 = vld [vmem:[%s218 + $0x34] sm:$0xf]
  %v233 = vld [vmem:[%s218 + $0x38] sm:$0xf]
  %v234 = vld [vmem:[%s218 + $0x3c] sm:$0xf]
  %v235 = vld [vmem:[%s218 + $0x40] sm:$0xf]
  %v236 = vld [vmem:[%s218 + $0x44] sm:$0xf]
  %v237 = vld [vmem:[%s218 + $0x48] sm:$0xf]
  %v238 = vld [vmem:[%s218 + $0x4c] sm:$0xf]
  %v239 = vld [vmem:[%s218 + $0x50] sm:$0xf]
  %v240 = vld [vmem:[%s218 + $0x54] sm:$0xf]
  %v241 = vld [vmem:[%s218 + $0x58] sm:$0xf]
  %v242 = vld [vmem:[%s218 + $0x5c] sm:$0xf]
  %v243 = vld [vmem:[%s218 + $0x60] sm:$0xf]
  %v244 = vld [vmem:[%s218 + $0x64] sm:$0xf]
  %v245 = vld [vmem:[%s218 + $0x68] sm:$0xf]
  %v246 = vld [vmem:[%s218 + $0x6c] sm:$0xf]
  %v247 = vld [vmem:[%s218 + $0x70] sm:$0xf]
  %v248 = vld [vmem:[%s218 + $0x74] sm:$0xf]
  %v249 = vld [vmem:[%s218 + $0x78] sm:$0xf]
  %v250 = vld [vmem:[%s218 + $0x7c] sm:$0xf]
  %v283 = vunpack.c.l.b16 %v219
  %v284 = vunpack.c.l.b16 %v220
  %v285 = vunpack.c.l.b16 %v221
  %v286 = vunpack.c.l.b16 %v222
  %v287 = vunpack.c.l.b16 %v223
  %v288 = vunpack.c.l.b16 %v224
  %v289 = vunpack.c.l.b16 %v225
  %v290 = vunpack.c.l.b16 %v226
  %v291 = vunpack.c.l.b16 %v227
  %v292 = vunpack.c.l.b16 %v228
  %v293 = vunpack.c.l.b16 %v229
  %v294 = vunpack.c.l.b16 %v230
  %v295 = vunpack.c.l.b16 %v231
  %v296 = vunpack.c.l.b16 %v232
  %v297 = vunpack.c.l.b16 %v233
  %v298 = vunpack.c.l.b16 %v234
  %v299 = vunpack.c.l.b16 %v235
  %v300 = vunpack.c.l.b16 %v236
  %v301 = vunpack.c.l.b16 %v237
  %v302 = vunpack.c.l.b16 %v238
  %v303 = vunpack.c.l.b16 %v239
  %v304 = vunpack.c.l.b16 %v240
  %v305 = vunpack.c.l.b16 %v241
  %v306 = vunpack.c.l.b16 %v242
  %v307 = vunpack.c.l.b16 %v243
  %v308 = vunpack.c.l.b16 %v244
  %v309 = vunpack.c.l.b16 %v245
  %v310 = vunpack.c.l.b16 %v246
  %v311 = vunpack.c.l.b16 %v247
  %v312 = vunpack.c.l.b16 %v248
  %v313 = vunpack.c.l.b16 %v249
  %v314 = vunpack.c.l.b16 %v250
  %v315 = vpack.c.b16 %v284, %v283
  %v316 = vpack.c.b16 %v286, %v285
  %v317 = vpack.c.b16 %v288, %v287
  %v318 = vpack.c.b16 %v290, %v289
  %v319 = vpack.c.b16 %v292, %v291
  %v320 = vpack.c.b16 %v294, %v293
  %v321 = vpack.c.b16 %v296, %v295
  %v322 = vpack.c.b16 %v298, %v297
  %v323 = vpack.c.b16 %v300, %v299
  %v324 = vpack.c.b16 %v302, %v301
  %v325 = vpack.c.b16 %v304, %v303
  %v326 = vpack.c.b16 %v306, %v305
  %v327 = vpack.c.b16 %v308, %v307
  %v328 = vpack.c.b16 %v310, %v309
  %v329 = vpack.c.b16 %v312, %v311
  %v330 = vpack.c.b16 %v314, %v313
  %347 = vmatpush.bf16.msra.mxu0 %v322
  %348 = vmatpush.bf16.msra.mxu0 %v321
  %349 = vmatpush.bf16.msra.mxu0 %v320
  %350 = vmatpush.bf16.msra.mxu0 %v319
  %351 = vmatpush.bf16.msra.mxu0 %v318
  %352 = vmatpush.bf16.msra.mxu0 %v317
  %353 = vmatpush.bf16.msra.mxu0 %v316
  %354 = vmatpush.bf16.msra.mxu0 %v315
  %355 = vmatmul.bf16.gmra.mxu0 %v36
  %v356 = vpop.f32.mrf.mxu0
  %v357 = vadd.f32 0.0, %v356
  %v358 = vpop.f32.mrf.mxu0
  %v359 = vadd.f32 0.0, %v358
  %360 = vmatmul.bf16.gmra.mxu0 %v37
  %v361 = vpop.f32.mrf.mxu0
  %v362 = vadd.f32 0.0, %v361
  %v363 = vpop.f32.mrf.mxu0
  %v364 = vadd.f32 0.0, %v363
  %365 = vdwg.mxu0
  %366 = vmatpush.bf16.msra.mxu0 %v330
  %367 = vmatpush.bf16.msra.mxu0 %v329
  %368 = vmatpush.bf16.msra.mxu0 %v328
  %369 = vmatpush.bf16.msra.mxu0 %v327
  %370 = vmatpush.bf16.msra.mxu0 %v326
  %371 = vmatpush.bf16.msra.mxu0 %v325
  %372 = vmatpush.bf16.msra.mxu0 %v324
  %373 = vmatpush.bf16.msra.mxu0 %v323
  %374 = vmatmul.bf16.gmra.mxu0 %v48
  %v375 = vpop.f32.mrf.mxu0
  %v376 = vadd.f32 %v357, %v375
  %v377 = vpop.f32.mrf.mxu0
  %v378 = vadd.f32 %v359, %v377
  %379 = vmatmul.bf16.gmra.mxu0 %v49
  %v380 = vpop.f32.mrf.mxu0
  %v381 = vadd.f32 %v362, %v380
  %v382 = vpop.f32.mrf.mxu0
  %v383 = vadd.f32 %v364, %v382
  %384 = vdwg.mxu0
  %s385 = scalar_lea.vmem %s3, 256
  %v386 = vld [vmem:[%s385] sm:$0xf]
  %v387 = vld [vmem:[%s385 + $0x4] sm:$0xf]
  %v388 = vld [vmem:[%s385 + $0x8] sm:$0xf]
  %v389 = vld [vmem:[%s385 + $0xc] sm:$0xf]
  %v390 = vld [vmem:[%s385 + $0x10] sm:$0xf]
  %v391 = vld [vmem:[%s385 + $0x14] sm:$0xf]
  %v392 = vld [vmem:[%s385 + $0x18] sm:$0xf]
  %v393 = vld [vmem:[%s385 + $0x1c] sm:$0xf]
  %v394 = vld [vmem:[%s385 + $0x20] sm:$0xf]
  %v395 = vld [vmem:[%s385 + $0x24] sm:$0xf]
  %v396 = vld [vmem:[%s385 + $0x28] sm:$0xf]
  %v397 = vld [vmem:[%s385 + $0x2c] sm:$0xf]
  %v398 = vld [vmem:[%s385 + $0x30] sm:$0xf]
  %v399 = vld [vmem:[%s385 + $0x34] sm:$0xf]
  %v400 = vld [vmem:[%s385 + $0x38] sm:$0xf]
  %v401 = vld [vmem:[%s385 + $0x3c] sm:$0xf]
  %v402 = vld [vmem:[%s385 + $0x40] sm:$0xf]
  %v403 = vld [vmem:[%s385 + $0x44] sm:$0xf]
  %v404 = vld [vmem:[%s385 + $0x48] sm:$0xf]
  %v405 = vld [vmem:[%s385 + $0x4c] sm:$0xf]
  %v406 = vld [vmem:[%s385 + $0x50] sm:$0xf]
  %v407 = vld [vmem:[%s385 + $0x54] sm:$0xf]
  %v408 = vld [vmem:[%s385 + $0x58] sm:$0xf]
  %v409 = vld [vmem:[%s385 + $0x5c] sm:$0xf]
  %v410 = vld [vmem:[%s385 + $0x60] sm:$0xf]
  %v411 = vld [vmem:[%s385 + $0x64] sm:$0xf]
  %v412 = vld [vmem:[%s385 + $0x68] sm:$0xf]
  %v413 = vld [vmem:[%s385 + $0x6c] sm:$0xf]
  %v414 = vld [vmem:[%s385 + $0x70] sm:$0xf]
  %v415 = vld [vmem:[%s385 + $0x74] sm:$0xf]
  %v416 = vld [vmem:[%s385 + $0x78] sm:$0xf]
  %v417 = vld [vmem:[%s385 + $0x7c] sm:$0xf]
  %v450 = vunpack.c.l.b16 %v386
  %v451 = vunpack.c.l.b16 %v387
  %v452 = vunpack.c.l.b16 %v388
  %v453 = vunpack.c.l.b16 %v389
  %v454 = vunpack.c.l.b16 %v390
  %v455 = vunpack.c.l.b16 %v391
  %v456 = vunpack.c.l.b16 %v392
  %v457 = vunpack.c.l.b16 %v393
  %v458 = vunpack.c.l.b16 %v394
  %v459 = vunpack.c.l.b16 %v395
  %v460 = vunpack.c.l.b16 %v396
  %v461 = vunpack.c.l.b16 %v397
  %v462 = vunpack.c.l.b16 %v398
  %v463 = vunpack.c.l.b16 %v399
  %v464 = vunpack.c.l.b16 %v400
  %v465 = vunpack.c.l.b16 %v401
  %v466 = vunpack.c.l.b16 %v402
  %v467 = vunpack.c.l.b16 %v403
  %v468 = vunpack.c.l.b16 %v404
  %v469 = vunpack.c.l.b16 %v405
  %v470 = vunpack.c.l.b16 %v406
  %v471 = vunpack.c.l.b16 %v407
  %v472 = vunpack.c.l.b16 %v408
  %v473 = vunpack.c.l.b16 %v409
  %v474 = vunpack.c.l.b16 %v410
  %v475 = vunpack.c.l.b16 %v411
  %v476 = vunpack.c.l.b16 %v412
  %v477 = vunpack.c.l.b16 %v413
  %v478 = vunpack.c.l.b16 %v414
  %v479 = vunpack.c.l.b16 %v415
  %v480 = vunpack.c.l.b16 %v416
  %v481 = vunpack.c.l.b16 %v417
  %v482 = vpack.c.b16 %v451, %v450
  %v483 = vpack.c.b16 %v453, %v452
  %v484 = vpack.c.b16 %v455, %v454
  %v485 = vpack.c.b16 %v457, %v456
  %v486 = vpack.c.b16 %v459, %v458
  %v487 = vpack.c.b16 %v461, %v460
  %v488 = vpack.c.b16 %v463, %v462
  %v489 = vpack.c.b16 %v465, %v464
  %v490 = vpack.c.b16 %v467, %v466
  %v491 = vpack.c.b16 %v469, %v468
  %v492 = vpack.c.b16 %v471, %v470
  %v493 = vpack.c.b16 %v473, %v472
  %v494 = vpack.c.b16 %v475, %v474
  %v495 = vpack.c.b16 %v477, %v476
  %v496 = vpack.c.b16 %v479, %v478
  %v497 = vpack.c.b16 %v481, %v480
  %514 = vmatpush.bf16.msra.mxu0 %v489
  %515 = vmatpush.bf16.msra.mxu0 %v488
  %516 = vmatpush.bf16.msra.mxu0 %v487
  %517 = vmatpush.bf16.msra.mxu0 %v486
  %518 = vmatpush.bf16.msra.mxu0 %v485
  %519 = vmatpush.bf16.msra.mxu0 %v484
  %520 = vmatpush.bf16.msra.mxu0 %v483
  %521 = vmatpush.bf16.msra.mxu0 %v482
  %522 = vmatmul.bf16.gmra.mxu0 %v36
  %v523 = vpop.f32.mrf.mxu0
  %v524 = vadd.f32 0.0, %v523
  %v525 = vpop.f32.mrf.mxu0
  %v526 = vadd.f32 0.0, %v525
  %527 = vmatmul.bf16.gmra.mxu0 %v37
  %v528 = vpop.f32.mrf.mxu0
  %v529 = vadd.f32 0.0, %v528
  %v530 = vpop.f32.mrf.mxu0
  %v531 = vadd.f32 0.0, %v530
  %532 = vdwg.mxu0
  %533 = vmatpush.bf16.msra.mxu0 %v497
  %534 = vmatpush.bf16.msra.mxu0 %v496
  %535 = vmatpush.bf16.msra.mxu0 %v495
  %536 = vmatpush.bf16.msra.mxu0 %v494
  %537 = vmatpush.bf16.msra.mxu0 %v493
  %538 = vmatpush.bf16.msra.mxu0 %v492
  %539 = vmatpush.bf16.msra.mxu0 %v491
  %540 = vmatpush.bf16.msra.mxu0 %v490
  %541 = vmatmul.bf16.gmra.mxu0 %v48
  %v542 = vpop.f32.mrf.mxu0
  %v543 = vadd.f32 %v524, %v542
  %v544 = vpop.f32.mrf.mxu0
  %v545 = vadd.f32 %v526, %v544
  %546 = vmatmul.bf16.gmra.mxu0 %v49
  %v547 = vpop.f32.mrf.mxu0
  %v548 = vadd.f32 %v529, %v547
  %v549 = vpop.f32.mrf.mxu0
  %v550 = vadd.f32 %v531, %v549
  %551 = vdwg.mxu0
  %vm554 = vcmask 1040384
  %v555 = vrot.slane %v209, 7
  %v556 = vrot.slane %v211, 7
  %v557 = vsel %vm554, %v555, %v556
  %v560 = vsel %vm554, 0.0, %v555
  %v561 = vadd.f32 %v376, %v560
  %v562 = vadd.f32 %v378, %v557
  %vm565 = vcmask 1046528
  %v566 = vrot.slane %v543, 1
  %v567 = vrot.slane %v545, 1
  %v568 = vsel %vm565, %v566, %v567
  %v571 = vsel %vm565, %v567, 0.0
  %v572 = vadd.f32 %v561, %v568
  %v573 = vadd.f32 %v562, %v571
  %v576 = vrot.slane %v214, 7
  %v577 = vrot.slane %v216, 7
  %v578 = vsel %vm554, %v576, %v577
  %v581 = vsel %vm554, 0.0, %v576
  %v582 = vadd.f32 %v381, %v581
  %v583 = vadd.f32 %v383, %v578
  %v586 = vrot.slane %v548, 1
  %v587 = vrot.slane %v550, 1
  %v588 = vsel %vm565, %v586, %v587
  %v591 = vsel %vm565, %v587, 0.0
  %v592 = vadd.f32 %v582, %v588
  %v593 = vadd.f32 %v583, %v591
  %v594 = vld [vmem:[%s4] sm:$0x1]
  %v596 = vperm.slane %v594, 0
  %v598 = vadd.f32 %v572, %v596
  %v599 = vadd.f32 %v573, %v596
  %v600 = vadd.f32 %v592, %v596
  %v601 = vadd.f32 %v593, %v596
  %v602 = vmax.f32 %v598, 0.0
  %v603 = vmax.f32 %v599, 0.0
  %v604 = vmax.f32 %v600, 0.0
  %v605 = vmax.f32 %v601, 0.0
  %v606 = vld [vmem:[%s2] sm:$0xf]
  %v607 = vld [vmem:[%s2 + $0x4] sm:$0xf]
  %v608 = vld [vmem:[%s2 + $0x8] sm:$0xf]
  %v609 = vld [vmem:[%s2 + $0xc] sm:$0xf]
  %v610 = vunpack.c.l.bf16 %v606
  %v611 = vunpack.c.l.bf16 %v607
  %v612 = vunpack.c.l.bf16 %v608
  %v613 = vunpack.c.l.bf16 %v609
  %v614 = vadd.f32 %v602, %v610
  %v615 = vadd.f32 %v603, %v611
  %v616 = vadd.f32 %v604, %v612
  %v617 = vadd.f32 %v605, %v613
  %v618 = vpack.c.bf16 %v614, %v614
  %v619 = vpack.c.bf16 %v615, %v615
  %v620 = vpack.c.bf16 %v616, %v616
  %v621 = vpack.c.bf16 %v617, %v617
  %vm622 = vcmask 519168
  %623 = vst.msk [vmem:[%s5] sm:$0xf] %vm622, %v618
  %624 = vst.msk [vmem:[%s5 + $0x4] sm:$0xf] %vm622, %v619
  %625 = vst.msk [vmem:[%s5 + $0x8] sm:$0xf] %vm622, %v620
  %626 = vst.msk [vmem:[%s5 + $0xc] sm:$0xf] %vm622, %v621
  // Predicated region
  $region22: #{_lambda_.19} parent=0 // pred_check
    _
  $region23: #{_lambda_.19} parent=0 // pred_check_branch
    %628 = sbr.rel (0) target = $region25
  $region24: #{_lambda_.19} parent=0 // pred_region
    _
  $region25: #{_lambda_.19} parent=0 // pred_fallthru
    _
  // Predicated region
  $region26: #{_lambda_.19} parent=0 // pred_check
    _
  $region27: #{_lambda_.19} parent=0 // pred_check_branch
    %630 = sbr.rel (0) target = $region29
  $region28: #{_lambda_.19} parent=0 // pred_region
    _
  $region29: #{_lambda_.19} parent=0 // pred_fallthru
    _

</llo_original>
